<compile_context>
chip_gen: v7x
topology: tpu7x:2x2x1
jax: 0.10.0
libtpu: 0.0.40
codegen_flags: <defaults>
</compile_context>

<pallas_src>
import functools
import numpy as np
import jax
import jax.numpy as jnp
from jax import lax
from jax.experimental import pallas as pl
from jax.experimental.pallas import tpu as pltpu

BN_EPS = 1e-5


# ---------------------------------------------------------------------------
# Fully fused bottleneck kernel
# ---------------------------------------------------------------------------
def _bottleneck_kernel(x_ref, w1_ref, b1_ref, k2_ref, b2_ref, w3_ref, b3_ref,
                       o_ref, *scratch, nb, H, W, Ho, Wo, stride, Cout):
    ypad = scratch[0]
    xpad = scratch[1] if stride == 2 else None

    Cin = x_ref.shape[-1]
    mid = w1_ref.shape[1]

    x = x_ref[...]                                            # (nb, H, W, Cin)

    # conv1 as one (nb*H*W, Cin) @ (Cin, mid) MXU matmul; BN1 scale + channel
    # shuffle are pre-folded into w1's columns, so epilogue is bias + ReLU.
    y1 = jnp.dot(x.reshape(nb * H * W, Cin), w1_ref[...],
                 preferred_element_type=jnp.float32)
    y1 = jnp.maximum(y1 + b1_ref[...], 0.0).reshape(nb, H, W, mid)

    # Hoisted loads: avoid re-issuing vld / broadcasts inside the unrolled
    # tap loops and the per-image loop.
    k2 = k2_ref[...]                                          # (9, mid)
    b2 = b2_ref[0]                                            # (mid,)
    w3 = w3_ref[...]                                          # (mid, Cout)
    b3 = b3_ref[...]                                          # (1, Cout)

    # Zero ONLY the 1-wide halo of the padded scratch buffers (2 rows + 2
    # columns); the interior is overwritten per image.  This replaces the old
    # full-tile memset and cuts VMEM store traffic on the dw-conv prologue.
    ypad[0:1, :, :] = jnp.zeros((1, W + 2, mid), jnp.float32)
    ypad[H + 1:H + 2, :, :] = jnp.zeros((1, W + 2, mid), jnp.float32)
    ypad[1:H + 1, 0:1, :] = jnp.zeros((H, 1, mid), jnp.float32)
    ypad[1:H + 1, W + 1:W + 2, :] = jnp.zeros((H, 1, mid), jnp.float32)
    if stride == 2:
        xpad[0:1, :, :] = jnp.zeros((1, W + 2, Cin), jnp.float32)
        xpad[H + 1:H + 2, :, :] = jnp.zeros((1, W + 2, Cin), jnp.float32)
        xpad[1:H + 1, 0:1, :] = jnp.zeros((H, 1, Cin), jnp.float32)
        xpad[1:H + 1, W + 1:W + 2, :] = jnp.zeros((H, 1, Cin), jnp.float32)

    def tap(ref, dy, dx):
        if stride == 1:
            return ref[dy:dy + Ho, dx:dx + Wo, :]
        return ref[pl.ds(dy, Ho, stride), pl.ds(dx, Wo, stride), :]

    for i in range(nb):
        # 3x3 depthwise conv (output stride via strided reads) + BN2 + ReLU.
        ypad[1:H + 1, 1:W + 1, :] = y1[i]
        acc = jnp.zeros((Ho, Wo, mid), jnp.float32)
        for dy in range(3):
            for dx in range(3):
                acc = acc + tap(ypad, dy, dx) * k2[dy * 3 + dx]
        y2 = jnp.maximum(acc + b2, 0.0)                       # (Ho, Wo, mid)

        # conv3 + BN3 fused with the residual epilogue (no HBM roundtrip).
        t = jnp.dot(y2.reshape(Ho * Wo, mid), w3,
                    preferred_element_type=jnp.float32) + b3

        if stride == 1:
            # identity shortcut (Cin == Cout for ShuffleNet stride-1 blocks)
            out = jnp.maximum(t + x[i].reshape(H * W, Cin), 0.0)
            o_ref[i] = out.reshape(Ho, Wo, Cout)
        else:
            # AvgPool2d(3, stride=2, padding=1), count_include_pad=True,
            # computed from the x tile that is already resident in VMEM.
            xpad[1:H + 1, 1:W + 1, :] = x[i]
            racc = jnp.zeros((Ho, Wo, Cin), jnp.float32)
            for dy in range(3):
                for dx in range(3):
                    racc = racc + tap(xpad, dy, dx)
            res = racc * (1.0 / 9.0)
            # Build the full (Ho, Wo, Cout+Cin) row in registers and write it
            # with ONE store instead of two partial (masked) stores.
            full = jnp.concatenate([t.reshape(Ho, Wo, Cout), res], axis=-1)
            o_ref[i] = jnp.maximum(full, 0.0)


def _pick_nb(N, H, W, Cin, mid, Ctot, Ho, Wo, stride, budget=12 << 20):
    # Batch several images per grid step when per-image work is small, while
    # keeping the (double-buffered) in/out blocks + scratch under a VMEM budget.
    pad_bytes = (H + 2) * (W + 2) * mid * 4
    if stride == 2:
        pad_bytes += (H + 2) * (W + 2) * Cin * 4
    per_img = (H * W * Cin + Ho * Wo * Ctot) * 4 * 2   # in + out, x2 buffers
    for nb in range(min(N, 8), 0, -1):
        if N % nb == 0 and nb * per_img + pad_bytes <= budget:
            return nb
    return 1


def bottleneck_fused(x_nhwc, w1, b1, k9, b2, w3, b3, stride):
    N, H, W, Cin = x_nhwc.shape
    mid = int(w1.shape[1])
    Cout = int(w3.shape[1])
    Ho = (H - 1) // stride + 1
    Wo = (W - 1) // stride + 1
    Ctot = Cout + Cin if stride == 2 else Cout

    nb = _pick_nb(N, H, W, Cin, mid, Ctot, Ho, Wo, stride)

    scratch = [pltpu.VMEM((H + 2, W + 2, mid), jnp.float32)]
    if stride == 2:
        scratch.append(pltpu.VMEM((H + 2, W + 2, Cin), jnp.float32))

    return pl.pallas_call(
        functools.partial(_bottleneck_kernel, nb=nb, H=H, W=W, Ho=Ho, Wo=Wo,
                          stride=stride, Cout=Cout),
        out_shape=jax.ShapeDtypeStruct((N, Ho, Wo, Ctot), jnp.float32),
        grid=(N // nb,),
        in_specs=[pl.BlockSpec((nb, H, W, Cin), lambda n: (n, 0, 0, 0)),
                  pl.BlockSpec((Cin, mid), lambda n: (0, 0)),
                  pl.BlockSpec((1, mid), lambda n: (0, 0)),
                  pl.BlockSpec((9, mid), lambda n: (0, 0)),
                  pl.BlockSpec((1, mid), lambda n: (0, 0)),
                  pl.BlockSpec((mid, Cout), lambda n: (0, 0)),
                  pl.BlockSpec((1, Cout), lambda n: (0, 0))],
        out_specs=pl.BlockSpec((nb, Ho, Wo, Ctot), lambda n: (n, 0, 0, 0)),
        scratch_shapes=scratch,
        compiler_params=pltpu.CompilerParams(
            dimension_semantics=("parallel",),
            vmem_limit_bytes=48 * 1024 * 1024),
    )(x_nhwc, w1, b1.reshape(1, mid), k9, b2.reshape(1, mid),
      w3, b3.reshape(1, Cout))


# ---------------------------------------------------------------------------
# Host-side glue: BN folding, grouped->dense weights, shuffle permutation
# ---------------------------------------------------------------------------
def grouped_to_dense(w, G):
    # torch conv weight (Cout, Cin//G, 1, 1) -> dense block-diagonal (Cin, Cout)
    Cout, Cin_g = int(w.shape[0]), int(w.shape[1])
    Cout_g = Cout // G
    wn = np.asarray(w).reshape(Cout, Cin_g)
    D = np.zeros((Cin_g * G, Cout), np.float32)
    for co in range(Cout):
        gi = co // Cout_g
        D[gi * Cin_g:(gi + 1) * Cin_g, co] = wn[co]
    return jnp.asarray(D)


def _fold_bn(bnp):
    gamma, beta, mean, var = bnp
    s = gamma / jnp.sqrt(var + BN_EPS)
    return s, beta - mean * s


def init_params(key, in_planes, out_planes, groups, g):
    mid = out_planes // 4
    ks = jax.random.split(key, 6)

    def bn_params(k, c):
        k1, k2, k3, k4 = jax.random.split(k, 4)
        return (jax.random.uniform(k1, (c,), jnp.float32, 0.5, 1.5),
                0.1 * jax.random.normal(k2, (c,), jnp.float32),
                0.1 * jax.random.normal(k3, (c,), jnp.float32),
                jax.random.uniform(k4, (c,), jnp.float32, 0.5, 1.5))

    return {
        'w1': 0.2 * jax.random.normal(ks[0], (mid, in_planes // g, 1, 1), jnp.float32),
        'bn1': bn_params(ks[1], mid),
        'w2': 0.2 * jax.random.normal(ks[2], (mid, 1, 3, 3), jnp.float32),
        'bn2': bn_params(ks[3], mid),
        'w3': 0.2 * jax.random.normal(ks[4], (out_planes, mid // groups, 1, 1), jnp.float32),
        'bn3': bn_params(ks[5], out_planes),
    }


def bottleneck_pallas(x_nchw, p, stride, groups, g):
    N, Cin, H, W = x_nchw.shape
    mid = int(p['w1'].shape[0])
    out_planes = int(p['w3'].shape[0])
    if stride == 1:
        # identity shortcut requires matching channel counts (true in ShuffleNet)
        assert Cin == out_planes, "stride-1 block needs in_planes == out_planes"

    # Boundary layout change only (in a full network activations stay NHWC and
    # this transpose is done once at the model boundary).
    x = jnp.transpose(x_nchw, (0, 2, 3, 1))  # NCHW -> NHWC

    # One-time parameter folds (host/XLA glue, not per-element work in kernels)
    s1, b1 = _fold_bn(p['bn1'])
    W1 = grouped_to_dense(p['w1'], g)                         # (Cin, mid)
    perm = np.arange(mid).reshape(g, mid // g).T.reshape(-1)  # channel shuffle
    W1 = W1[:, perm] * s1[perm][None, :]                      # shuffle + BN1 scale folded
    b1 = b1[perm]

    s2, b2 = _fold_bn(p['bn2'])
    k2 = jnp.transpose(p['w2'].reshape(mid, 9), (1, 0)) * s2[None, :]  # (9, mid)

    s3, b3 = _fold_bn(p['bn3'])
    W3 = grouped_to_dense(p['w3'], groups) * s3[None, :]      # (mid, out_planes)

    # Single fused kernel: conv1+BN1+ReLU+shuffle -> dw3x3(stride)+BN2+ReLU
    # -> conv3+BN3 + residual add / avgpool-concat + ReLU.
    y = bottleneck_fused(x, W1, b1, k2, b2, W3, b3, stride)
    return jnp.transpose(y, (0, 3, 1, 2))                     # back to NCHW


# ---------------------------------------------------------------------------
# Pure-JAX reference (mirrors the PyTorch forward, inference-mode BN)
# ---------------------------------------------------------------------------
def bottleneck_ref(x, p, stride, groups, g):
    def bn(y, bnp):
        gamma, beta, mean, var = bnp
        rs = lambda v: v[None, :, None, None]
        return (y - rs(mean)) / jnp.sqrt(rs(var) + BN_EPS) * rs(gamma) + rs(beta)

    dn = ('NCHW', 'OIHW', 'NCHW')
    out = lax.conv_general_dilated(x, p['w1'], (1, 1), 'VALID',
                                   feature_group_count=g, dimension_numbers=dn)
    out = jax.nn.relu(bn(out, p['bn1']))
    N, C, H, W = out.shape
    out = out.reshape(N, g, C // g, H, W).transpose(0, 2, 1, 3, 4).reshape(N, C, H, W)
    out = lax.conv_general_dilated(out, p['w2'], (stride, stride),
                                   ((1, 1), (1, 1)), feature_group_count=C,
                                   dimension_numbers=dn)
    out = jax.nn.relu(bn(out, p['bn2']))
    out = lax.conv_general_dilated(out, p['w3'], (1, 1), 'VALID',
                                   feature_group_count=groups, dimension_numbers=dn)
    out = bn(out, p['bn3'])
    if stride == 2:
        res = lax.reduce_window(x, 0.0, lax.add, (1, 1, 3, 3), (1, 1, 2, 2),
                                ((0, 0), (0, 0), (1, 1), (1, 1))) / 9.0
        return jax.nn.relu(jnp.concatenate([out, res], axis=1))
    return jax.nn.relu(out + x)


if __name__ == "__main__":
    key = jax.random.PRNGKey(0)
    configs = [
        # (in_planes, out_planes, stride, groups, N, H, W)
        (16, 16, 1, 2, 2, 16, 16),   # residual-add path
        (8, 16, 2, 2, 2, 16, 16),    # avgpool + concat path
    ]
    for in_p, out_p, stride, groups, N, H, W in configs:
        kx, kp, key = jax.random.split(key, 3)
        g = 1 if in_p == 24 else groups
        x = jax.random.normal(kx, (N, in_p, H, W), jnp.float32)
        params = init_params(kp, in_p, out_p, groups, g)
        out = jax.block_until_ready(bottleneck_pallas(x, params, stride, groups, g))
        ref = bottleneck_ref(x, params, stride, groups, g)
        np.testing.assert_allclose(np.asarray(out), np.asarray(ref),
                                   rtol=1e-4, atol=1e-4)
    print("KERNEL_OK")
</pallas_src>

<mosaic_0001>
module attributes {stable_mosaic.version = 11 : i64} {
  func.func @_bottleneck_kernel(%arg0: i32, %arg1: memref<2x16x16x16xf32, #tpu.memory_space<vmem>>, %arg2: memref<16x4xf32, #tpu.memory_space<vmem>>, %arg3: memref<1x4xf32, #tpu.memory_space<vmem>>, %arg4: memref<9x4xf32, #tpu.memory_space<vmem>>, %arg5: memref<1x4xf32, #tpu.memory_space<vmem>>, %arg6: memref<4x16xf32, #tpu.memory_space<vmem>>, %arg7: memref<1x16xf32, #tpu.memory_space<vmem>>, %arg8: memref<2x16x16x16xf32, #tpu.memory_space<vmem>>, %arg9: memref<18x18x4xf32, #tpu.memory_space<vmem>>) attributes {dimension_semantics = [#tpu.dimension_semantics<parallel>], iteration_bounds = array<i64: 1>, scalar_prefetch = 0 : i64, scratch_operands = 1 : i64, tpu.core_type = #tpu.core_type<tc>, window_params = [{transform_indices = @transform_0, window_bounds = array<i64: 2, 16, 16, 16>}, {pipeline_mode = #tpu.pipeline_mode<synchronous>, transform_indices = @transform_1, window_bounds = array<i64: 16, 4>}, {pipeline_mode = #tpu.pipeline_mode<synchronous>, transform_indices = @transform_2, window_bounds = array<i64: 1, 4>}, {pipeline_mode = #tpu.pipeline_mode<synchronous>, transform_indices = @transform_3, window_bounds = array<i64: 9, 4>}, {pipeline_mode = #tpu.pipeline_mode<synchronous>, transform_indices = @transform_4, window_bounds = array<i64: 1, 4>}, {pipeline_mode = #tpu.pipeline_mode<synchronous>, transform_indices = @transform_5, window_bounds = array<i64: 4, 16>}, {pipeline_mode = #tpu.pipeline_mode<synchronous>, transform_indices = @transform_6, window_bounds = array<i64: 1, 16>}, {transform_indices = @transform_7, window_bounds = array<i64: 2, 16, 16, 16>}]} {
    %c0 = arith.constant 0 : index
    %c0_0 = arith.constant 0 : index
    %c0_1 = arith.constant 0 : index
    %c0_2 = arith.constant 0 : index
    %0 = vector.load %arg1[%c0, %c0_0, %c0_1, %c0_2] : memref<2x16x16x16xf32, #tpu.memory_space<vmem>>, vector<2x16x16x16xf32>
    %1 = vector.shape_cast %0 : vector<2x16x16x16xf32> to vector<512x16xf32>
    %c0_3 = arith.constant 0 : index
    %c0_4 = arith.constant 0 : index
    %2 = vector.load %arg2[%c0_3, %c0_4] : memref<16x4xf32, #tpu.memory_space<vmem>>, vector<16x4xf32>
    %cst = arith.constant dense<0.000000e+00> : vector<512x4xf32>
    %3 = tpu.matmul %1, %2, %cst {dimension_numbers = #tpu.dot_dimension_numbers<[1], [0], [0], [1], [0, 0, 1, 1], [], []>} : vector<512x16xf32>, vector<16x4xf32>, vector<512x4xf32> -> vector<512x4xf32>
    %c0_5 = arith.constant 0 : index
    %c0_6 = arith.constant 0 : index
    %4 = vector.load %arg3[%c0_5, %c0_6] : memref<1x4xf32, #tpu.memory_space<vmem>>, vector<1x4xf32>
    %5 = vector.broadcast %4 : vector<1x4xf32> to vector<512x4xf32>
    %6 = arith.addf %3, %5 : vector<512x4xf32>
    %cst_7 = arith.constant 0.000000e+00 : f32
    %7 = vector.broadcast %cst_7 : f32 to vector<512x4xf32>
    %8 = arith.maximumf %6, %7 : vector<512x4xf32>
    %9 = vector.shape_cast %8 : vector<512x4xf32> to vector<2x16x16x4xf32>
    %c0_8 = arith.constant 0 : index
    %c0_9 = arith.constant 0 : index
    %10 = vector.load %arg4[%c0_8, %c0_9] : memref<9x4xf32, #tpu.memory_space<vmem>>, vector<9x4xf32>
    %c0_10 = arith.constant 0 : index
    %c0_11 = arith.constant 0 : index
    %11 = vector.load %arg5[%c0_10, %c0_11] : memref<1x4xf32, #tpu.memory_space<vmem>>, vector<1x4xf32>
    %12 = vector.shape_cast %11 : vector<1x4xf32> to vector<4xf32>
    %c0_12 = arith.constant 0 : index
    %c0_13 = arith.constant 0 : index
    %13 = vector.load %arg6[%c0_12, %c0_13] : memref<4x16xf32, #tpu.memory_space<vmem>>, vector<4x16xf32>
    %c0_14 = arith.constant 0 : index
    %c0_15 = arith.constant 0 : index
    %14 = vector.load %arg7[%c0_14, %c0_15] : memref<1x16xf32, #tpu.memory_space<vmem>>, vector<1x16xf32>
    %cst_16 = arith.constant 0.000000e+00 : f32
    %15 = vector.broadcast %cst_16 : f32 to vector<1x18x4xf32>
    %c0_17 = arith.constant 0 : index
    %c0_18 = arith.constant 0 : index
    %c0_19 = arith.constant 0 : index
    %16 = vector.load %arg9[%c0_17, %c0_18, %c0_19] : memref<18x18x4xf32, #tpu.memory_space<vmem>>, vector<1x18x4xf32>
    tpu.vector_store %arg9[%c0_17, %c0_18, %c0_19], %15 {strides = array<i32>} : memref<18x18x4xf32, #tpu.memory_space<vmem>>, vector<1x18x4xf32>,
    %cst_20 = arith.constant 0.000000e+00 : f32
    %17 = vector.broadcast %cst_20 : f32 to vector<1x18x4xf32>
    %c17 = arith.constant 17 : index
    %c0_21 = arith.constant 0 : index
    %c0_22 = arith.constant 0 : index
    %18 = vector.load %arg9[%c17, %c0_21, %c0_22] : memref<18x18x4xf32, #tpu.memory_space<vmem>>, vector<1x18x4xf32>
    tpu.vector_store %arg9[%c17, %c0_21, %c0_22], %17 {strides = array<i32>} : memref<18x18x4xf32, #tpu.memory_space<vmem>>, vector<1x18x4xf32>,
    %cst_23 = arith.constant 0.000000e+00 : f32
    %19 = vector.broadcast %cst_23 : f32 to vector<16x1x4xf32>
    %c1 = arith.constant 1 : index
    %c0_24 = arith.constant 0 : index
    %c0_25 = arith.constant 0 : index
    %20 = vector.load %arg9[%c1, %c0_24, %c0_25] : memref<18x18x4xf32, #tpu.memory_space<vmem>>, vector<16x1x4xf32>
    tpu.vector_store %arg9[%c1, %c0_24, %c0_25], %19 {strides = array<i32>} : memref<18x18x4xf32, #tpu.memory_space<vmem>>, vector<16x1x4xf32>,
    %cst_26 = arith.constant 0.000000e+00 : f32
    %21 = vector.broadcast %cst_26 : f32 to vector<16x1x4xf32>
    %c1_27 = arith.constant 1 : index
    %c17_28 = arith.constant 17 : index
    %c0_29 = arith.constant 0 : index
    %22 = vector.load %arg9[%c1_27, %c17_28, %c0_29] : memref<18x18x4xf32, #tpu.memory_space<vmem>>, vector<16x1x4xf32>
    tpu.vector_store %arg9[%c1_27, %c17_28, %c0_29], %21 {strides = array<i32>} : memref<18x18x4xf32, #tpu.memory_space<vmem>>, vector<16x1x4xf32>,
    %23 = vector.extract_strided_slice %9 {offsets = [0, 0, 0, 0], sizes = [1, 16, 16, 4], strides = [1, 1, 1, 1]} : vector<2x16x16x4xf32> to vector<1x16x16x4xf32>
    %24 = vector.shape_cast %23 : vector<1x16x16x4xf32> to vector<16x16x4xf32>
    %c1_30 = arith.constant 1 : index
    %c1_31 = arith.constant 1 : index
    %c0_32 = arith.constant 0 : index
    %25 = vector.load %arg9[%c1_30, %c1_31, %c0_32] : memref<18x18x4xf32, #tpu.memory_space<vmem>>, vector<16x16x4xf32>
    tpu.vector_store %arg9[%c1_30, %c1_31, %c0_32], %24 {strides = array<i32>} : memref<18x18x4xf32, #tpu.memory_space<vmem>>, vector<16x16x4xf32>,
    %cst_33 = arith.constant 0.000000e+00 : f32
    %26 = vector.broadcast %cst_33 : f32 to vector<16x16x4xf32>
    %c0_34 = arith.constant 0 : index
    %c0_35 = arith.constant 0 : index
    %c0_36 = arith.constant 0 : index
    %27 = vector.load %arg9[%c0_34, %c0_35, %c0_36] : memref<18x18x4xf32, #tpu.memory_space<vmem>>, vector<16x16x4xf32>
    %28 = vector.extract_strided_slice %10 {offsets = [0, 0], sizes = [1, 4], strides = [1, 1]} : vector<9x4xf32> to vector<1x4xf32>
    %29 = vector.shape_cast %28 : vector<1x4xf32> to vector<4xf32>
    %30 = vector.shape_cast %29 : vector<4xf32> to vector<1x1x4xf32>
    %31 = vector.broadcast %30 : vector<1x1x4xf32> to vector<16x16x4xf32>
    %32 = arith.mulf %27, %31 : vector<16x16x4xf32>
    %33 = arith.addf %26, %32 : vector<16x16x4xf32>
    %c0_37 = arith.constant 0 : index
    %c1_38 = arith.constant 1 : index
    %c0_39 = arith.constant 0 : index
    %34 = vector.load %arg9[%c0_37, %c1_38, %c0_39] : memref<18x18x4xf32, #tpu.memory_space<vmem>>, vector<16x16x4xf32>
    %35 = vector.extract_strided_slice %10 {offsets = [1, 0], sizes = [1, 4], strides = [1, 1]} : vector<9x4xf32> to vector<1x4xf32>
    %36 = vector.shape_cast %35 : vector<1x4xf32> to vector<4xf32>
    %37 = vector.shape_cast %36 : vector<4xf32> to vector<1x1x4xf32>
    %38 = vector.broadcast %37 : vector<1x1x4xf32> to vector<16x16x4xf32>
    %39 = arith.mulf %34, %38 : vector<16x16x4xf32>
    %40 = arith.addf %33, %39 : vector<16x16x4xf32>
    %c0_40 = arith.constant 0 : index
    %c2 = arith.constant 2 : index
    %c0_41 = arith.constant 0 : index
    %41 = vector.load %arg9[%c0_40, %c2, %c0_41] : memref<18x18x4xf32, #tpu.memory_space<vmem>>, vector<16x16x4xf32>
    %42 = vector.extract_strided_slice %10 {offsets = [2, 0], sizes = [1, 4], strides = [1, 1]} : vector<9x4xf32> to vector<1x4xf32>
    %43 = vector.shape_cast %42 : vector<1x4xf32> to vector<4xf32>
    %44 = vector.shape_cast %43 : vector<4xf32> to vector<1x1x4xf32>
    %45 = vector.broadcast %44 : vector<1x1x4xf32> to vector<16x16x4xf32>
    %46 = arith.mulf %41, %45 : vector<16x16x4xf32>
    %47 = arith.addf %40, %46 : vector<16x16x4xf32>
    %c1_42 = arith.constant 1 : index
    %c0_43 = arith.constant 0 : index
    %c0_44 = arith.constant 0 : index
    %48 = vector.load %arg9[%c1_42, %c0_43, %c0_44] : memref<18x18x4xf32, #tpu.memory_space<vmem>>, vector<16x16x4xf32>
    %49 = vector.extract_strided_slice %10 {offsets = [3, 0], sizes = [1, 4], strides = [1, 1]} : vector<9x4xf32> to vector<1x4xf32>
    %50 = vector.shape_cast %49 : vector<1x4xf32> to vector<4xf32>
    %51 = vector.shape_cast %50 : vector<4xf32> to vector<1x1x4xf32>
    %52 = vector.broadcast %51 : vector<1x1x4xf32> to vector<16x16x4xf32>
    %53 = arith.mulf %48, %52 : vector<16x16x4xf32>
    %54 = arith.addf %47, %53 : vector<16x16x4xf32>
    %c1_45 = arith.constant 1 : index
    %c1_46 = arith.constant 1 : index
    %c0_47 = arith.constant 0 : index
    %55 = vector.load %arg9[%c1_45, %c1_46, %c0_47] : memref<18x18x4xf32, #tpu.memory_space<vmem>>, vector<16x16x4xf32>
    %56 = vector.extract_strided_slice %10 {offsets = [4, 0], sizes = [1, 4], strides = [1, 1]} : vector<9x4xf32> to vector<1x4xf32>
    %57 = vector.shape_cast %56 : vector<1x4xf32> to vector<4xf32>
    %58 = vector.shape_cast %57 : vector<4xf32> to vector<1x1x4xf32>
    %59 = vector.broadcast %58 : vector<1x1x4xf32> to vector<16x16x4xf32>
    %60 = arith.mulf %55, %59 : vector<16x16x4xf32>
    %61 = arith.addf %54, %60 : vector<16x16x4xf32>
    %c1_48 = arith.constant 1 : index
    %c2_49 = arith.constant 2 : index
    %c0_50 = arith.constant 0 : index
    %62 = vector.load %arg9[%c1_48, %c2_49, %c0_50] : memref<18x18x4xf32, #tpu.memory_space<vmem>>, vector<16x16x4xf32>
    %63 = vector.extract_strided_slice %10 {offsets = [5, 0], sizes = [1, 4], strides = [1, 1]} : vector<9x4xf32> to vector<1x4xf32>
    %64 = vector.shape_cast %63 : vector<1x4xf32> to vector<4xf32>
    %65 = vector.shape_cast %64 : vector<4xf32> to vector<1x1x4xf32>
    %66 = vector.broadcast %65 : vector<1x1x4xf32> to vector<16x16x4xf32>
    %67 = arith.mulf %62, %66 : vector<16x16x4xf32>
    %68 = arith.addf %61, %67 : vector<16x16x4xf32>
    %c2_51 = arith.constant 2 : index
    %c0_52 = arith.constant 0 : index
    %c0_53 = arith.constant 0 : index
    %69 = vector.load %arg9[%c2_51, %c0_52, %c0_53] : memref<18x18x4xf32, #tpu.memory_space<vmem>>, vector<16x16x4xf32>
    %70 = vector.extract_strided_slice %10 {offsets = [6, 0], sizes = [1, 4], strides = [1, 1]} : vector<9x4xf32> to vector<1x4xf32>
    %71 = vector.shape_cast %70 : vector<1x4xf32> to vector<4xf32>
    %72 = vector.shape_cast %71 : vector<4xf32> to vector<1x1x4xf32>
    %73 = vector.broadcast %72 : vector<1x1x4xf32> to vector<16x16x4xf32>
    %74 = arith.mulf %69, %73 : vector<16x16x4xf32>
    %75 = arith.addf %68, %74 : vector<16x16x4xf32>
    %c2_54 = arith.constant 2 : index
    %c1_55 = arith.constant 1 : index
    %c0_56 = arith.constant 0 : index
    %76 = vector.load %arg9[%c2_54, %c1_55, %c0_56] : memref<18x18x4xf32, #tpu.memory_space<vmem>>, vector<16x16x4xf32>
    %77 = vector.extract_strided_slice %10 {offsets = [7, 0], sizes = [1, 4], strides = [1, 1]} : vector<9x4xf32> to vector<1x4xf32>
    %78 = vector.shape_cast %77 : vector<1x4xf32> to vector<4xf32>
    %79 = vector.shape_cast %78 : vector<4xf32> to vector<1x1x4xf32>
    %80 = vector.broadcast %79 : vector<1x1x4xf32> to vector<16x16x4xf32>
    %81 = arith.mulf %76, %80 : vector<16x16x4xf32>
    %82 = arith.addf %75, %81 : vector<16x16x4xf32>
    %c2_57 = arith.constant 2 : index
    %c2_58 = arith.constant 2 : index
    %c0_59 = arith.constant 0 : index
    %83 = vector.load %arg9[%c2_57, %c2_58, %c0_59] : memref<18x18x4xf32, #tpu.memory_space<vmem>>, vector<16x16x4xf32>
    %84 = vector.extract_strided_slice %10 {offsets = [8, 0], sizes = [1, 4], strides = [1, 1]} : vector<9x4xf32> to vector<1x4xf32>
    %85 = vector.shape_cast %84 : vector<1x4xf32> to vector<4xf32>
    %86 = vector.shape_cast %85 : vector<4xf32> to vector<1x1x4xf32>
    %87 = vector.broadcast %86 : vector<1x1x4xf32> to vector<16x16x4xf32>
    %88 = arith.mulf %83, %87 : vector<16x16x4xf32>
    %89 = arith.addf %82, %88 : vector<16x16x4xf32>
    %90 = vector.shape_cast %12 : vector<4xf32> to vector<1x1x4xf32>
    %91 = vector.broadcast %90 : vector<1x1x4xf32> to vector<16x16x4xf32>
    %92 = arith.addf %89, %91 : vector<16x16x4xf32>
    %cst_60 = arith.constant 0.000000e+00 : f32
    %93 = vector.broadcast %cst_60 : f32 to vector<16x16x4xf32>
    %94 = arith.maximumf %92, %93 : vector<16x16x4xf32>
    %95 = vector.shape_cast %94 : vector<16x16x4xf32> to vector<256x4xf32>
    %cst_61 = arith.constant dense<0.000000e+00> : vector<256x16xf32>
    %96 = tpu.matmul %95, %13, %cst_61 {dimension_numbers = #tpu.dot_dimension_numbers<[1], [0], [0], [1], [0, 0, 1, 1], [], []>} : vector<256x4xf32>, vector<4x16xf32>, vector<256x16xf32> -> vector<256x16xf32>
    %97 = vector.broadcast %14 : vector<1x16xf32> to vector<256x16xf32>
    %98 = arith.addf %96, %97 : vector<256x16xf32>
    %99 = vector.extract_strided_slice %0 {offsets = [0, 0, 0, 0], sizes = [1, 16, 16, 16], strides = [1, 1, 1, 1]} : vector<2x16x16x16xf32> to vector<1x16x16x16xf32>
    %100 = vector.shape_cast %99 : vector<1x16x16x16xf32> to vector<16x16x16xf32>
    %101 = vector.shape_cast %100 : vector<16x16x16xf32> to vector<256x16xf32>
    %102 = arith.addf %98, %101 : vector<256x16xf32>
    %cst_62 = arith.constant 0.000000e+00 : f32
    %103 = vector.broadcast %cst_62 : f32 to vector<256x16xf32>
    %104 = arith.maximumf %102, %103 : vector<256x16xf32>
    %105 = vector.shape_cast %104 : vector<256x16xf32> to vector<16x16x16xf32>
    %c0_63 = arith.constant 0 : index
    %c0_64 = arith.constant 0 : index
    %c0_65 = arith.constant 0 : index
    %c0_66 = arith.constant 0 : index
    %106 = vector.load %arg8[%c0_63, %c0_64, %c0_65, %c0_66] : memref<2x16x16x16xf32, #tpu.memory_space<vmem>>, vector<1x16x16x16xf32>
    %107 = vector.shape_cast %106 : vector<1x16x16x16xf32> to vector<16x16x16xf32>
    %108 = vector.shape_cast %105 : vector<16x16x16xf32> to vector<1x16x16x16xf32>
    tpu.vector_store %arg8[%c0_63, %c0_64, %c0_65, %c0_66], %108 {strides = array<i32>} : memref<2x16x16x16xf32, #tpu.memory_space<vmem>>, vector<1x16x16x16xf32>,
    %109 = vector.extract_strided_slice %9 {offsets = [1, 0, 0, 0], sizes = [1, 16, 16, 4], strides = [1, 1, 1, 1]} : vector<2x16x16x4xf32> to vector<1x16x16x4xf32>
    %110 = vector.shape_cast %109 : vector<1x16x16x4xf32> to vector<16x16x4xf32>
    %c1_67 = arith.constant 1 : index
    %c1_68 = arith.constant 1 : index
    %c0_69 = arith.constant 0 : index
    %111 = vector.load %arg9[%c1_67, %c1_68, %c0_69] : memref<18x18x4xf32, #tpu.memory_space<vmem>>, vector<16x16x4xf32>
    tpu.vector_store %arg9[%c1_67, %c1_68, %c0_69], %110 {strides = array<i32>} : memref<18x18x4xf32, #tpu.memory_space<vmem>>, vector<16x16x4xf32>,
    %cst_70 = arith.constant 0.000000e+00 : f32
    %112 = vector.broadcast %cst_70 : f32 to vector<16x16x4xf32>
    %c0_71 = arith.constant 0 : index
    %c0_72 = arith.constant 0 : index
    %c0_73 = arith.constant 0 : index
    %113 = vector.load %arg9[%c0_71, %c0_72, %c0_73] : memref<18x18x4xf32, #tpu.memory_space<vmem>>, vector<16x16x4xf32>
    %114 = vector.extract_strided_slice %10 {offsets = [0, 0], sizes = [1, 4], strides = [1, 1]} : vector<9x4xf32> to vector<1x4xf32>
    %115 = vector.shape_cast %114 : vector<1x4xf32> to vector<4xf32>
    %116 = vector.shape_cast %115 : vector<4xf32> to vector<1x1x4xf32>
    %117 = vector.broadcast %116 : vector<1x1x4xf32> to vector<16x16x4xf32>
    %118 = arith.mulf %113, %117 : vector<16x16x4xf32>
    %119 = arith.addf %112, %118 : vector<16x16x4xf32>
    %c0_74 = arith.constant 0 : index
    %c1_75 = arith.constant 1 : index
    %c0_76 = arith.constant 0 : index
    %120 = vector.load %arg9[%c0_74, %c1_75, %c0_76] : memref<18x18x4xf32, #tpu.memory_space<vmem>>, vector<16x16x4xf32>
    %121 = vector.extract_strided_slice %10 {offsets = [1, 0], sizes = [1, 4], strides = [1, 1]} : vector<9x4xf32> to vector<1x4xf32>
    %122 = vector.shape_cast %121 : vector<1x4xf32> to vector<4xf32>
    %123 = vector.shape_cast %122 : vector<4xf32> to vector<1x1x4xf32>
    %124 = vector.broadcast %123 : vector<1x1x4xf32> to vector<16x16x4xf32>
    %125 = arith.mulf %120, %124 : vector<16x16x4xf32>
    %126 = arith.addf %119, %125 : vector<16x16x4xf32>
    %c0_77 = arith.constant 0 : index
    %c2_78 = arith.constant 2 : index
    %c0_79 = arith.constant 0 : index
    %127 = vector.load %arg9[%c0_77, %c2_78, %c0_79] : memref<18x18x4xf32, #tpu.memory_space<vmem>>, vector<16x16x4xf32>
    %128 = vector.extract_strided_slice %10 {offsets = [2, 0], sizes = [1, 4], strides = [1, 1]} : vector<9x4xf32> to vector<1x4xf32>
    %129 = vector.shape_cast %128 : vector<1x4xf32> to vector<4xf32>
    %130 = vector.shape_cast %129 : vector<4xf32> to vector<1x1x4xf32>
    %131 = vector.broadcast %130 : vector<1x1x4xf32> to vector<16x16x4xf32>
    %132 = arith.mulf %127, %131 : vector<16x16x4xf32>
    %133 = arith.addf %126, %132 : vector<16x16x4xf32>
    %c1_80 = arith.constant 1 : index
    %c0_81 = arith.constant 0 : index
    %c0_82 = arith.constant 0 : index
    %134 = vector.load %arg9[%c1_80, %c0_81, %c0_82] : memref<18x18x4xf32, #tpu.memory_space<vmem>>, vector<16x16x4xf32>
    %135 = vector.extract_strided_slice %10 {offsets = [3, 0], sizes = [1, 4], strides = [1, 1]} : vector<9x4xf32> to vector<1x4xf32>
    %136 = vector.shape_cast %135 : vector<1x4xf32> to vector<4xf32>
    %137 = vector.shape_cast %136 : vector<4xf32> to vector<1x1x4xf32>
    %138 = vector.broadcast %137 : vector<1x1x4xf32> to vector<16x16x4xf32>
    %139 = arith.mulf %134, %138 : vector<16x16x4xf32>
    %140 = arith.addf %133, %139 : vector<16x16x4xf32>
    %c1_83 = arith.constant 1 : index
    %c1_84 = arith.constant 1 : index
    %c0_85 = arith.constant 0 : index
    %141 = vector.load %arg9[%c1_83, %c1_84, %c0_85] : memref<18x18x4xf32, #tpu.memory_space<vmem>>, vector<16x16x4xf32>
    %142 = vector.extract_strided_slice %10 {offsets = [4, 0], sizes = [1, 4], strides = [1, 1]} : vector<9x4xf32> to vector<1x4xf32>
    %143 = vector.shape_cast %142 : vector<1x4xf32> to vector<4xf32>
    %144 = vector.shape_cast %143 : vector<4xf32> to vector<1x1x4xf32>
    %145 = vector.broadcast %144 : vector<1x1x4xf32> to vector<16x16x4xf32>
    %146 = arith.mulf %141, %145 : vector<16x16x4xf32>
    %147 = arith.addf %140, %146 : vector<16x16x4xf32>
    %c1_86 = arith.constant 1 : index
    %c2_87 = arith.constant 2 : index
    %c0_88 = arith.constant 0 : index
    %148 = vector.load %arg9[%c1_86, %c2_87, %c0_88] : memref<18x18x4xf32, #tpu.memory_space<vmem>>, vector<16x16x4xf32>
    %149 = vector.extract_strided_slice %10 {offsets = [5, 0], sizes = [1, 4], strides = [1, 1]} : vector<9x4xf32> to vector<1x4xf32>
    %150 = vector.shape_cast %149 : vector<1x4xf32> to vector<4xf32>
    %151 = vector.shape_cast %150 : vector<4xf32> to vector<1x1x4xf32>
    %152 = vector.broadcast %151 : vector<1x1x4xf32> to vector<16x16x4xf32>
    %153 = arith.mulf %148, %152 : vector<16x16x4xf32>
    %154 = arith.addf %147, %153 : vector<16x16x4xf32>
    %c2_89 = arith.constant 2 : index
    %c0_90 = arith.constant 0 : index
    %c0_91 = arith.constant 0 : index
    %155 = vector.load %arg9[%c2_89, %c0_90, %c0_91] : memref<18x18x4xf32, #tpu.memory_space<vmem>>, vector<16x16x4xf32>
    %156 = vector.extract_strided_slice %10 {offsets = [6, 0], sizes = [1, 4], strides = [1, 1]} : vector<9x4xf32> to vector<1x4xf32>
    %157 = vector.shape_cast %156 : vector<1x4xf32> to vector<4xf32>
    %158 = vector.shape_cast %157 : vector<4xf32> to vector<1x1x4xf32>
    %159 = vector.broadcast %158 : vector<1x1x4xf32> to vector<16x16x4xf32>
    %160 = arith.mulf %155, %159 : vector<16x16x4xf32>
    %161 = arith.addf %154, %160 : vector<16x16x4xf32>
    %c2_92 = arith.constant 2 : index
    %c1_93 = arith.constant 1 : index
    %c0_94 = arith.constant 0 : index
    %162 = vector.load %arg9[%c2_92, %c1_93, %c0_94] : memref<18x18x4xf32, #tpu.memory_space<vmem>>, vector<16x16x4xf32>
    %163 = vector.extract_strided_slice %10 {offsets = [7, 0], sizes = [1, 4], strides = [1, 1]} : vector<9x4xf32> to vector<1x4xf32>
    %164 = vector.shape_cast %163 : vector<1x4xf32> to vector<4xf32>
    %165 = vector.shape_cast %164 : vector<4xf32> to vector<1x1x4xf32>
    %166 = vector.broadcast %165 : vector<1x1x4xf32> to vector<16x16x4xf32>
    %167 = arith.mulf %162, %166 : vector<16x16x4xf32>
    %168 = arith.addf %161, %167 : vector<16x16x4xf32>
    %c2_95 = arith.constant 2 : index
    %c2_96 = arith.constant 2 : index
    %c0_97 = arith.constant 0 : index
    %169 = vector.load %arg9[%c2_95, %c2_96, %c0_97] : memref<18x18x4xf32, #tpu.memory_space<vmem>>, vector<16x16x4xf32>
    %170 = vector.extract_strided_slice %10 {offsets = [8, 0], sizes = [1, 4], strides = [1, 1]} : vector<9x4xf32> to vector<1x4xf32>
    %171 = vector.shape_cast %170 : vector<1x4xf32> to vector<4xf32>
    %172 = vector.shape_cast %171 : vector<4xf32> to vector<1x1x4xf32>
    %173 = vector.broadcast %172 : vector<1x1x4xf32> to vector<16x16x4xf32>
    %174 = arith.mulf %169, %173 : vector<16x16x4xf32>
    %175 = arith.addf %168, %174 : vector<16x16x4xf32>
    %176 = vector.shape_cast %12 : vector<4xf32> to vector<1x1x4xf32>
    %177 = vector.broadcast %176 : vector<1x1x4xf32> to vector<16x16x4xf32>
    %178 = arith.addf %175, %177 : vector<16x16x4xf32>
    %cst_98 = arith.constant 0.000000e+00 : f32
    %179 = vector.broadcast %cst_98 : f32 to vector<16x16x4xf32>
    %180 = arith.maximumf %178, %179 : vector<16x16x4xf32>
    %181 = vector.shape_cast %180 : vector<16x16x4xf32> to vector<256x4xf32>
    %cst_99 = arith.constant dense<0.000000e+00> : vector<256x16xf32>
    %182 = tpu.matmul %181, %13, %cst_99 {dimension_numbers = #tpu.dot_dimension_numbers<[1], [0], [0], [1], [0, 0, 1, 1], [], []>} : vector<256x4xf32>, vector<4x16xf32>, vector<256x16xf32> -> vector<256x16xf32>
    %183 = vector.broadcast %14 : vector<1x16xf32> to vector<256x16xf32>
    %184 = arith.addf %182, %183 : vector<256x16xf32>
    %185 = vector.extract_strided_slice %0 {offsets = [1, 0, 0, 0], sizes = [1, 16, 16, 16], strides = [1, 1, 1, 1]} : vector<2x16x16x16xf32> to vector<1x16x16x16xf32>
    %186 = vector.shape_cast %185 : vector<1x16x16x16xf32> to vector<16x16x16xf32>
    %187 = vector.shape_cast %186 : vector<16x16x16xf32> to vector<256x16xf32>
    %188 = arith.addf %184, %187 : vector<256x16xf32>
    %cst_100 = arith.constant 0.000000e+00 : f32
    %189 = vector.broadcast %cst_100 : f32 to vector<256x16xf32>
    %190 = arith.maximumf %188, %189 : vector<256x16xf32>
    %191 = vector.shape_cast %190 : vector<256x16xf32> to vector<16x16x16xf32>
    %c1_101 = arith.constant 1 : index
    %c0_102 = arith.constant 0 : index
    %c0_103 = arith.constant 0 : index
    %c0_104 = arith.constant 0 : index
    %192 = vector.load %arg8[%c1_101, %c0_102, %c0_103, %c0_104] : memref<2x16x16x16xf32, #tpu.memory_space<vmem>>, vector<1x16x16x16xf32>
    %193 = vector.shape_cast %192 : vector<1x16x16x16xf32> to vector<16x16x16xf32>
    %194 = vector.shape_cast %191 : vector<16x16x16xf32> to vector<1x16x16x16xf32>
    tpu.vector_store %arg8[%c1_101, %c0_102, %c0_103, %c0_104], %194 {strides = array<i32>} : memref<2x16x16x16xf32, #tpu.memory_space<vmem>>, vector<1x16x16x16xf32>,
    return
  }
  func.func @transform_0(%arg0: i32) -> (i32, i32, i32, i32) {
    %c0_i32 = arith.constant 0 : i32
    %c0_i32_0 = arith.constant 0 : i32
    %c0_i32_1 = arith.constant 0 : i32
    %c0_i32_2 = arith.constant 0 : i32
    return %arg0, %c0_i32, %c0_i32_0, %c0_i32_1 : i32, i32, i32, i32
  }
  func.func @transform_1(%arg0: i32) -> (i32, i32) {
    %c0_i32 = arith.constant 0 : i32
    %c0_i32_0 = arith.constant 0 : i32
    %c0_i32_1 = arith.constant 0 : i32
    return %c0_i32, %c0_i32_0 : i32, i32
  }
  func.func @transform_2(%arg0: i32) -> (i32, i32) {
    %c0_i32 = arith.constant 0 : i32
    %c0_i32_0 = arith.constant 0 : i32
    %c0_i32_1 = arith.constant 0 : i32
    return %c0_i32, %c0_i32_0 : i32, i32
  }
  func.func @transform_3(%arg0: i32) -> (i32, i32) {
    %c0_i32 = arith.constant 0 : i32
    %c0_i32_0 = arith.constant 0 : i32
    %c0_i32_1 = arith.constant 0 : i32
    return %c0_i32, %c0_i32_0 : i32, i32
  }
  func.func @transform_4(%arg0: i32) -> (i32, i32) {
    %c0_i32 = arith.constant 0 : i32
    %c0_i32_0 = arith.constant 0 : i32
    %c0_i32_1 = arith.constant 0 : i32
    return %c0_i32, %c0_i32_0 : i32, i32
  }
  func.func @transform_5(%arg0: i32) -> (i32, i32) {
    %c0_i32 = arith.constant 0 : i32
    %c0_i32_0 = arith.constant 0 : i32
    %c0_i32_1 = arith.constant 0 : i32
    return %c0_i32, %c0_i32_0 : i32, i32
  }
  func.func @transform_6(%arg0: i32) -> (i32, i32) {
    %c0_i32 = arith.constant 0 : i32
    %c0_i32_0 = arith.constant 0 : i32
    %c0_i32_1 = arith.constant 0 : i32
    return %c0_i32, %c0_i32_0 : i32, i32
  }
  func.func @transform_7(%arg0: i32) -> (i32, i32, i32, i32) {
    %c0_i32 = arith.constant 0 : i32
    %c0_i32_0 = arith.constant 0 : i32
    %c0_i32_1 = arith.constant 0 : i32
    %c0_i32_2 = arith.constant 0 : i32
    return %arg0, %c0_i32, %c0_i32_0, %c0_i32_1 : i32, i32, i32, i32
  }
}

</mosaic_0001>

<llo_original>
// kernel: tpu_custom_call.1
$region0: #{tpu_custom_call.1}
  #allocation0 [shape = 'u32[]', space=smem, size = 0x4, offset = 0x4, fixed_abs, tag = 'smem constant byte address 0x4 - core index']
  #allocation1 [shape = 'u32[144,128]{1,0:T(1,128)}', space=vmem, size = 0x12000, scoped, tag = 'internal scratch']
  #allocation2 [shape = 'f32[18,18,4]{2,1,0:T(8,128)}', space=vmem, size = 0x36000, scoped, tag = 'scratch operand']
  %s0 = inlined_call_operand.hbm [shape: f32[2,16,16,16], index: 0, kind: input, shape index: {}]
  %s1 = inlined_call_operand.vmem [shape: f32[16,4], index: 1, kind: input, shape index: {}]
  %s2 = inlined_call_operand.vmem [shape: f32[1,4], index: 2, kind: input, shape index: {}]
  %s3 = inlined_call_operand.vmem [shape: f32[9,4], index: 3, kind: input, shape index: {}]
  %s4 = inlined_call_operand.vmem [shape: f32[1,4], index: 4, kind: input, shape index: {}]
  %s5 = inlined_call_operand.vmem [shape: f32[4,16], index: 5, kind: input, shape index: {}]
  %s6 = inlined_call_operand.vmem [shape: f32[1,16], index: 6, kind: input, shape index: {}]
  %s7 = inlined_call_operand.hbm [shape: f32[2,16,16,16], index: 7, kind: output, shape index: {}]
  %s8 = sld [smem:[#allocation0]]
  $region42: #{tpu_custom_call.1} parent=0
    _
  %s10 = ssub.s32 1, %s8
  %s11 = scalar_select 0, %s10, %s8
  $region1: #{tpu_custom_call.1} parent=0
    #allocation3 [shape = 'u8[262144]{0}', space=vmem, size = 0x40000, scoped, tag = 'input window, operand 0, single buffered']
    #allocation4 [shape = 's32[1]{0}', space=sflag, size = 0x4, scoped, tag = 'scoped memory for tpu_custom_call.1']
    #allocation5 [shape = 's32[1]{0}', space=sflag, size = 0x4, scoped, tag = 'scoped memory for tpu_custom_call.1']
    #allocation6 [shape = 'u8[262144]{0}', space=vmem, size = 0x40000, scoped, tag = 'output window, operand 0, single buffered']
    %12 = vsyncpa [#allocation4], 0
    %13 = vsyncpa [#allocation5], 0
    // Predicated region
    $region2: #{tpu_custom_call.1} parent=1 // pred_check
      _
    $region3: #{tpu_custom_call.1} parent=1 // pred_check_branch
      %15 = sbr.rel (0) target = $region5
    $region4: #{tpu_custom_call.1} parent=1 // pred_region
      %s17 = ssub.s32 8192, 8192
      %18 = vsyncadd [#allocation4], %s17
      %s19 = sshll.u32 [#allocation3], 4
      %s20 = int_to_ptr.vmem [resolvable:$true] %s19
      %25 = dma.hbm_to_vmem [thread:$0]  %s0, 8192, %s20, [#allocation4], 128, 128, 8
    $region5: #{tpu_custom_call.1} parent=1 // pred_fallthru
      _
    // Predicated region
    $region6: #{tpu_custom_call.1} parent=1 // pred_check
      _
    $region7: #{tpu_custom_call.1} parent=1 // pred_check_branch
      %27 = sbr.rel (0) target = $region9
    $region8: #{tpu_custom_call.1} parent=1 // pred_region
      _
    $region9: #{tpu_custom_call.1} parent=1 // pred_fallthru
      _
    // Predicated region
    $region10: #{tpu_custom_call.1} parent=1 // pred_check
      _
    $region11: #{tpu_custom_call.1} parent=1 // pred_check_branch
      %29 = sbr.rel (0) target = $region13
    $region12: #{tpu_custom_call.1} parent=1 // pred_region
      _
    $region13: #{tpu_custom_call.1} parent=1 // pred_fallthru
      _
    // Predicated region
    $region14: #{tpu_custom_call.1} parent=1 // pred_check
      _
    $region15: #{tpu_custom_call.1} parent=1 // pred_check_branch
      %31 = sbr.rel (0) target = $region17
    $region16: #{tpu_custom_call.1} parent=1 // pred_region
      _
    $region17: #{tpu_custom_call.1} parent=1 // pred_fallthru
      _
    // Predicated region
    $region18: #{tpu_custom_call.1} parent=1 // pred_check
      _
    $region19: #{tpu_custom_call.1} parent=1 // pred_check_branch
      %33 = sbr.rel (0) target = $region21
    $region20: #{tpu_custom_call.1} parent=1 // pred_region
      _
    $region21: #{tpu_custom_call.1} parent=1 // pred_fallthru
      _
    // Predicated region
    $region22: #{tpu_custom_call.1} parent=1 // pred_check
      _
    $region23: #{tpu_custom_call.1} parent=1 // pred_check_branch
      %35 = sbr.rel (0) target = $region25
    $region24: #{tpu_custom_call.1} parent=1 // pred_region
      _
    $region25: #{tpu_custom_call.1} parent=1 // pred_fallthru
      _
    // Predicated region
    $region26: #{tpu_custom_call.1} parent=1 // pred_check
      _
    $region27: #{tpu_custom_call.1} parent=1 // pred_check_branch
      %37 = sbr.rel (0) target = $region29
    $region28: #{tpu_custom_call.1} parent=1 // pred_region
      _
    $region29: #{tpu_custom_call.1} parent=1 // pred_fallthru
      _
    // Predicated region
    $region30: #{tpu_custom_call.1} parent=1 // pred_check
      _
    $region31: #{tpu_custom_call.1} parent=1 // pred_check_branch
      %39 = sbr.rel (0) target = $region33
    $region32: #{tpu_custom_call.1} parent=1 // pred_region
      %40 = dma.done [#allocation4], 8192
    $region33: #{tpu_custom_call.1} parent=1 // pred_fallthru
      _
    %v41 = vld [vmem:[#allocation3] sm:$0xff]
    %v42 = vld [vmem:[#allocation3 + $0x8] sm:$0xff]
    %v43 = vld [vmem:[#allocation3 + $0x10] sm:$0xff]
    %v44 = vld [vmem:[#allocation3 + $0x18] sm:$0xff]
    %v45 = vld [vmem:[#allocation3 + $0x20] sm:$0xff]
    %v46 = vld [vmem:[#allocation3 + $0x28] sm:$0xff]
    %v47 = vld [vmem:[#allocation3 + $0x30] sm:$0xff]
    %v48 = vld [vmem:[#allocation3 + $0x38] sm:$0xff]
    %v49 = vld [vmem:[#allocation3 + $0x40] sm:$0xff]
    %v50 = vld [vmem:[#allocation3 + $0x48] sm:$0xff]
    %v51 = vld [vmem:[#allocation3 + $0x50] sm:$0xff]
    %v52 = vld [vmem:[#allocation3 + $0x58] sm:$0xff]
    %v53 = vld [vmem:[#allocation3 + $0x60] sm:$0xff]
    %v54 = vld [vmem:[#allocation3 + $0x68] sm:$0xff]
    %v55 = vld [vmem:[#allocation3 + $0x70] sm:$0xff]
    %v56 = vld [vmem:[#allocation3 + $0x78] sm:$0xff]
    %v57 = vld [vmem:[#allocation3 + $0x80] sm:$0xff]
    %v58 = vld [vmem:[#allocation3 + $0x88] sm:$0xff]
    %v59 = vld [vmem:[#allocation3 + $0x90] sm:$0xff]
    %v60 = vld [vmem:[#allocation3 + $0x98] sm:$0xff]
    %v61 = vld [vmem:[#allocation3 + $0xa0] sm:$0xff]
    %v62 = vld [vmem:[#allocation3 + $0xa8] sm:$0xff]
    %v63 = vld [vmem:[#allocation3 + $0xb0] sm:$0xff]
    %v64 = vld [vmem:[#allocation3 + $0xb8] sm:$0xff]
    %v65 = vld [vmem:[#allocation3 + $0xc0] sm:$0xff]
    %v66 = vld [vmem:[#allocation3 + $0xc8] sm:$0xff]
    %v67 = vld [vmem:[#allocation3 + $0xd0] sm:$0xff]
    %v68 = vld [vmem:[#allocation3 + $0xd8] sm:$0xff]
    %v69 = vld [vmem:[#allocation3 + $0xe0] sm:$0xff]
    %v70 = vld [vmem:[#allocation3 + $0xe8] sm:$0xff]
    %v71 = vld [vmem:[#allocation3 + $0xf0] sm:$0xff]
    %v72 = vld [vmem:[#allocation3 + $0xf8] sm:$0xff]
    %v73 = vld [vmem:[#allocation3 + $0x100] sm:$0xff]
    %v74 = vld [vmem:[#allocation3 + $0x108] sm:$0xff]
    %v75 = vld [vmem:[#allocation3 + $0x110] sm:$0xff]
    %v76 = vld [vmem:[#allocation3 + $0x118] sm:$0xff]
    %v77 = vld [vmem:[#allocation3 + $0x120] sm:$0xff]
    %v78 = vld [vmem:[#allocation3 + $0x128] sm:$0xff]
    %v79 = vld [vmem:[#allocation3 + $0x130] sm:$0xff]
    %v80 = vld [vmem:[#allocation3 + $0x138] sm:$0xff]
    %v81 = vld [vmem:[#allocation3 + $0x140] sm:$0xff]
    %v82 = vld [vmem:[#allocation3 + $0x148] sm:$0xff]
    %v83 = vld [vmem:[#allocation3 + $0x150] sm:$0xff]
    %v84 = vld [vmem:[#allocation3 + $0x158] sm:$0xff]
    %v85 = vld [vmem:[#allocation3 + $0x160] sm:$0xff]
    %v86 = vld [vmem:[#allocation3 + $0x168] sm:$0xff]
    %v87 = vld [vmem:[#allocation3 + $0x170] sm:$0xff]
    %v88 = vld [vmem:[#allocation3 + $0x178] sm:$0xff]
    %v89 = vld [vmem:[#allocation3 + $0x180] sm:$0xff]
    %v90 = vld [vmem:[#allocation3 + $0x188] sm:$0xff]
    %v91 = vld [vmem:[#allocation3 + $0x190] sm:$0xff]
    %v92 = vld [vmem:[#allocation3 + $0x198] sm:$0xff]
    %v93 = vld [vmem:[#allocation3 + $0x1a0] sm:$0xff]
    %v94 = vld [vmem:[#allocation3 + $0x1a8] sm:$0xff]
    %v95 = vld [vmem:[#allocation3 + $0x1b0] sm:$0xff]
    %v96 = vld [vmem:[#allocation3 + $0x1b8] sm:$0xff]
    %v97 = vld [vmem:[#allocation3 + $0x1c0] sm:$0xff]
    %v98 = vld [vmem:[#allocation3 + $0x1c8] sm:$0xff]
    %v99 = vld [vmem:[#allocation3 + $0x1d0] sm:$0xff]
    %v100 = vld [vmem:[#allocation3 + $0x1d8] sm:$0xff]
    %v101 = vld [vmem:[#allocation3 + $0x1e0] sm:$0xff]
    %v102 = vld [vmem:[#allocation3 + $0x1e8] sm:$0xff]
    %v103 = vld [vmem:[#allocation3 + $0x1f0] sm:$0xff]
    %v104 = vld [vmem:[#allocation3 + $0x1f8] sm:$0xff]
    %v105 = vld [vmem:[%s1] sm:$0xff]
    %v106 = vld [vmem:[%s1 + $0x8] sm:$0xff]
    %v107 = vld [vmem:[%s2] sm:$0x1]
    %v109 = vlaneseq
    %v110 = vshrl.u32 %v109, 7
    %v111 = vsub.s32 0, %v110
    %v112 = vrot.slane %v107, %v111
    %vm114 = vcmask 130048
    %v116 = vsel %vm114, %v41, 0
    %v119 = vsel %vm114, %v42, 0
    %v122 = vsel %vm114, %v43, 0
    %v125 = vsel %vm114, %v44, 0
    %v128 = vsel %vm114, %v45, 0
    %v131 = vsel %vm114, %v46, 0
    %v134 = vsel %vm114, %v47, 0
    %v137 = vsel %vm114, %v48, 0
    %v140 = vsel %vm114, %v49, 0
    %v143 = vsel %vm114, %v50, 0
    %v146 = vsel %vm114, %v51, 0
    %v149 = vsel %vm114, %v52, 0
    %v152 = vsel %vm114, %v53, 0
    %v155 = vsel %vm114, %v54, 0
    %v158 = vsel %vm114, %v55, 0
    %v161 = vsel %vm114, %v56, 0
    %v164 = vsel %vm114, %v57, 0
    %v167 = vsel %vm114, %v58, 0
    %v170 = vsel %vm114, %v59, 0
    %v173 = vsel %vm114, %v60, 0
    %v176 = vsel %vm114, %v61, 0
    %v179 = vsel %vm114, %v62, 0
    %v182 = vsel %vm114, %v63, 0
    %v185 = vsel %vm114, %v64, 0
    %v188 = vsel %vm114, %v65, 0
    %v191 = vsel %vm114, %v66, 0
    %v194 = vsel %vm114, %v67, 0
    %v197 = vsel %vm114, %v68, 0
    %v200 = vsel %vm114, %v69, 0
    %v203 = vsel %vm114, %v70, 0
    %v206 = vsel %vm114, %v71, 0
    %v209 = vsel %vm114, %v72, 0
    %v212 = vsel %vm114, %v73, 0
    %v215 = vsel %vm114, %v74, 0
    %v218 = vsel %vm114, %v75, 0
    %v221 = vsel %vm114, %v76, 0
    %v224 = vsel %vm114, %v77, 0
    %v227 = vsel %vm114, %v78, 0
    %v230 = vsel %vm114, %v79, 0
    %v233 = vsel %vm114, %v80, 0
    %v236 = vsel %vm114, %v81, 0
    %v239 = vsel %vm114, %v82, 0
    %v242 = vsel %vm114, %v83, 0
    %v245 = vsel %vm114, %v84, 0
    %v248 = vsel %vm114, %v85, 0
    %v251 = vsel %vm114, %v86, 0
    %v254 = vsel %vm114, %v87, 0
    %v257 = vsel %vm114, %v88, 0
    %v260 = vsel %vm114, %v89, 0
    %v263 = vsel %vm114, %v90, 0
    %v266 = vsel %vm114, %v91, 0
    %v269 = vsel %vm114, %v92, 0
    %v272 = vsel %vm114, %v93, 0
    %v275 = vsel %vm114, %v94, 0
    %v278 = vsel %vm114, %v95, 0
    %v281 = vsel %vm114, %v96, 0
    %v284 = vsel %vm114, %v97, 0
    %v287 = vsel %vm114, %v98, 0
    %v290 = vsel %vm114, %v99, 0
    %v293 = vsel %vm114, %v100, 0
    %v296 = vsel %vm114, %v101, 0
    %v299 = vsel %vm114, %v102, 0
    %v302 = vsel %vm114, %v103, 0
    %v305 = vsel %vm114, %v104, 0
    %307 = vmatprep.subr.mxu0 0.0
    %308 = vmatpush1.msra.mxu0 %v105
    %309 = vmatprep.subr.mxu0 0.0
    %310 = vmatpush1.msra.mxu0 %v106
    %311 = vmatprep.subr.mxu0 0.0
    %312 = vmatpush1.msra.mxu0 0.0
    %313 = vmatprep.subr.mxu0 0.0
    %314 = vmatpush1.msra.mxu0 0.0
    %315 = vmatprep.subr.mxu0 0.0
    %316 = vmatpush1.msra.mxu0 0.0
    %317 = vmatprep.subr.mxu0 0.0
    %318 = vmatpush1.msra.mxu0 0.0
    %319 = vmatprep.subr.mxu0 0.0
    %320 = vmatpush1.msra.mxu0 0.0
    %321 = vmatprep.subr.mxu0 0.0
    %322 = vmatpush1.msra.mxu0 0.0
    %323 = vmatprep.subr.mxu0 0.0
    %324 = vmatpush1.msra.mxu0 0.0
    %325 = vmatprep.subr.mxu0 0.0
    %326 = vmatpush1.msra.mxu0 0.0
    %327 = vmatprep.subr.mxu0 0.0
    %328 = vmatpush1.msra.mxu0 0.0
    %329 = vmatprep.subr.mxu0 0.0
    %330 = vmatpush1.msra.mxu0 0.0
    %331 = vmatprep.subr.mxu0 0.0
    %332 = vmatpush1.msra.mxu0 0.0
    %333 = vmatprep.subr.mxu0 0.0
    %334 = vmatpush1.msra.mxu0 0.0
    %335 = vmatprep.subr.mxu0 0.0
    %336 = vmatpush1.msra.mxu0 0.0
    %337 = vmatprep.subr.mxu0 0.0
    %338 = vmatpush1.msra.mxu0 0.0
    %339 = vmatprep.subr.mxu0 0.0
    %340 = vmatpush1.msra.mxu0 0.0
    %341 = vmatprep.subr.mxu0 0.0
    %342 = vmatpush1.msra.mxu0 0.0
    %343 = vmatprep.subr.mxu0 0.0
    %344 = vmatpush1.msra.mxu0 0.0
    %345 = vmatprep.subr.mxu0 0.0
    %346 = vmatpush1.msra.mxu0 0.0
    %347 = vmatprep.subr.mxu0 0.0
    %348 = vmatpush1.msra.mxu0 0.0
    %349 = vmatprep.subr.mxu0 0.0
    %350 = vmatpush1.msra.mxu0 0.0
    %351 = vmatprep.subr.mxu0 0.0
    %352 = vmatpush1.msra.mxu0 0.0
    %353 = vmatprep.subr.mxu0 0.0
    %354 = vmatpush1.msra.mxu0 0.0
    %355 = vmatprep.subr.mxu0 0.0
    %356 = vmatpush1.msra.mxu0 0.0
    %357 = vmatprep.subr.mxu0 0.0
    %358 = vmatpush1.msra.mxu0 0.0
    %359 = vmatprep.subr.mxu0 0.0
    %360 = vmatpush1.msra.mxu0 0.0
    %361 = vmatprep.subr.mxu0 0.0
    %362 = vmatpush1.msra.mxu0 0.0
    %363 = vmatprep.subr.mxu0 0.0
    %364 = vmatpush1.msra.mxu0 0.0
    %365 = vmatprep.subr.mxu0 0.0
    %366 = vmatpush1.msra.mxu0 0.0
    %367 = vmatprep.subr.mxu0 0.0
    %368 = vmatpush1.msra.mxu0 0.0
    %369 = vmatprep.subr.mxu0 0.0
    %370 = vmatpush1.msra.mxu0 0.0
    %371 = vmatprep.mubr.f32.mxu0 0.0
    %372 = vmatmul.mubr.f32.gmra.mrb[0].mxu0 %v116
    %v373 = vpop.f32.mrb[0].mxu0
    %v374 = vadd.f32 %v112, %v373
    %v375 = vpop.f32.mrb[0].mxu0
    %376 = vmatprep.mubr.f32.mxu0 0.0
    %377 = vmatmul.mubr.f32.gmra.mrb[0].mxu0 %v119
    %v378 = vpop.f32.mrb[0].mxu0
    %v379 = vadd.f32 %v112, %v378
    %v380 = vpop.f32.mrb[0].mxu0
    %381 = vmatprep.mubr.f32.mxu0 0.0
    %382 = vmatmul.mubr.f32.gmra.mrb[0].mxu0 %v122
    %v383 = vpop.f32.mrb[0].mxu0
    %v384 = vadd.f32 %v112, %v383
    %v385 = vpop.f32.mrb[0].mxu0
    %386 = vmatprep.mubr.f32.mxu0 0.0
    %387 = vmatmul.mubr.f32.gmra.mrb[0].mxu0 %v125
    %v388 = vpop.f32.mrb[0].mxu0
    %v389 = vadd.f32 %v112, %v388
    %v390 = vpop.f32.mrb[0].mxu0
    %391 = vmatprep.mubr.f32.mxu0 0.0
    %392 = vmatmul.mubr.f32.gmra.mrb[0].mxu0 %v128
    %v393 = vpop.f32.mrb[0].mxu0
    %v394 = vadd.f32 %v112, %v393
    %v395 = vpop.f32.mrb[0].mxu0
    %396 = vmatprep.mubr.f32.mxu0 0.0
    %397 = vmatmul.mubr.f32.gmra.mrb[0].mxu0 %v131
    %v398 = vpop.f32.mrb[0].mxu0
    %v399 = vadd.f32 %v112, %v398
    %v400 = vpop.f32.mrb[0].mxu0
    %401 = vmatprep.mubr.f32.mxu0 0.0
    %402 = vmatmul.mubr.f32.gmra.mrb[0].mxu0 %v134
    %v403 = vpop.f32.mrb[0].mxu0
    %v404 = vadd.f32 %v112, %v403
    %v405 = vpop.f32.mrb[0].mxu0
    %406 = vmatprep.mubr.f32.mxu0 0.0
    %407 = vmatmul.mubr.f32.gmra.mrb[0].mxu0 %v137
    %v408 = vpop.f32.mrb[0].mxu0
    %v409 = vadd.f32 %v112, %v408
    %v410 = vpop.f32.mrb[0].mxu0
    %411 = vmatprep.mubr.f32.mxu0 0.0
    %412 = vmatmul.mubr.f32.gmra.mrb[0].mxu0 %v140
    %v413 = vpop.f32.mrb[0].mxu0
    %v414 = vadd.f32 %v112, %v413
    %v415 = vpop.f32.mrb[0].mxu0
    %416 = vmatprep.mubr.f32.mxu0 0.0
    %417 = vmatmul.mubr.f32.gmra.mrb[0].mxu0 %v143
    %v418 = vpop.f32.mrb[0].mxu0
    %v419 = vadd.f32 %v112, %v418
    %v420 = vpop.f32.mrb[0].mxu0
    %421 = vmatprep.mubr.f32.mxu0 0.0
    %422 = vmatmul.mubr.f32.gmra.mrb[0].mxu0 %v146
    %v423 = vpop.f32.mrb[0].mxu0
    %v424 = vadd.f32 %v112, %v423
    %v425 = vpop.f32.mrb[0].mxu0
    %426 = vmatprep.mubr.f32.mxu0 0.0
    %427 = vmatmul.mubr.f32.gmra.mrb[0].mxu0 %v149
    %v428 = vpop.f32.mrb[0].mxu0
    %v429 = vadd.f32 %v112, %v428
    %v430 = vpop.f32.mrb[0].mxu0
    %431 = vmatprep.mubr.f32.mxu0 0.0
    %432 = vmatmul.mubr.f32.gmra.mrb[0].mxu0 %v152
    %v433 = vpop.f32.mrb[0].mxu0
    %v434 = vadd.f32 %v112, %v433
    %v435 = vpop.f32.mrb[0].mxu0
    %436 = vmatprep.mubr.f32.mxu0 0.0
    %437 = vmatmul.mubr.f32.gmra.mrb[0].mxu0 %v155
    %v438 = vpop.f32.mrb[0].mxu0
    %v439 = vadd.f32 %v112, %v438
    %v440 = vpop.f32.mrb[0].mxu0
    %441 = vmatprep.mubr.f32.mxu0 0.0
    %442 = vmatmul.mubr.f32.gmra.mrb[0].mxu0 %v158
    %v443 = vpop.f32.mrb[0].mxu0
    %v444 = vadd.f32 %v112, %v443
    %v445 = vpop.f32.mrb[0].mxu0
    %446 = vmatprep.mubr.f32.mxu0 0.0
    %447 = vmatmul.mubr.f32.gmra.mrb[0].mxu0 %v161
    %v448 = vpop.f32.mrb[0].mxu0
    %v449 = vadd.f32 %v112, %v448
    %v450 = vpop.f32.mrb[0].mxu0
    %451 = vmatprep.mubr.f32.mxu0 0.0
    %452 = vmatmul.mubr.f32.gmra.mrb[0].mxu0 %v164
    %v453 = vpop.f32.mrb[0].mxu0
    %v454 = vadd.f32 %v112, %v453
    %v455 = vpop.f32.mrb[0].mxu0
    %456 = vmatprep.mubr.f32.mxu0 0.0
    %457 = vmatmul.mubr.f32.gmra.mrb[0].mxu0 %v167
    %v458 = vpop.f32.mrb[0].mxu0
    %v459 = vadd.f32 %v112, %v458
    %v460 = vpop.f32.mrb[0].mxu0
    %461 = vmatprep.mubr.f32.mxu0 0.0
    %462 = vmatmul.mubr.f32.gmra.mrb[0].mxu0 %v170
    %v463 = vpop.f32.mrb[0].mxu0
    %v464 = vadd.f32 %v112, %v463
    %v465 = vpop.f32.mrb[0].mxu0
    %466 = vmatprep.mubr.f32.mxu0 0.0
    %467 = vmatmul.mubr.f32.gmra.mrb[0].mxu0 %v173
    %v468 = vpop.f32.mrb[0].mxu0
    %v469 = vadd.f32 %v112, %v468
    %v470 = vpop.f32.mrb[0].mxu0
    %471 = vmatprep.mubr.f32.mxu0 0.0
    %472 = vmatmul.mubr.f32.gmra.mrb[0].mxu0 %v176
    %v473 = vpop.f32.mrb[0].mxu0
    %v474 = vadd.f32 %v112, %v473
    %v475 = vpop.f32.mrb[0].mxu0
    %476 = vmatprep.mubr.f32.mxu0 0.0
    %477 = vmatmul.mubr.f32.gmra.mrb[0].mxu0 %v179
    %v478 = vpop.f32.mrb[0].mxu0
    %v479 = vadd.f32 %v112, %v478
    %v480 = vpop.f32.mrb[0].mxu0
    %481 = vmatprep.mubr.f32.mxu0 0.0
    %482 = vmatmul.mubr.f32.gmra.mrb[0].mxu0 %v182
    %v483 = vpop.f32.mrb[0].mxu0
    %v484 = vadd.f32 %v112, %v483
    %v485 = vpop.f32.mrb[0].mxu0
    %486 = vmatprep.mubr.f32.mxu0 0.0
    %487 = vmatmul.mubr.f32.gmra.mrb[0].mxu0 %v185
    %v488 = vpop.f32.mrb[0].mxu0
    %v489 = vadd.f32 %v112, %v488
    %v490 = vpop.f32.mrb[0].mxu0
    %491 = vmatprep.mubr.f32.mxu0 0.0
    %492 = vmatmul.mubr.f32.gmra.mrb[0].mxu0 %v188
    %v493 = vpop.f32.mrb[0].mxu0
    %v494 = vadd.f32 %v112, %v493
    %v495 = vpop.f32.mrb[0].mxu0
    %496 = vmatprep.mubr.f32.mxu0 0.0
    %497 = vmatmul.mubr.f32.gmra.mrb[0].mxu0 %v191
    %v498 = vpop.f32.mrb[0].mxu0
    %v499 = vadd.f32 %v112, %v498
    %v500 = vpop.f32.mrb[0].mxu0
    %501 = vmatprep.mubr.f32.mxu0 0.0
    %502 = vmatmul.mubr.f32.gmra.mrb[0].mxu0 %v194
    %v503 = vpop.f32.mrb[0].mxu0
    %v504 = vadd.f32 %v112, %v503
    %v505 = vpop.f32.mrb[0].mxu0
    %506 = vmatprep.mubr.f32.mxu0 0.0
    %507 = vmatmul.mubr.f32.gmra.mrb[0].mxu0 %v197
    %v508 = vpop.f32.mrb[0].mxu0
    %v509 = vadd.f32 %v112, %v508
    %v510 = vpop.f32.mrb[0].mxu0
    %511 = vmatprep.mubr.f32.mxu0 0.0
    %512 = vmatmul.mubr.f32.gmra.mrb[0].mxu0 %v200
    %v513 = vpop.f32.mrb[0].mxu0
    %v514 = vadd.f32 %v112, %v513
    %v515 = vpop.f32.mrb[0].mxu0
    %516 = vmatprep.mubr.f32.mxu0 0.0
    %517 = vmatmul.mubr.f32.gmra.mrb[0].mxu0 %v203
    %v518 = vpop.f32.mrb[0].mxu0
    %v519 = vadd.f32 %v112, %v518
    %v520 = vpop.f32.mrb[0].mxu0
    %521 = vmatprep.mubr.f32.mxu0 0.0
    %522 = vmatmul.mubr.f32.gmra.mrb[0].mxu0 %v206
    %v523 = vpop.f32.mrb[0].mxu0
    %v524 = vadd.f32 %v112, %v523
    %v525 = vpop.f32.mrb[0].mxu0
    %526 = vmatprep.mubr.f32.mxu0 0.0
    %527 = vmatmul.mubr.f32.gmra.mrb[0].mxu0 %v209
    %v528 = vpop.f32.mrb[0].mxu0
    %v529 = vadd.f32 %v112, %v528
    %v530 = vpop.f32.mrb[0].mxu0
    %531 = vmatprep.mubr.f32.mxu0 0.0
    %532 = vmatmul.mubr.f32.gmra.mrb[0].mxu0 %v212
    %v533 = vpop.f32.mrb[0].mxu0
    %v534 = vadd.f32 %v112, %v533
    %v535 = vpop.f32.mrb[0].mxu0
    %536 = vmatprep.mubr.f32.mxu0 0.0
    %537 = vmatmul.mubr.f32.gmra.mrb[0].mxu0 %v215
    %v538 = vpop.f32.mrb[0].mxu0
    %v539 = vadd.f32 %v112, %v538
    %v540 = vpop.f32.mrb[0].mxu0
    %541 = vmatprep.mubr.f32.mxu0 0.0
    %542 = vmatmul.mubr.f32.gmra.mrb[0].mxu0 %v218
    %v543 = vpop.f32.mrb[0].mxu0
    %v544 = vadd.f32 %v112, %v543
    %v545 = vpop.f32.mrb[0].mxu0
    %546 = vmatprep.mubr.f32.mxu0 0.0
    %547 = vmatmul.mubr.f32.gmra.mrb[0].mxu0 %v221
    %v548 = vpop.f32.mrb[0].mxu0
    %v549 = vadd.f32 %v112, %v548
    %v550 = vpop.f32.mrb[0].mxu0
    %551 = vmatprep.mubr.f32.mxu0 0.0
    %552 = vmatmul.mubr.f32.gmra.mrb[0].mxu0 %v224
    %v553 = vpop.f32.mrb[0].mxu0
    %v554 = vadd.f32 %v112, %v553
    %v555 = vpop.f32.mrb[0].mxu0
    %556 = vmatprep.mubr.f32.mxu0 0.0
    %557 = vmatmul.mubr.f32.gmra.mrb[0].mxu0 %v227
    %v558 = vpop.f32.mrb[0].mxu0
    %v559 = vadd.f32 %v112, %v558
    %v560 = vpop.f32.mrb[0].mxu0
    %561 = vmatprep.mubr.f32.mxu0 0.0
    %562 = vmatmul.mubr.f32.gmra.mrb[0].mxu0 %v230
    %v563 = vpop.f32.mrb[0].mxu0
    %v564 = vadd.f32 %v112, %v563
    %v565 = vpop.f32.mrb[0].mxu0
    %566 = vmatprep.mubr.f32.mxu0 0.0
    %567 = vmatmul.mubr.f32.gmra.mrb[0].mxu0 %v233
    %v568 = vpop.f32.mrb[0].mxu0
    %v569 = vadd.f32 %v112, %v568
    %v570 = vpop.f32.mrb[0].mxu0
    %571 = vmatprep.mubr.f32.mxu0 0.0
    %572 = vmatmul.mubr.f32.gmra.mrb[0].mxu0 %v236
    %v573 = vpop.f32.mrb[0].mxu0
    %v574 = vadd.f32 %v112, %v573
    %v575 = vpop.f32.mrb[0].mxu0
    %576 = vmatprep.mubr.f32.mxu0 0.0
    %577 = vmatmul.mubr.f32.gmra.mrb[0].mxu0 %v239
    %v578 = vpop.f32.mrb[0].mxu0
    %v579 = vadd.f32 %v112, %v578
    %v580 = vpop.f32.mrb[0].mxu0
    %581 = vmatprep.mubr.f32.mxu0 0.0
    %582 = vmatmul.mubr.f32.gmra.mrb[0].mxu0 %v242
    %v583 = vpop.f32.mrb[0].mxu0
    %v584 = vadd.f32 %v112, %v583
    %v585 = vpop.f32.mrb[0].mxu0
    %586 = vmatprep.mubr.f32.mxu0 0.0
    %587 = vmatmul.mubr.f32.gmra.mrb[0].mxu0 %v245
    %v588 = vpop.f32.mrb[0].mxu0
    %v589 = vadd.f32 %v112, %v588
    %v590 = vpop.f32.mrb[0].mxu0
    %591 = vmatprep.mubr.f32.mxu0 0.0
    %592 = vmatmul.mubr.f32.gmra.mrb[0].mxu0 %v248
    %v593 = vpop.f32.mrb[0].mxu0
    %v594 = vadd.f32 %v112, %v593
    %v595 = vpop.f32.mrb[0].mxu0
    %596 = vmatprep.mubr.f32.mxu0 0.0
    %597 = vmatmul.mubr.f32.gmra.mrb[0].mxu0 %v251
    %v598 = vpop.f32.mrb[0].mxu0
    %v599 = vadd.f32 %v112, %v598
    %v600 = vpop.f32.mrb[0].mxu0
    %601 = vmatprep.mubr.f32.mxu0 0.0
    %602 = vmatmul.mubr.f32.gmra.mrb[0].mxu0 %v254
    %v603 = vpop.f32.mrb[0].mxu0
    %v604 = vadd.f32 %v112, %v603
    %v605 = vpop.f32.mrb[0].mxu0
    %606 = vmatprep.mubr.f32.mxu0 0.0
    %607 = vmatmul.mubr.f32.gmra.mrb[0].mxu0 %v257
    %v608 = vpop.f32.mrb[0].mxu0
    %v609 = vadd.f32 %v112, %v608
    %v610 = vpop.f32.mrb[0].mxu0
    %611 = vmatprep.mubr.f32.mxu0 0.0
    %612 = vmatmul.mubr.f32.gmra.mrb[0].mxu0 %v260
    %v613 = vpop.f32.mrb[0].mxu0
    %v614 = vadd.f32 %v112, %v613
    %v615 = vpop.f32.mrb[0].mxu0
    %616 = vmatprep.mubr.f32.mxu0 0.0
    %617 = vmatmul.mubr.f32.gmra.mrb[0].mxu0 %v263
    %v618 = vpop.f32.mrb[0].mxu0
    %v619 = vadd.f32 %v112, %v618
    %v620 = vpop.f32.mrb[0].mxu0
    %621 = vmatprep.mubr.f32.mxu0 0.0
    %622 = vmatmul.mubr.f32.gmra.mrb[0].mxu0 %v266
    %v623 = vpop.f32.mrb[0].mxu0
    %v624 = vadd.f32 %v112, %v623
    %v625 = vpop.f32.mrb[0].mxu0
    %626 = vmatprep.mubr.f32.mxu0 0.0
    %627 = vmatmul.mubr.f32.gmra.mrb[0].mxu0 %v269
    %v628 = vpop.f32.mrb[0].mxu0
    %v629 = vadd.f32 %v112, %v628
    %v630 = vpop.f32.mrb[0].mxu0
    %631 = vmatprep.mubr.f32.mxu0 0.0
    %632 = vmatmul.mubr.f32.gmra.mrb[0].mxu0 %v272
    %v633 = vpop.f32.mrb[0].mxu0
    %v634 = vadd.f32 %v112, %v633
    %v635 = vpop.f32.mrb[0].mxu0
    %636 = vmatprep.mubr.f32.mxu0 0.0
    %637 = vmatmul.mubr.f32.gmra.mrb[0].mxu0 %v275
    %v638 = vpop.f32.mrb[0].mxu0
    %v639 = vadd.f32 %v112, %v638
    %v640 = vpop.f32.mrb[0].mxu0
    %641 = vmatprep.mubr.f32.mxu0 0.0
    %642 = vmatmul.mubr.f32.gmra.mrb[0].mxu0 %v278
    %v643 = vpop.f32.mrb[0].mxu0
    %v644 = vadd.f32 %v112, %v643
    %v645 = vpop.f32.mrb[0].mxu0
    %646 = vmatprep.mubr.f32.mxu0 0.0
    %647 = vmatmul.mubr.f32.gmra.mrb[0].mxu0 %v281
    %v648 = vpop.f32.mrb[0].mxu0
    %v649 = vadd.f32 %v112, %v648
    %v650 = vpop.f32.mrb[0].mxu0
    %651 = vmatprep.mubr.f32.mxu0 0.0
    %652 = vmatmul.mubr.f32.gmra.mrb[0].mxu0 %v284
    %v653 = vpop.f32.mrb[0].mxu0
    %v654 = vadd.f32 %v112, %v653
    %v655 = vpop.f32.mrb[0].mxu0
    %656 = vmatprep.mubr.f32.mxu0 0.0
    %657 = vmatmul.mubr.f32.gmra.mrb[0].mxu0 %v287
    %v658 = vpop.f32.mrb[0].mxu0
    %v659 = vadd.f32 %v112, %v658
    %v660 = vpop.f32.mrb[0].mxu0
    %661 = vmatprep.mubr.f32.mxu0 0.0
    %662 = vmatmul.mubr.f32.gmra.mrb[0].mxu0 %v290
    %v663 = vpop.f32.mrb[0].mxu0
    %v664 = vadd.f32 %v112, %v663
    %v665 = vpop.f32.mrb[0].mxu0
    %666 = vmatprep.mubr.f32.mxu0 0.0
    %667 = vmatmul.mubr.f32.gmra.mrb[0].mxu0 %v293
    %v668 = vpop.f32.mrb[0].mxu0
    %v669 = vadd.f32 %v112, %v668
    %v670 = vpop.f32.mrb[0].mxu0
    %671 = vmatprep.mubr.f32.mxu0 0.0
    %672 = vmatmul.mubr.f32.gmra.mrb[0].mxu0 %v296
    %v673 = vpop.f32.mrb[0].mxu0
    %v674 = vadd.f32 %v112, %v673
    %v675 = vpop.f32.mrb[0].mxu0
    %676 = vmatprep.mubr.f32.mxu0 0.0
    %677 = vmatmul.mubr.f32.gmra.mrb[0].mxu0 %v299
    %v678 = vpop.f32.mrb[0].mxu0
    %v679 = vadd.f32 %v112, %v678
    %v680 = vpop.f32.mrb[0].mxu0
    %681 = vmatprep.mubr.f32.mxu0 0.0
    %682 = vmatmul.mubr.f32.gmra.mrb[0].mxu0 %v302
    %v683 = vpop.f32.mrb[0].mxu0
    %v684 = vadd.f32 %v112, %v683
    %v685 = vpop.f32.mrb[0].mxu0
    %686 = vmatprep.mubr.f32.mxu0 0.0
    %687 = vmatmul.mubr.f32.gmra.mrb[0].mxu0 %v305
    %v688 = vpop.f32.mrb[0].mxu0
    %v689 = vadd.f32 %v112, %v688
    %v690 = vpop.f32.mrb[0].mxu0
    %691 = vdwg.mxu0
    %v692 = vmax.f32 %v374, 0.0
    %v693 = vmax.f32 %v379, 0.0
    %v694 = vmax.f32 %v384, 0.0
    %v695 = vmax.f32 %v389, 0.0
    %v696 = vmax.f32 %v394, 0.0
    %v697 = vmax.f32 %v399, 0.0
    %v698 = vmax.f32 %v404, 0.0
    %v699 = vmax.f32 %v409, 0.0
    %v700 = vmax.f32 %v414, 0.0
    %v701 = vmax.f32 %v419, 0.0
    %v702 = vmax.f32 %v424, 0.0
    %v703 = vmax.f32 %v429, 0.0
    %v704 = vmax.f32 %v434, 0.0
    %v705 = vmax.f32 %v439, 0.0
    %v706 = vmax.f32 %v444, 0.0
    %v707 = vmax.f32 %v449, 0.0
    %v708 = vmax.f32 %v454, 0.0
    %v709 = vmax.f32 %v459, 0.0
    %v710 = vmax.f32 %v464, 0.0
    %v711 = vmax.f32 %v469, 0.0
    %v712 = vmax.f32 %v474, 0.0
    %v713 = vmax.f32 %v479, 0.0
    %v714 = vmax.f32 %v484, 0.0
    %v715 = vmax.f32 %v489, 0.0
    %v716 = vmax.f32 %v494, 0.0
    %v717 = vmax.f32 %v499, 0.0
    %v718 = vmax.f32 %v504, 0.0
    %v719 = vmax.f32 %v509, 0.0
    %v720 = vmax.f32 %v514, 0.0
    %v721 = vmax.f32 %v519, 0.0
    %v722 = vmax.f32 %v524, 0.0
    %v723 = vmax.f32 %v529, 0.0
    %v724 = vmax.f32 %v534, 0.0
    %v725 = vmax.f32 %v539, 0.0
    %v726 = vmax.f32 %v544, 0.0
    %v727 = vmax.f32 %v549, 0.0
    %v728 = vmax.f32 %v554, 0.0
    %v729 = vmax.f32 %v559, 0.0
    %v730 = vmax.f32 %v564, 0.0
    %v731 = vmax.f32 %v569, 0.0
    %v732 = vmax.f32 %v574, 0.0
    %v733 = vmax.f32 %v579, 0.0
    %v734 = vmax.f32 %v584, 0.0
    %v735 = vmax.f32 %v589, 0.0
    %v736 = vmax.f32 %v594, 0.0
    %v737 = vmax.f32 %v599, 0.0
    %v738 = vmax.f32 %v604, 0.0
    %v739 = vmax.f32 %v609, 0.0
    %v740 = vmax.f32 %v614, 0.0
    %v741 = vmax.f32 %v619, 0.0
    %v742 = vmax.f32 %v624, 0.0
    %v743 = vmax.f32 %v629, 0.0
    %v744 = vmax.f32 %v634, 0.0
    %v745 = vmax.f32 %v639, 0.0
    %v746 = vmax.f32 %v644, 0.0
    %v747 = vmax.f32 %v649, 0.0
    %v748 = vmax.f32 %v654, 0.0
    %v749 = vmax.f32 %v659, 0.0
    %v750 = vmax.f32 %v664, 0.0
    %v751 = vmax.f32 %v669, 0.0
    %v752 = vmax.f32 %v674, 0.0
    %v753 = vmax.f32 %v679, 0.0
    %v754 = vmax.f32 %v684, 0.0
    %v755 = vmax.f32 %v689, 0.0
    %v756 = vld [vmem:[%s3] sm:$0xff]
    %v757 = vld [vmem:[%s3 + $0x8] sm:$0x1]
    %v758 = vld [vmem:[%s4] sm:$0x1]
    %v759 = vld [vmem:[%s5] sm:$0xf]
    %v760 = vld [vmem:[%s6] sm:$0x1]
    %vm761 = vcmask 31744
    %762 = vst.msk [vmem:[#allocation2] sm:$0xff] %vm761, 0.0
    %763 = vst.msk [vmem:[#allocation2 + $0x8] sm:$0xff] %vm761, 0.0
    %vm764 = vcmask 25600
    %765 = vst.msk [vmem:[#allocation2 + $0x10] sm:$0x3] %vm764, 0.0
    %s766 = scalar_lea.vmem [#allocation2], 408
    %767 = vst.msk [vmem:[%s766] sm:$0xff] %vm761, 0.0
    %768 = vst.msk [vmem:[%s766 + $0x8] sm:$0xff] %vm761, 0.0
    %769 = vst.msk [vmem:[%s766 + $0x10] sm:$0x3] %vm764, 0.0
    %s770 = scalar_lea.vmem [#allocation2], 24
    %vm771 = vcmask 24576
    %772 = vst.msk [vmem:[%s770] sm:$0x1] %vm771, 0.0
    %773 = vst.msk [vmem:[%s770 + $0x18] sm:$0x1] %vm771, 0.0
    %774 = vst.msk [vmem:[%s770 + $0x30] sm:$0x1] %vm771, 0.0
    %775 = vst.msk [vmem:[%s770 + $0x48] sm:$0x1] %vm771, 0.0
    %776 = vst.msk [vmem:[%s770 + $0x60] sm:$0x1] %vm771, 0.0
    %777 = vst.msk [vmem:[%s770 + $0x78] sm:$0x1] %vm771, 0.0
    %778 = vst.msk [vmem:[%s770 + $0x90] sm:$0x1] %vm771, 0.0
    %779 = vst.msk [vmem:[%s770 + $0xa8] sm:$0x1] %vm771, 0.0
    %780 = vst.msk [vmem:[%s770 + $0xc0] sm:$0x1] %vm771, 0.0
    %781 = vst.msk [vmem:[%s770 + $0xd8] sm:$0x1] %vm771, 0.0
    %782 = vst.msk [vmem:[%s770 + $0xf0] sm:$0x1] %vm771, 0.0
    %783 = vst.msk [vmem:[%s770 + $0x108] sm:$0x1] %vm771, 0.0
    %784 = vst.msk [vmem:[%s770 + $0x120] sm:$0x1] %vm771, 0.0
    %785 = vst.msk [vmem:[%s770 + $0x138] sm:$0x1] %vm771, 0.0
    %786 = vst.msk [vmem:[%s770 + $0x150] sm:$0x1] %vm771, 0.0
    %787 = vst.msk [vmem:[%s770 + $0x168] sm:$0x1] %vm771, 0.0
    %788 = vst.msk [vmem:[%s770 + $0x11] sm:$0x1] %vm771, 0.0
    %789 = vst.msk [vmem:[%s770 + $0x29] sm:$0x1] %vm771, 0.0
    %790 = vst.msk [vmem:[%s770 + $0x41] sm:$0x1] %vm771, 0.0
    %791 = vst.msk [vmem:[%s770 + $0x59] sm:$0x1] %vm771, 0.0
    %792 = vst.msk [vmem:[%s770 + $0x71] sm:$0x1] %vm771, 0.0
    %793 = vst.msk [vmem:[%s770 + $0x89] sm:$0x1] %vm771, 0.0
    %794 = vst.msk [vmem:[%s770 + $0xa1] sm:$0x1] %vm771, 0.0
    %795 = vst.msk [vmem:[%s770 + $0xb9] sm:$0x1] %vm771, 0.0
    %796 = vst.msk [vmem:[%s770 + $0xd1] sm:$0x1] %vm771, 0.0
    %797 = vst.msk [vmem:[%s770 + $0xe9] sm:$0x1] %vm771, 0.0
    %798 = vst.msk [vmem:[%s770 + $0x101] sm:$0x1] %vm771, 0.0
    %799 = vst.msk [vmem:[%s770 + $0x119] sm:$0x1] %vm771, 0.0
    %800 = vst.msk [vmem:[%s770 + $0x131] sm:$0x1] %vm771, 0.0
    %801 = vst.msk [vmem:[%s770 + $0x149] sm:$0x1] %vm771, 0.0
    %802 = vst.msk [vmem:[%s770 + $0x161] sm:$0x1] %vm771, 0.0
    %803 = vst.msk [vmem:[%s770 + $0x179] sm:$0x1] %vm771, 0.0
    %804 = vst.msk [vmem:[%s770 + $0x1] sm:$0xff] %vm761, %v692
    %805 = vst.msk [vmem:[%s770 + $0x9] sm:$0xff] %vm761, %v693
    %806 = vst.msk [vmem:[%s770 + $0x19] sm:$0xff] %vm761, %v694
    %807 = vst.msk [vmem:[%s770 + $0x21] sm:$0xff] %vm761, %v695
    %808 = vst.msk [vmem:[%s770 + $0x31] sm:$0xff] %vm761, %v696
    %809 = vst.msk [vmem:[%s770 + $0x39] sm:$0xff] %vm761, %v697
    %810 = vst.msk [vmem:[%s770 + $0x49] sm:$0xff] %vm761, %v698
    %811 = vst.msk [vmem:[%s770 + $0x51] sm:$0xff] %vm761, %v699
    %812 = vst.msk [vmem:[%s770 + $0x61] sm:$0xff] %vm761, %v700
    %813 = vst.msk [vmem:[%s770 + $0x69] sm:$0xff] %vm761, %v701
    %814 = vst.msk [vmem:[%s770 + $0x79] sm:$0xff] %vm761, %v702
    %815 = vst.msk [vmem:[%s770 + $0x81] sm:$0xff] %vm761, %v703
    %816 = vst.msk [vmem:[%s770 + $0x91] sm:$0xff] %vm761, %v704
    %817 = vst.msk [vmem:[%s770 + $0x99] sm:$0xff] %vm761, %v705
    %818 = vst.msk [vmem:[%s770 + $0xa9] sm:$0xff] %vm761, %v706
    %819 = vst.msk [vmem:[%s770 + $0xb1] sm:$0xff] %vm761, %v707
    %820 = vst.msk [vmem:[%s770 + $0xc1] sm:$0xff] %vm761, %v708
    %821 = vst.msk [vmem:[%s770 + $0xc9] sm:$0xff] %vm761, %v709
    %822 = vst.msk [vmem:[%s770 + $0xd9] sm:$0xff] %vm761, %v710
    %823 = vst.msk [vmem:[%s770 + $0xe1] sm:$0xff] %vm761, %v711
    %824 = vst.msk [vmem:[%s770 + $0xf1] sm:$0xff] %vm761, %v712
    %825 = vst.msk [vmem:[%s770 + $0xf9] sm:$0xff] %vm761, %v713
    %826 = vst.msk [vmem:[%s770 + $0x109] sm:$0xff] %vm761, %v714
    %827 = vst.msk [vmem:[%s770 + $0x111] sm:$0xff] %vm761, %v715
    %828 = vst.msk [vmem:[%s770 + $0x121] sm:$0xff] %vm761, %v716
    %829 = vst.msk [vmem:[%s770 + $0x129] sm:$0xff] %vm761, %v717
    %830 = vst.msk [vmem:[%s770 + $0x139] sm:$0xff] %vm761, %v718
    %831 = vst.msk [vmem:[%s770 + $0x141] sm:$0xff] %vm761, %v719
    %832 = vst.msk [vmem:[%s770 + $0x151] sm:$0xff] %vm761, %v720
    %833 = vst.msk [vmem:[%s770 + $0x159] sm:$0xff] %vm761, %v721
    %834 = vst.msk [vmem:[%s770 + $0x169] sm:$0xff] %vm761, %v722
    %835 = vst.msk [vmem:[%s770 + $0x171] sm:$0xff] %vm761, %v723
    %v836 = vld [vmem:[#allocation2] sm:$0xff]
    %v837 = vld [vmem:[#allocation2 + $0x8] sm:$0xff]
    %v838 = vld [vmem:[#allocation2 + $0x18] sm:$0xff]
    %v839 = vld [vmem:[#allocation2 + $0x20] sm:$0xff]
    %v840 = vld [vmem:[#allocation2 + $0x30] sm:$0xff]
    %v841 = vld [vmem:[#allocation2 + $0x38] sm:$0xff]
    %v842 = vld [vmem:[#allocation2 + $0x48] sm:$0xff]
    %v843 = vld [vmem:[#allocation2 + $0x50] sm:$0xff]
    %v844 = vld [vmem:[#allocation2 + $0x60] sm:$0xff]
    %v845 = vld [vmem:[#allocation2 + $0x68] sm:$0xff]
    %v846 = vld [vmem:[#allocation2 + $0x78] sm:$0xff]
    %v847 = vld [vmem:[#allocation2 + $0x80] sm:$0xff]
    %v848 = vld [vmem:[#allocation2 + $0x90] sm:$0xff]
    %v849 = vld [vmem:[#allocation2 + $0x98] sm:$0xff]
    %v850 = vld [vmem:[#allocation2 + $0xa8] sm:$0xff]
    %v851 = vld [vmem:[#allocation2 + $0xb0] sm:$0xff]
    %v852 = vld [vmem:[#allocation2 + $0xc0] sm:$0xff]
    %v853 = vld [vmem:[#allocation2 + $0xc8] sm:$0xff]
    %v854 = vld [vmem:[#allocation2 + $0xd8] sm:$0xff]
    %v855 = vld [vmem:[#allocation2 + $0xe0] sm:$0xff]
    %v856 = vld [vmem:[#allocation2 + $0xf0] sm:$0xff]
    %v857 = vld [vmem:[#allocation2 + $0xf8] sm:$0xff]
    %v858 = vld [vmem:[#allocation2 + $0x108] sm:$0xff]
    %v859 = vld [vmem:[#allocation2 + $0x110] sm:$0xff]
    %v860 = vld [vmem:[#allocation2 + $0x120] sm:$0xff]
    %v861 = vld [vmem:[#allocation2 + $0x128] sm:$0xff]
    %v862 = vld [vmem:[#allocation2 + $0x138] sm:$0xff]
    %v863 = vld [vmem:[#allocation2 + $0x140] sm:$0xff]
    %v864 = vld [vmem:[#allocation2 + $0x150] sm:$0xff]
    %v865 = vld [vmem:[#allocation2 + $0x158] sm:$0xff]
    %v866 = vld [vmem:[#allocation2 + $0x168] sm:$0xff]
    %v867 = vld [vmem:[#allocation2 + $0x170] sm:$0xff]
    %v868 = vlaneseq
    %v869 = vshrl.u32 %v868, 7
    %v870 = vsub.s32 0, %v869
    %v871 = vrot.slane %v756, %v870
    %v872 = vmul.f32 %v836, %v871
    %v873 = vmul.f32 %v837, %v871
    %v874 = vmul.f32 %v838, %v871
    %v875 = vmul.f32 %v839, %v871
    %v876 = vmul.f32 %v840, %v871
    %v877 = vmul.f32 %v841, %v871
    %v878 = vmul.f32 %v842, %v871
    %v879 = vmul.f32 %v843, %v871
    %v880 = vmul.f32 %v844, %v871
    %v881 = vmul.f32 %v845, %v871
    %v882 = vmul.f32 %v846, %v871
    %v883 = vmul.f32 %v847, %v871
    %v884 = vmul.f32 %v848, %v871
    %v885 = vmul.f32 %v849, %v871
    %v886 = vmul.f32 %v850, %v871
    %v887 = vmul.f32 %v851, %v871
    %v888 = vmul.f32 %v852, %v871
    %v889 = vmul.f32 %v853, %v871
    %v890 = vmul.f32 %v854, %v871
    %v891 = vmul.f32 %v855, %v871
    %v892 = vmul.f32 %v856, %v871
    %v893 = vmul.f32 %v857, %v871
    %v894 = vmul.f32 %v858, %v871
    %v895 = vmul.f32 %v859, %v871
    %v896 = vmul.f32 %v860, %v871
    %v897 = vmul.f32 %v861, %v871
    %v898 = vmul.f32 %v862, %v871
    %v899 = vmul.f32 %v863, %v871
    %v900 = vmul.f32 %v864, %v871
    %v901 = vmul.f32 %v865, %v871
    %v902 = vmul.f32 %v866, %v871
    %v903 = vmul.f32 %v867, %v871
    %v904 = vadd.f32 %v872, 0.0
    %v905 = vadd.f32 %v873, 0.0
    %v906 = vadd.f32 %v874, 0.0
    %v907 = vadd.f32 %v875, 0.0
    %v908 = vadd.f32 %v876, 0.0
    %v909 = vadd.f32 %v877, 0.0
    %v910 = vadd.f32 %v878, 0.0
    %v911 = vadd.f32 %v879, 0.0
    %v912 = vadd.f32 %v880, 0.0
    %v913 = vadd.f32 %v881, 0.0
    %v914 = vadd.f32 %v882, 0.0
    %v915 = vadd.f32 %v883, 0.0
    %v916 = vadd.f32 %v884, 0.0
    %v917 = vadd.f32 %v885, 0.0
    %v918 = vadd.f32 %v886, 0.0
    %v919 = vadd.f32 %v887, 0.0
    %v920 = vadd.f32 %v888, 0.0
    %v921 = vadd.f32 %v889, 0.0
    %v922 = vadd.f32 %v890, 0.0
    %v923 = vadd.f32 %v891, 0.0
    %v924 = vadd.f32 %v892, 0.0
    %v925 = vadd.f32 %v893, 0.0
    %v926 = vadd.f32 %v894, 0.0
    %v927 = vadd.f32 %v895, 0.0
    %v928 = vadd.f32 %v896, 0.0
    %v929 = vadd.f32 %v897, 0.0
    %v930 = vadd.f32 %v898, 0.0
    %v931 = vadd.f32 %v899, 0.0
    %v932 = vadd.f32 %v900, 0.0
    %v933 = vadd.f32 %v901, 0.0
    %v934 = vadd.f32 %v902, 0.0
    %v935 = vadd.f32 %v903, 0.0
    %v936 = vld [vmem:[#allocation2 + $0x1] sm:$0xff]
    %v937 = vld [vmem:[#allocation2 + $0x9] sm:$0xff]
    %v938 = vld [vmem:[#allocation2 + $0x19] sm:$0xff]
    %v939 = vld [vmem:[#allocation2 + $0x21] sm:$0xff]
    %v940 = vld [vmem:[#allocation2 + $0x31] sm:$0xff]
    %v941 = vld [vmem:[#allocation2 + $0x39] sm:$0xff]
    %v942 = vld [vmem:[#allocation2 + $0x49] sm:$0xff]
    %v943 = vld [vmem:[#allocation2 + $0x51] sm:$0xff]
    %v944 = vld [vmem:[#allocation2 + $0x61] sm:$0xff]
    %v945 = vld [vmem:[#allocation2 + $0x69] sm:$0xff]
    %v946 = vld [vmem:[#allocation2 + $0x79] sm:$0xff]
    %v947 = vld [vmem:[#allocation2 + $0x81] sm:$0xff]
    %v948 = vld [vmem:[#allocation2 + $0x91] sm:$0xff]
    %v949 = vld [vmem:[#allocation2 + $0x99] sm:$0xff]
    %v950 = vld [vmem:[#allocation2 + $0xa9] sm:$0xff]
    %v951 = vld [vmem:[#allocation2 + $0xb1] sm:$0xff]
    %v952 = vld [vmem:[#allocation2 + $0xc1] sm:$0xff]
    %v953 = vld [vmem:[#allocation2 + $0xc9] sm:$0xff]
    %v954 = vld [vmem:[#allocation2 + $0xd9] sm:$0xff]
    %v955 = vld [vmem:[#allocation2 + $0xe1] sm:$0xff]
    %v956 = vld [vmem:[#allocation2 + $0xf1] sm:$0xff]
    %v957 = vld [vmem:[#allocation2 + $0xf9] sm:$0xff]
    %v958 = vld [vmem:[#allocation2 + $0x109] sm:$0xff]
    %v959 = vld [vmem:[#allocation2 + $0x111] sm:$0xff]
    %v960 = vld [vmem:[#allocation2 + $0x121] sm:$0xff]
    %v961 = vld [vmem:[#allocation2 + $0x129] sm:$0xff]
    %v962 = vld [vmem:[#allocation2 + $0x139] sm:$0xff]
    %v963 = vld [vmem:[#allocation2 + $0x141] sm:$0xff]
    %v964 = vld [vmem:[#allocation2 + $0x151] sm:$0xff]
    %v965 = vld [vmem:[#allocation2 + $0x159] sm:$0xff]
    %v966 = vld [vmem:[#allocation2 + $0x169] sm:$0xff]
    %v967 = vld [vmem:[#allocation2 + $0x171] sm:$0xff]
    %v968 = vlaneseq
    %v969 = vshrl.u32 %v968, 7
    %v970 = vsub.s32 1, %v969
    %v971 = vrot.slane %v756, %v970
    %v972 = vmul.f32 %v936, %v971
    %v973 = vmul.f32 %v937, %v971
    %v974 = vmul.f32 %v938, %v971
    %v975 = vmul.f32 %v939, %v971
    %v976 = vmul.f32 %v940, %v971
    %v977 = vmul.f32 %v941, %v971
    %v978 = vmul.f32 %v942, %v971
    %v979 = vmul.f32 %v943, %v971
    %v980 = vmul.f32 %v944, %v971
    %v981 = vmul.f32 %v945, %v971
    %v982 = vmul.f32 %v946, %v971
    %v983 = vmul.f32 %v947, %v971
    %v984 = vmul.f32 %v948, %v971
    %v985 = vmul.f32 %v949, %v971
    %v986 = vmul.f32 %v950, %v971
    %v987 = vmul.f32 %v951, %v971
    %v988 = vmul.f32 %v952, %v971
    %v989 = vmul.f32 %v953, %v971
    %v990 = vmul.f32 %v954, %v971
    %v991 = vmul.f32 %v955, %v971
    %v992 = vmul.f32 %v956, %v971
    %v993 = vmul.f32 %v957, %v971
    %v994 = vmul.f32 %v958, %v971
    %v995 = vmul.f32 %v959, %v971
    %v996 = vmul.f32 %v960, %v971
    %v997 = vmul.f32 %v961, %v971
    %v998 = vmul.f32 %v962, %v971
    %v999 = vmul.f32 %v963, %v971
    %v1000 = vmul.f32 %v964, %v971
    %v1001 = vmul.f32 %v965, %v971
    %v1002 = vmul.f32 %v966, %v971
    %v1003 = vmul.f32 %v967, %v971
    %v1004 = vadd.f32 %v904, %v972
    %v1005 = vadd.f32 %v905, %v973
    %v1006 = vadd.f32 %v906, %v974
    %v1007 = vadd.f32 %v907, %v975
    %v1008 = vadd.f32 %v908, %v976
    %v1009 = vadd.f32 %v909, %v977
    %v1010 = vadd.f32 %v910, %v978
    %v1011 = vadd.f32 %v911, %v979
    %v1012 = vadd.f32 %v912, %v980
    %v1013 = vadd.f32 %v913, %v981
    %v1014 = vadd.f32 %v914, %v982
    %v1015 = vadd.f32 %v915, %v983
    %v1016 = vadd.f32 %v916, %v984
    %v1017 = vadd.f32 %v917, %v985
    %v1018 = vadd.f32 %v918, %v986
    %v1019 = vadd.f32 %v919, %v987
    %v1020 = vadd.f32 %v920, %v988
    %v1021 = vadd.f32 %v921, %v989
    %v1022 = vadd.f32 %v922, %v990
    %v1023 = vadd.f32 %v923, %v991
    %v1024 = vadd.f32 %v924, %v992
    %v1025 = vadd.f32 %v925, %v993
    %v1026 = vadd.f32 %v926, %v994
    %v1027 = vadd.f32 %v927, %v995
    %v1028 = vadd.f32 %v928, %v996
    %v1029 = vadd.f32 %v929, %v997
    %v1030 = vadd.f32 %v930, %v998
    %v1031 = vadd.f32 %v931, %v999
    %v1032 = vadd.f32 %v932, %v1000
    %v1033 = vadd.f32 %v933, %v1001
    %v1034 = vadd.f32 %v934, %v1002
    %v1035 = vadd.f32 %v935, %v1003
    %v1036 = vld [vmem:[#allocation2 + $0x2] sm:$0xff]
    %v1037 = vld [vmem:[#allocation2 + $0xa] sm:$0xff]
    %v1038 = vld [vmem:[#allocation2 + $0x1a] sm:$0xff]
    %v1039 = vld [vmem:[#allocation2 + $0x22] sm:$0xff]
    %v1040 = vld [vmem:[#allocation2 + $0x32] sm:$0xff]
    %v1041 = vld [vmem:[#allocation2 + $0x3a] sm:$0xff]
    %v1042 = vld [vmem:[#allocation2 + $0x4a] sm:$0xff]
    %v1043 = vld [vmem:[#allocation2 + $0x52] sm:$0xff]
    %v1044 = vld [vmem:[#allocation2 + $0x62] sm:$0xff]
    %v1045 = vld [vmem:[#allocation2 + $0x6a] sm:$0xff]
    %v1046 = vld [vmem:[#allocation2 + $0x7a] sm:$0xff]
    %v1047 = vld [vmem:[#allocation2 + $0x82] sm:$0xff]
    %v1048 = vld [vmem:[#allocation2 + $0x92] sm:$0xff]
    %v1049 = vld [vmem:[#allocation2 + $0x9a] sm:$0xff]
    %v1050 = vld [vmem:[#allocation2 + $0xaa] sm:$0xff]
    %v1051 = vld [vmem:[#allocation2 + $0xb2] sm:$0xff]
    %v1052 = vld [vmem:[#allocation2 + $0xc2] sm:$0xff]
    %v1053 = vld [vmem:[#allocation2 + $0xca] sm:$0xff]
    %v1054 = vld [vmem:[#allocation2 + $0xda] sm:$0xff]
    %v1055 = vld [vmem:[#allocation2 + $0xe2] sm:$0xff]
    %v1056 = vld [vmem:[#allocation2 + $0xf2] sm:$0xff]
    %v1057 = vld [vmem:[#allocation2 + $0xfa] sm:$0xff]
    %v1058 = vld [vmem:[#allocation2 + $0x10a] sm:$0xff]
    %v1059 = vld [vmem:[#allocation2 + $0x112] sm:$0xff]
    %v1060 = vld [vmem:[#allocation2 + $0x122] sm:$0xff]
    %v1061 = vld [vmem:[#allocation2 + $0x12a] sm:$0xff]
    %v1062 = vld [vmem:[#allocation2 + $0x13a] sm:$0xff]
    %v1063 = vld [vmem:[#allocation2 + $0x142] sm:$0xff]
    %v1064 = vld [vmem:[#allocation2 + $0x152] sm:$0xff]
    %v1065 = vld [vmem:[#allocation2 + $0x15a] sm:$0xff]
    %v1066 = vld [vmem:[#allocation2 + $0x16a] sm:$0xff]
    %v1067 = vld [vmem:[#allocation2 + $0x172] sm:$0xff]
    %v1068 = vlaneseq
    %v1069 = vshrl.u32 %v1068, 7
    %v1070 = vsub.s32 2, %v1069
    %v1071 = vrot.slane %v756, %v1070
    %v1072 = vmul.f32 %v1036, %v1071
    %v1073 = vmul.f32 %v1037, %v1071
    %v1074 = vmul.f32 %v1038, %v1071
    %v1075 = vmul.f32 %v1039, %v1071
    %v1076 = vmul.f32 %v1040, %v1071
    %v1077 = vmul.f32 %v1041, %v1071
    %v1078 = vmul.f32 %v1042, %v1071
    %v1079 = vmul.f32 %v1043, %v1071
    %v1080 = vmul.f32 %v1044, %v1071
    %v1081 = vmul.f32 %v1045, %v1071
    %v1082 = vmul.f32 %v1046, %v1071
    %v1083 = vmul.f32 %v1047, %v1071
    %v1084 = vmul.f32 %v1048, %v1071
    %v1085 = vmul.f32 %v1049, %v1071
    %v1086 = vmul.f32 %v1050, %v1071
    %v1087 = vmul.f32 %v1051, %v1071
    %v1088 = vmul.f32 %v1052, %v1071
    %v1089 = vmul.f32 %v1053, %v1071
    %v1090 = vmul.f32 %v1054, %v1071
    %v1091 = vmul.f32 %v1055, %v1071
    %v1092 = vmul.f32 %v1056, %v1071
    %v1093 = vmul.f32 %v1057, %v1071
    %v1094 = vmul.f32 %v1058, %v1071
    %v1095 = vmul.f32 %v1059, %v1071
    %v1096 = vmul.f32 %v1060, %v1071
    %v1097 = vmul.f32 %v1061, %v1071
    %v1098 = vmul.f32 %v1062, %v1071
    %v1099 = vmul.f32 %v1063, %v1071
    %v1100 = vmul.f32 %v1064, %v1071
    %v1101 = vmul.f32 %v1065, %v1071
    %v1102 = vmul.f32 %v1066, %v1071
    %v1103 = vmul.f32 %v1067, %v1071
    %v1104 = vadd.f32 %v1004, %v1072
    %v1105 = vadd.f32 %v1005, %v1073
    %v1106 = vadd.f32 %v1006, %v1074
    %v1107 = vadd.f32 %v1007, %v1075
    %v1108 = vadd.f32 %v1008, %v1076
    %v1109 = vadd.f32 %v1009, %v1077
    %v1110 = vadd.f32 %v1010, %v1078
    %v1111 = vadd.f32 %v1011, %v1079
    %v1112 = vadd.f32 %v1012, %v1080
    %v1113 = vadd.f32 %v1013, %v1081
    %v1114 = vadd.f32 %v1014, %v1082
    %v1115 = vadd.f32 %v1015, %v1083
    %v1116 = vadd.f32 %v1016, %v1084
    %v1117 = vadd.f32 %v1017, %v1085
    %v1118 = vadd.f32 %v1018, %v1086
    %v1119 = vadd.f32 %v1019, %v1087
    %v1120 = vadd.f32 %v1020, %v1088
    %v1121 = vadd.f32 %v1021, %v1089
    %v1122 = vadd.f32 %v1022, %v1090
    %v1123 = vadd.f32 %v1023, %v1091
    %v1124 = vadd.f32 %v1024, %v1092
    %v1125 = vadd.f32 %v1025, %v1093
    %v1126 = vadd.f32 %v1026, %v1094
    %v1127 = vadd.f32 %v1027, %v1095
    %v1128 = vadd.f32 %v1028, %v1096
    %v1129 = vadd.f32 %v1029, %v1097
    %v1130 = vadd.f32 %v1030, %v1098
    %v1131 = vadd.f32 %v1031, %v1099
    %v1132 = vadd.f32 %v1032, %v1100
    %v1133 = vadd.f32 %v1033, %v1101
    %v1134 = vadd.f32 %v1034, %v1102
    %v1135 = vadd.f32 %v1035, %v1103
    %v1136 = vld [vmem:[%s770] sm:$0xff]
    %v1137 = vld [vmem:[%s770 + $0x8] sm:$0xff]
    %v1138 = vld [vmem:[%s770 + $0x18] sm:$0xff]
    %v1139 = vld [vmem:[%s770 + $0x20] sm:$0xff]
    %v1140 = vld [vmem:[%s770 + $0x30] sm:$0xff]
    %v1141 = vld [vmem:[%s770 + $0x38] sm:$0xff]
    %v1142 = vld [vmem:[%s770 + $0x48] sm:$0xff]
    %v1143 = vld [vmem:[%s770 + $0x50] sm:$0xff]
    %v1144 = vld [vmem:[%s770 + $0x60] sm:$0xff]
    %v1145 = vld [vmem:[%s770 + $0x68] sm:$0xff]
    %v1146 = vld [vmem:[%s770 + $0x78] sm:$0xff]
    %v1147 = vld [vmem:[%s770 + $0x80] sm:$0xff]
    %v1148 = vld [vmem:[%s770 + $0x90] sm:$0xff]
    %v1149 = vld [vmem:[%s770 + $0x98] sm:$0xff]
    %v1150 = vld [vmem:[%s770 + $0xa8] sm:$0xff]
    %v1151 = vld [vmem:[%s770 + $0xb0] sm:$0xff]
    %v1152 = vld [vmem:[%s770 + $0xc0] sm:$0xff]
    %v1153 = vld [vmem:[%s770 + $0xc8] sm:$0xff]
    %v1154 = vld [vmem:[%s770 + $0xd8] sm:$0xff]
    %v1155 = vld [vmem:[%s770 + $0xe0] sm:$0xff]
    %v1156 = vld [vmem:[%s770 + $0xf0] sm:$0xff]
    %v1157 = vld [vmem:[%s770 + $0xf8] sm:$0xff]
    %v1158 = vld [vmem:[%s770 + $0x108] sm:$0xff]
    %v1159 = vld [vmem:[%s770 + $0x110] sm:$0xff]
    %v1160 = vld [vmem:[%s770 + $0x120] sm:$0xff]
    %v1161 = vld [vmem:[%s770 + $0x128] sm:$0xff]
    %v1162 = vld [vmem:[%s770 + $0x138] sm:$0xff]
    %v1163 = vld [vmem:[%s770 + $0x140] sm:$0xff]
    %v1164 = vld [vmem:[%s770 + $0x150] sm:$0xff]
    %v1165 = vld [vmem:[%s770 + $0x158] sm:$0xff]
    %v1166 = vld [vmem:[%s770 + $0x168] sm:$0xff]
    %v1167 = vld [vmem:[%s770 + $0x170] sm:$0xff]
    %v1168 = vlaneseq
    %v1169 = vshrl.u32 %v1168, 7
    %v1170 = vsub.s32 3, %v1169
    %v1171 = vrot.slane %v756, %v1170
    %v1172 = vmul.f32 %v1136, %v1171
    %v1173 = vmul.f32 %v1137, %v1171
    %v1174 = vmul.f32 %v1138, %v1171
    %v1175 = vmul.f32 %v1139, %v1171
    %v1176 = vmul.f32 %v1140, %v1171
    %v1177 = vmul.f32 %v1141, %v1171
    %v1178 = vmul.f32 %v1142, %v1171
    %v1179 = vmul.f32 %v1143, %v1171
    %v1180 = vmul.f32 %v1144, %v1171
    %v1181 = vmul.f32 %v1145, %v1171
    %v1182 = vmul.f32 %v1146, %v1171
    %v1183 = vmul.f32 %v1147, %v1171
    %v1184 = vmul.f32 %v1148, %v1171
    %v1185 = vmul.f32 %v1149, %v1171
    %v1186 = vmul.f32 %v1150, %v1171
    %v1187 = vmul.f32 %v1151, %v1171
    %v1188 = vmul.f32 %v1152, %v1171
    %v1189 = vmul.f32 %v1153, %v1171
    %v1190 = vmul.f32 %v1154, %v1171
    %v1191 = vmul.f32 %v1155, %v1171
    %v1192 = vmul.f32 %v1156, %v1171
    %v1193 = vmul.f32 %v1157, %v1171
    %v1194 = vmul.f32 %v1158, %v1171
    %v1195 = vmul.f32 %v1159, %v1171
    %v1196 = vmul.f32 %v1160, %v1171
    %v1197 = vmul.f32 %v1161, %v1171
    %v1198 = vmul.f32 %v1162, %v1171
    %v1199 = vmul.f32 %v1163, %v1171
    %v1200 = vmul.f32 %v1164, %v1171
    %v1201 = vmul.f32 %v1165, %v1171
    %v1202 = vmul.f32 %v1166, %v1171
    %v1203 = vmul.f32 %v1167, %v1171
    %v1204 = vadd.f32 %v1104, %v1172
    %v1205 = vadd.f32 %v1105, %v1173
    %v1206 = vadd.f32 %v1106, %v1174
    %v1207 = vadd.f32 %v1107, %v1175
    %v1208 = vadd.f32 %v1108, %v1176
    %v1209 = vadd.f32 %v1109, %v1177
    %v1210 = vadd.f32 %v1110, %v1178
    %v1211 = vadd.f32 %v1111, %v1179
    %v1212 = vadd.f32 %v1112, %v1180
    %v1213 = vadd.f32 %v1113, %v1181
    %v1214 = vadd.f32 %v1114, %v1182
    %v1215 = vadd.f32 %v1115, %v1183
    %v1216 = vadd.f32 %v1116, %v1184
    %v1217 = vadd.f32 %v1117, %v1185
    %v1218 = vadd.f32 %v1118, %v1186
    %v1219 = vadd.f32 %v1119, %v1187
    %v1220 = vadd.f32 %v1120, %v1188
    %v1221 = vadd.f32 %v1121, %v1189
    %v1222 = vadd.f32 %v1122, %v1190
    %v1223 = vadd.f32 %v1123, %v1191
    %v1224 = vadd.f32 %v1124, %v1192
    %v1225 = vadd.f32 %v1125, %v1193
    %v1226 = vadd.f32 %v1126, %v1194
    %v1227 = vadd.f32 %v1127, %v1195
    %v1228 = vadd.f32 %v1128, %v1196
    %v1229 = vadd.f32 %v1129, %v1197
    %v1230 = vadd.f32 %v1130, %v1198
    %v1231 = vadd.f32 %v1131, %v1199
    %v1232 = vadd.f32 %v1132, %v1200
    %v1233 = vadd.f32 %v1133, %v1201
    %v1234 = vadd.f32 %v1134, %v1202
    %v1235 = vadd.f32 %v1135, %v1203
    %v1236 = vld [vmem:[%s770 + $0x1] sm:$0xff]
    %v1237 = vld [vmem:[%s770 + $0x9] sm:$0xff]
    %v1238 = vld [vmem:[%s770 + $0x19] sm:$0xff]
    %v1239 = vld [vmem:[%s770 + $0x21] sm:$0xff]
    %v1240 = vld [vmem:[%s770 + $0x31] sm:$0xff]
    %v1241 = vld [vmem:[%s770 + $0x39] sm:$0xff]
    %v1242 = vld [vmem:[%s770 + $0x49] sm:$0xff]
    %v1243 = vld [vmem:[%s770 + $0x51] sm:$0xff]
    %v1244 = vld [vmem:[%s770 + $0x61] sm:$0xff]
    %v1245 = vld [vmem:[%s770 + $0x69] sm:$0xff]
    %v1246 = vld [vmem:[%s770 + $0x79] sm:$0xff]
    %v1247 = vld [vmem:[%s770 + $0x81] sm:$0xff]
    %v1248 = vld [vmem:[%s770 + $0x91] sm:$0xff]
    %v1249 = vld [vmem:[%s770 + $0x99] sm:$0xff]
    %v1250 = vld [vmem:[%s770 + $0xa9] sm:$0xff]
    %v1251 = vld [vmem:[%s770 + $0xb1] sm:$0xff]
    %v1252 = vld [vmem:[%s770 + $0xc1] sm:$0xff]
    %v1253 = vld [vmem:[%s770 + $0xc9] sm:$0xff]
    %v1254 = vld [vmem:[%s770 + $0xd9] sm:$0xff]
    %v1255 = vld [vmem:[%s770 + $0xe1] sm:$0xff]
    %v1256 = vld [vmem:[%s770 + $0xf1] sm:$0xff]
    %v1257 = vld [vmem:[%s770 + $0xf9] sm:$0xff]
    %v1258 = vld [vmem:[%s770 + $0x109] sm:$0xff]
    %v1259 = vld [vmem:[%s770 + $0x111] sm:$0xff]
    %v1260 = vld [vmem:[%s770 + $0x121] sm:$0xff]
    %v1261 = vld [vmem:[%s770 + $0x129] sm:$0xff]
    %v1262 = vld [vmem:[%s770 + $0x139] sm:$0xff]
    %v1263 = vld [vmem:[%s770 + $0x141] sm:$0xff]
    %v1264 = vld [vmem:[%s770 + $0x151] sm:$0xff]
    %v1265 = vld [vmem:[%s770 + $0x159] sm:$0xff]
    %v1266 = vld [vmem:[%s770 + $0x169] sm:$0xff]
    %v1267 = vld [vmem:[%s770 + $0x171] sm:$0xff]
    %v1268 = vlaneseq
    %v1269 = vshrl.u32 %v1268, 7
    %v1270 = vsub.s32 4, %v1269
    %v1271 = vrot.slane %v756, %v1270
    %v1272 = vmul.f32 %v1236, %v1271
    %v1273 = vmul.f32 %v1237, %v1271
    %v1274 = vmul.f32 %v1238, %v1271
    %v1275 = vmul.f32 %v1239, %v1271
    %v1276 = vmul.f32 %v1240, %v1271
    %v1277 = vmul.f32 %v1241, %v1271
    %v1278 = vmul.f32 %v1242, %v1271
    %v1279 = vmul.f32 %v1243, %v1271
    %v1280 = vmul.f32 %v1244, %v1271
    %v1281 = vmul.f32 %v1245, %v1271
    %v1282 = vmul.f32 %v1246, %v1271
    %v1283 = vmul.f32 %v1247, %v1271
    %v1284 = vmul.f32 %v1248, %v1271
    %v1285 = vmul.f32 %v1249, %v1271
    %v1286 = vmul.f32 %v1250, %v1271
    %v1287 = vmul.f32 %v1251, %v1271
    %v1288 = vmul.f32 %v1252, %v1271
    %v1289 = vmul.f32 %v1253, %v1271
    %v1290 = vmul.f32 %v1254, %v1271
    %v1291 = vmul.f32 %v1255, %v1271
    %v1292 = vmul.f32 %v1256, %v1271
    %v1293 = vmul.f32 %v1257, %v1271
    %v1294 = vmul.f32 %v1258, %v1271
    %v1295 = vmul.f32 %v1259, %v1271
    %v1296 = vmul.f32 %v1260, %v1271
    %v1297 = vmul.f32 %v1261, %v1271
    %v1298 = vmul.f32 %v1262, %v1271
    %v1299 = vmul.f32 %v1263, %v1271
    %v1300 = vmul.f32 %v1264, %v1271
    %v1301 = vmul.f32 %v1265, %v1271
    %v1302 = vmul.f32 %v1266, %v1271
    %v1303 = vmul.f32 %v1267, %v1271
    %v1304 = vadd.f32 %v1204, %v1272
    %v1305 = vadd.f32 %v1205, %v1273
    %v1306 = vadd.f32 %v1206, %v1274
    %v1307 = vadd.f32 %v1207, %v1275
    %v1308 = vadd.f32 %v1208, %v1276
    %v1309 = vadd.f32 %v1209, %v1277
    %v1310 = vadd.f32 %v1210, %v1278
    %v1311 = vadd.f32 %v1211, %v1279
    %v1312 = vadd.f32 %v1212, %v1280
    %v1313 = vadd.f32 %v1213, %v1281
    %v1314 = vadd.f32 %v1214, %v1282
    %v1315 = vadd.f32 %v1215, %v1283
    %v1316 = vadd.f32 %v1216, %v1284
    %v1317 = vadd.f32 %v1217, %v1285
    %v1318 = vadd.f32 %v1218, %v1286
    %v1319 = vadd.f32 %v1219, %v1287
    %v1320 = vadd.f32 %v1220, %v1288
    %v1321 = vadd.f32 %v1221, %v1289
    %v1322 = vadd.f32 %v1222, %v1290
    %v1323 = vadd.f32 %v1223, %v1291
    %v1324 = vadd.f32 %v1224, %v1292
    %v1325 = vadd.f32 %v1225, %v1293
    %v1326 = vadd.f32 %v1226, %v1294
    %v1327 = vadd.f32 %v1227, %v1295
    %v1328 = vadd.f32 %v1228, %v1296
    %v1329 = vadd.f32 %v1229, %v1297
    %v1330 = vadd.f32 %v1230, %v1298
    %v1331 = vadd.f32 %v1231, %v1299
    %v1332 = vadd.f32 %v1232, %v1300
    %v1333 = vadd.f32 %v1233, %v1301
    %v1334 = vadd.f32 %v1234, %v1302
    %v1335 = vadd.f32 %v1235, %v1303
    %v1336 = vld [vmem:[%s770 + $0x2] sm:$0xff]
    %v1337 = vld [vmem:[%s770 + $0xa] sm:$0xff]
    %v1338 = vld [vmem:[%s770 + $0x1a] sm:$0xff]
    %v1339 = vld [vmem:[%s770 + $0x22] sm:$0xff]
    %v1340 = vld [vmem:[%s770 + $0x32] sm:$0xff]
    %v1341 = vld [vmem:[%s770 + $0x3a] sm:$0xff]
    %v1342 = vld [vmem:[%s770 + $0x4a] sm:$0xff]
    %v1343 = vld [vmem:[%s770 + $0x52] sm:$0xff]
    %v1344 = vld [vmem:[%s770 + $0x62] sm:$0xff]
    %v1345 = vld [vmem:[%s770 + $0x6a] sm:$0xff]
    %v1346 = vld [vmem:[%s770 + $0x7a] sm:$0xff]
    %v1347 = vld [vmem:[%s770 + $0x82] sm:$0xff]
    %v1348 = vld [vmem:[%s770 + $0x92] sm:$0xff]
    %v1349 = vld [vmem:[%s770 + $0x9a] sm:$0xff]
    %v1350 = vld [vmem:[%s770 + $0xaa] sm:$0xff]
    %v1351 = vld [vmem:[%s770 + $0xb2] sm:$0xff]
    %v1352 = vld [vmem:[%s770 + $0xc2] sm:$0xff]
    %v1353 = vld [vmem:[%s770 + $0xca] sm:$0xff]
    %v1354 = vld [vmem:[%s770 + $0xda] sm:$0xff]
    %v1355 = vld [vmem:[%s770 + $0xe2] sm:$0xff]
    %v1356 = vld [vmem:[%s770 + $0xf2] sm:$0xff]
    %v1357 = vld [vmem:[%s770 + $0xfa] sm:$0xff]
    %v1358 = vld [vmem:[%s770 + $0x10a] sm:$0xff]
    %v1359 = vld [vmem:[%s770 + $0x112] sm:$0xff]
    %v1360 = vld [vmem:[%s770 + $0x122] sm:$0xff]
    %v1361 = vld [vmem:[%s770 + $0x12a] sm:$0xff]
    %v1362 = vld [vmem:[%s770 + $0x13a] sm:$0xff]
    %v1363 = vld [vmem:[%s770 + $0x142] sm:$0xff]
    %v1364 = vld [vmem:[%s770 + $0x152] sm:$0xff]
    %v1365 = vld [vmem:[%s770 + $0x15a] sm:$0xff]
    %v1366 = vld [vmem:[%s770 + $0x16a] sm:$0xff]
    %v1367 = vld [vmem:[%s770 + $0x172] sm:$0xff]
    %v1368 = vlaneseq
    %v1369 = vshrl.u32 %v1368, 7
    %v1370 = vsub.s32 5, %v1369
    %v1371 = vrot.slane %v756, %v1370
    %v1372 = vmul.f32 %v1336, %v1371
    %v1373 = vmul.f32 %v1337, %v1371
    %v1374 = vmul.f32 %v1338, %v1371
    %v1375 = vmul.f32 %v1339, %v1371
    %v1376 = vmul.f32 %v1340, %v1371
    %v1377 = vmul.f32 %v1341, %v1371
    %v1378 = vmul.f32 %v1342, %v1371
    %v1379 = vmul.f32 %v1343, %v1371
    %v1380 = vmul.f32 %v1344, %v1371
    %v1381 = vmul.f32 %v1345, %v1371
    %v1382 = vmul.f32 %v1346, %v1371
    %v1383 = vmul.f32 %v1347, %v1371
    %v1384 = vmul.f32 %v1348, %v1371
    %v1385 = vmul.f32 %v1349, %v1371
    %v1386 = vmul.f32 %v1350, %v1371
    %v1387 = vmul.f32 %v1351, %v1371
    %v1388 = vmul.f32 %v1352, %v1371
    %v1389 = vmul.f32 %v1353, %v1371
    %v1390 = vmul.f32 %v1354, %v1371
    %v1391 = vmul.f32 %v1355, %v1371
    %v1392 = vmul.f32 %v1356, %v1371
    %v1393 = vmul.f32 %v1357, %v1371
    %v1394 = vmul.f32 %v1358, %v1371
    %v1395 = vmul.f32 %v1359, %v1371
    %v1396 = vmul.f32 %v1360, %v1371
    %v1397 = vmul.f32 %v1361, %v1371
    %v1398 = vmul.f32 %v1362, %v1371
    %v1399 = vmul.f32 %v1363, %v1371
    %v1400 = vmul.f32 %v1364, %v1371
    %v1401 = vmul.f32 %v1365, %v1371
    %v1402 = vmul.f32 %v1366, %v1371
    %v1403 = vmul.f32 %v1367, %v1371
    %v1404 = vadd.f32 %v1304, %v1372
    %v1405 = vadd.f32 %v1305, %v1373
    %v1406 = vadd.f32 %v1306, %v1374
    %v1407 = vadd.f32 %v1307, %v1375
    %v1408 = vadd.f32 %v1308, %v1376
    %v1409 = vadd.f32 %v1309, %v1377
    %v1410 = vadd.f32 %v1310, %v1378
    %v1411 = vadd.f32 %v1311, %v1379
    %v1412 = vadd.f32 %v1312, %v1380
    %v1413 = vadd.f32 %v1313, %v1381
    %v1414 = vadd.f32 %v1314, %v1382
    %v1415 = vadd.f32 %v1315, %v1383
    %v1416 = vadd.f32 %v1316, %v1384
    %v1417 = vadd.f32 %v1317, %v1385
    %v1418 = vadd.f32 %v1318, %v1386
    %v1419 = vadd.f32 %v1319, %v1387
    %v1420 = vadd.f32 %v1320, %v1388
    %v1421 = vadd.f32 %v1321, %v1389
    %v1422 = vadd.f32 %v1322, %v1390
    %v1423 = vadd.f32 %v1323, %v1391
    %v1424 = vadd.f32 %v1324, %v1392
    %v1425 = vadd.f32 %v1325, %v1393
    %v1426 = vadd.f32 %v1326, %v1394
    %v1427 = vadd.f32 %v1327, %v1395
    %v1428 = vadd.f32 %v1328, %v1396
    %v1429 = vadd.f32 %v1329, %v1397
    %v1430 = vadd.f32 %v1330, %v1398
    %v1431 = vadd.f32 %v1331, %v1399
    %v1432 = vadd.f32 %v1332, %v1400
    %v1433 = vadd.f32 %v1333, %v1401
    %v1434 = vadd.f32 %v1334, %v1402
    %v1435 = vadd.f32 %v1335, %v1403
    %s1436 = scalar_lea.vmem [#allocation2], 48
    %v1437 = vld [vmem:[%s1436] sm:$0xff]
    %v1438 = vld [vmem:[%s1436 + $0x8] sm:$0xff]
    %v1439 = vld [vmem:[%s1436 + $0x18] sm:$0xff]
    %v1440 = vld [vmem:[%s1436 + $0x20] sm:$0xff]
    %v1441 = vld [vmem:[%s1436 + $0x30] sm:$0xff]
    %v1442 = vld [vmem:[%s1436 + $0x38] sm:$0xff]
    %v1443 = vld [vmem:[%s1436 + $0x48] sm:$0xff]
    %v1444 = vld [vmem:[%s1436 + $0x50] sm:$0xff]
    %v1445 = vld [vmem:[%s1436 + $0x60] sm:$0xff]
    %v1446 = vld [vmem:[%s1436 + $0x68] sm:$0xff]
    %v1447 = vld [vmem:[%s1436 + $0x78] sm:$0xff]
    %v1448 = vld [vmem:[%s1436 + $0x80] sm:$0xff]
    %v1449 = vld [vmem:[%s1436 + $0x90] sm:$0xff]
    %v1450 = vld [vmem:[%s1436 + $0x98] sm:$0xff]
    %v1451 = vld [vmem:[%s1436 + $0xa8] sm:$0xff]
    %v1452 = vld [vmem:[%s1436 + $0xb0] sm:$0xff]
    %v1453 = vld [vmem:[%s1436 + $0xc0] sm:$0xff]
    %v1454 = vld [vmem:[%s1436 + $0xc8] sm:$0xff]
    %v1455 = vld [vmem:[%s1436 + $0xd8] sm:$0xff]
    %v1456 = vld [vmem:[%s1436 + $0xe0] sm:$0xff]
    %v1457 = vld [vmem:[%s1436 + $0xf0] sm:$0xff]
    %v1458 = vld [vmem:[%s1436 + $0xf8] sm:$0xff]
    %v1459 = vld [vmem:[%s1436 + $0x108] sm:$0xff]
    %v1460 = vld [vmem:[%s1436 + $0x110] sm:$0xff]
    %v1461 = vld [vmem:[%s1436 + $0x120] sm:$0xff]
    %v1462 = vld [vmem:[%s1436 + $0x128] sm:$0xff]
    %v1463 = vld [vmem:[%s1436 + $0x138] sm:$0xff]
    %v1464 = vld [vmem:[%s1436 + $0x140] sm:$0xff]
    %v1465 = vld [vmem:[%s1436 + $0x150] sm:$0xff]
    %v1466 = vld [vmem:[%s1436 + $0x158] sm:$0xff]
    %v1467 = vld [vmem:[%s1436 + $0x168] sm:$0xff]
    %v1468 = vld [vmem:[%s1436 + $0x170] sm:$0xff]
    %v1469 = vlaneseq
    %v1470 = vshrl.u32 %v1469, 7
    %v1471 = vsub.s32 6, %v1470
    %v1472 = vrot.slane %v756, %v1471
    %v1473 = vmul.f32 %v1437, %v1472
    %v1474 = vmul.f32 %v1438, %v1472
    %v1475 = vmul.f32 %v1439, %v1472
    %v1476 = vmul.f32 %v1440, %v1472
    %v1477 = vmul.f32 %v1441, %v1472
    %v1478 = vmul.f32 %v1442, %v1472
    %v1479 = vmul.f32 %v1443, %v1472
    %v1480 = vmul.f32 %v1444, %v1472
    %v1481 = vmul.f32 %v1445, %v1472
    %v1482 = vmul.f32 %v1446, %v1472
    %v1483 = vmul.f32 %v1447, %v1472
    %v1484 = vmul.f32 %v1448, %v1472
    %v1485 = vmul.f32 %v1449, %v1472
    %v1486 = vmul.f32 %v1450, %v1472
    %v1487 = vmul.f32 %v1451, %v1472
    %v1488 = vmul.f32 %v1452, %v1472
    %v1489 = vmul.f32 %v1453, %v1472
    %v1490 = vmul.f32 %v1454, %v1472
    %v1491 = vmul.f32 %v1455, %v1472
    %v1492 = vmul.f32 %v1456, %v1472
    %v1493 = vmul.f32 %v1457, %v1472
    %v1494 = vmul.f32 %v1458, %v1472
    %v1495 = vmul.f32 %v1459, %v1472
    %v1496 = vmul.f32 %v1460, %v1472
    %v1497 = vmul.f32 %v1461, %v1472
    %v1498 = vmul.f32 %v1462, %v1472
    %v1499 = vmul.f32 %v1463, %v1472
    %v1500 = vmul.f32 %v1464, %v1472
    %v1501 = vmul.f32 %v1465, %v1472
    %v1502 = vmul.f32 %v1466, %v1472
    %v1503 = vmul.f32 %v1467, %v1472
    %v1504 = vmul.f32 %v1468, %v1472
    %v1505 = vadd.f32 %v1404, %v1473
    %v1506 = vadd.f32 %v1405, %v1474
    %v1507 = vadd.f32 %v1406, %v1475
    %v1508 = vadd.f32 %v1407, %v1476
    %v1509 = vadd.f32 %v1408, %v1477
    %v1510 = vadd.f32 %v1409, %v1478
    %v1511 = vadd.f32 %v1410, %v1479
    %v1512 = vadd.f32 %v1411, %v1480
    %v1513 = vadd.f32 %v1412, %v1481
    %v1514 = vadd.f32 %v1413, %v1482
    %v1515 = vadd.f32 %v1414, %v1483
    %v1516 = vadd.f32 %v1415, %v1484
    %v1517 = vadd.f32 %v1416, %v1485
    %v1518 = vadd.f32 %v1417, %v1486
    %v1519 = vadd.f32 %v1418, %v1487
    %v1520 = vadd.f32 %v1419, %v1488
    %v1521 = vadd.f32 %v1420, %v1489
    %v1522 = vadd.f32 %v1421, %v1490
    %v1523 = vadd.f32 %v1422, %v1491
    %v1524 = vadd.f32 %v1423, %v1492
    %v1525 = vadd.f32 %v1424, %v1493
    %v1526 = vadd.f32 %v1425, %v1494
    %v1527 = vadd.f32 %v1426, %v1495
    %v1528 = vadd.f32 %v1427, %v1496
    %v1529 = vadd.f32 %v1428, %v1497
    %v1530 = vadd.f32 %v1429, %v1498
    %v1531 = vadd.f32 %v1430, %v1499
    %v1532 = vadd.f32 %v1431, %v1500
    %v1533 = vadd.f32 %v1432, %v1501
    %v1534 = vadd.f32 %v1433, %v1502
    %v1535 = vadd.f32 %v1434, %v1503
    %v1536 = vadd.f32 %v1435, %v1504
    %v1537 = vld [vmem:[%s1436 + $0x1] sm:$0xff]
    %v1538 = vld [vmem:[%s1436 + $0x9] sm:$0xff]
    %v1539 = vld [vmem:[%s1436 + $0x19] sm:$0xff]
    %v1540 = vld [vmem:[%s1436 + $0x21] sm:$0xff]
    %v1541 = vld [vmem:[%s1436 + $0x31] sm:$0xff]
    %v1542 = vld [vmem:[%s1436 + $0x39] sm:$0xff]
    %v1543 = vld [vmem:[%s1436 + $0x49] sm:$0xff]
    %v1544 = vld [vmem:[%s1436 + $0x51] sm:$0xff]
    %v1545 = vld [vmem:[%s1436 + $0x61] sm:$0xff]
    %v1546 = vld [vmem:[%s1436 + $0x69] sm:$0xff]
    %v1547 = vld [vmem:[%s1436 + $0x79] sm:$0xff]
    %v1548 = vld [vmem:[%s1436 + $0x81] sm:$0xff]
    %v1549 = vld [vmem:[%s1436 + $0x91] sm:$0xff]
    %v1550 = vld [vmem:[%s1436 + $0x99] sm:$0xff]
    %v1551 = vld [vmem:[%s1436 + $0xa9] sm:$0xff]
    %v1552 = vld [vmem:[%s1436 + $0xb1] sm:$0xff]
    %v1553 = vld [vmem:[%s1436 + $0xc1] sm:$0xff]
    %v1554 = vld [vmem:[%s1436 + $0xc9] sm:$0xff]
    %v1555 = vld [vmem:[%s1436 + $0xd9] sm:$0xff]
    %v1556 = vld [vmem:[%s1436 + $0xe1] sm:$0xff]
    %v1557 = vld [vmem:[%s1436 + $0xf1] sm:$0xff]
    %v1558 = vld [vmem:[%s1436 + $0xf9] sm:$0xff]
    %v1559 = vld [vmem:[%s1436 + $0x109] sm:$0xff]
    %v1560 = vld [vmem:[%s1436 + $0x111] sm:$0xff]
    %v1561 = vld [vmem:[%s1436 + $0x121] sm:$0xff]
    %v1562 = vld [vmem:[%s1436 + $0x129] sm:$0xff]
    %v1563 = vld [vmem:[%s1436 + $0x139] sm:$0xff]
    %v1564 = vld [vmem:[%s1436 + $0x141] sm:$0xff]
    %v1565 = vld [vmem:[%s1436 + $0x151] sm:$0xff]
    %v1566 = vld [vmem:[%s1436 + $0x159] sm:$0xff]
    %v1567 = vld [vmem:[%s1436 + $0x169] sm:$0xff]
    %v1568 = vld [vmem:[%s1436 + $0x171] sm:$0xff]
    %v1569 = vlaneseq
    %v1570 = vshrl.u32 %v1569, 7
    %v1571 = vsub.s32 7, %v1570
    %v1572 = vrot.slane %v756, %v1571
    %v1573 = vmul.f32 %v1537, %v1572
    %v1574 = vmul.f32 %v1538, %v1572
    %v1575 = vmul.f32 %v1539, %v1572
    %v1576 = vmul.f32 %v1540, %v1572
    %v1577 = vmul.f32 %v1541, %v1572
    %v1578 = vmul.f32 %v1542, %v1572
    %v1579 = vmul.f32 %v1543, %v1572
    %v1580 = vmul.f32 %v1544, %v1572
    %v1581 = vmul.f32 %v1545, %v1572
    %v1582 = vmul.f32 %v1546, %v1572
    %v1583 = vmul.f32 %v1547, %v1572
    %v1584 = vmul.f32 %v1548, %v1572
    %v1585 = vmul.f32 %v1549, %v1572
    %v1586 = vmul.f32 %v1550, %v1572
    %v1587 = vmul.f32 %v1551, %v1572
    %v1588 = vmul.f32 %v1552, %v1572
    %v1589 = vmul.f32 %v1553, %v1572
    %v1590 = vmul.f32 %v1554, %v1572
    %v1591 = vmul.f32 %v1555, %v1572
    %v1592 = vmul.f32 %v1556, %v1572
    %v1593 = vmul.f32 %v1557, %v1572
    %v1594 = vmul.f32 %v1558, %v1572
    %v1595 = vmul.f32 %v1559, %v1572
    %v1596 = vmul.f32 %v1560, %v1572
    %v1597 = vmul.f32 %v1561, %v1572
    %v1598 = vmul.f32 %v1562, %v1572
    %v1599 = vmul.f32 %v1563, %v1572
    %v1600 = vmul.f32 %v1564, %v1572
    %v1601 = vmul.f32 %v1565, %v1572
    %v1602 = vmul.f32 %v1566, %v1572
    %v1603 = vmul.f32 %v1567, %v1572
    %v1604 = vmul.f32 %v1568, %v1572
    %v1605 = vadd.f32 %v1505, %v1573
    %v1606 = vadd.f32 %v1506, %v1574
    %v1607 = vadd.f32 %v1507, %v1575
    %v1608 = vadd.f32 %v1508, %v1576
    %v1609 = vadd.f32 %v1509, %v1577
    %v1610 = vadd.f32 %v1510, %v1578
    %v1611 = vadd.f32 %v1511, %v1579
    %v1612 = vadd.f32 %v1512, %v1580
    %v1613 = vadd.f32 %v1513, %v1581
    %v1614 = vadd.f32 %v1514, %v1582
    %v1615 = vadd.f32 %v1515, %v1583
    %v1616 = vadd.f32 %v1516, %v1584
    %v1617 = vadd.f32 %v1517, %v1585
    %v1618 = vadd.f32 %v1518, %v1586
    %v1619 = vadd.f32 %v1519, %v1587
    %v1620 = vadd.f32 %v1520, %v1588
    %v1621 = vadd.f32 %v1521, %v1589
    %v1622 = vadd.f32 %v1522, %v1590
    %v1623 = vadd.f32 %v1523, %v1591
    %v1624 = vadd.f32 %v1524, %v1592
    %v1625 = vadd.f32 %v1525, %v1593
    %v1626 = vadd.f32 %v1526, %v1594
    %v1627 = vadd.f32 %v1527, %v1595
    %v1628 = vadd.f32 %v1528, %v1596
    %v1629 = vadd.f32 %v1529, %v1597
    %v1630 = vadd.f32 %v1530, %v1598
    %v1631 = vadd.f32 %v1531, %v1599
    %v1632 = vadd.f32 %v1532, %v1600
    %v1633 = vadd.f32 %v1533, %v1601
    %v1634 = vadd.f32 %v1534, %v1602
    %v1635 = vadd.f32 %v1535, %v1603
    %v1636 = vadd.f32 %v1536, %v1604
    %v1637 = vld [vmem:[%s1436 + $0x2] sm:$0xff]
    %v1638 = vld [vmem:[%s1436 + $0xa] sm:$0xff]
    %v1639 = vld [vmem:[%s1436 + $0x1a] sm:$0xff]
    %v1640 = vld [vmem:[%s1436 + $0x22] sm:$0xff]
    %v1641 = vld [vmem:[%s1436 + $0x32] sm:$0xff]
    %v1642 = vld [vmem:[%s1436 + $0x3a] sm:$0xff]
    %v1643 = vld [vmem:[%s1436 + $0x4a] sm:$0xff]
    %v1644 = vld [vmem:[%s1436 + $0x52] sm:$0xff]
    %v1645 = vld [vmem:[%s1436 + $0x62] sm:$0xff]
    %v1646 = vld [vmem:[%s1436 + $0x6a] sm:$0xff]
    %v1647 = vld [vmem:[%s1436 + $0x7a] sm:$0xff]
    %v1648 = vld [vmem:[%s1436 + $0x82] sm:$0xff]
    %v1649 = vld [vmem:[%s1436 + $0x92] sm:$0xff]
    %v1650 = vld [vmem:[%s1436 + $0x9a] sm:$0xff]
    %v1651 = vld [vmem:[%s1436 + $0xaa] sm:$0xff]
    %v1652 = vld [vmem:[%s1436 + $0xb2] sm:$0xff]
    %v1653 = vld [vmem:[%s1436 + $0xc2] sm:$0xff]
    %v1654 = vld [vmem:[%s1436 + $0xca] sm:$0xff]
    %v1655 = vld [vmem:[%s1436 + $0xda] sm:$0xff]
    %v1656 = vld [vmem:[%s1436 + $0xe2] sm:$0xff]
    %v1657 = vld [vmem:[%s1436 + $0xf2] sm:$0xff]
    %v1658 = vld [vmem:[%s1436 + $0xfa] sm:$0xff]
    %v1659 = vld [vmem:[%s1436 + $0x10a] sm:$0xff]
    %v1660 = vld [vmem:[%s1436 + $0x112] sm:$0xff]
    %v1661 = vld [vmem:[%s1436 + $0x122] sm:$0xff]
    %v1662 = vld [vmem:[%s1436 + $0x12a] sm:$0xff]
    %v1663 = vld [vmem:[%s1436 + $0x13a] sm:$0xff]
    %v1664 = vld [vmem:[%s1436 + $0x142] sm:$0xff]
    %v1665 = vld [vmem:[%s1436 + $0x152] sm:$0xff]
    %v1666 = vld [vmem:[%s1436 + $0x15a] sm:$0xff]
    %v1667 = vld [vmem:[%s1436 + $0x16a] sm:$0xff]
    %v1668 = vld [vmem:[%s1436 + $0x172] sm:$0xff]
    %v1669 = vlaneseq
    %v1670 = vshrl.u32 %v1669, 7
    %v1671 = vsub.s32 0, %v1670
    %v1672 = vrot.slane %v757, %v1671
    %v1673 = vmul.f32 %v1637, %v1672
    %v1674 = vmul.f32 %v1638, %v1672
    %v1675 = vmul.f32 %v1639, %v1672
    %v1676 = vmul.f32 %v1640, %v1672
    %v1677 = vmul.f32 %v1641, %v1672
    %v1678 = vmul.f32 %v1642, %v1672
    %v1679 = vmul.f32 %v1643, %v1672
    %v1680 = vmul.f32 %v1644, %v1672
    %v1681 = vmul.f32 %v1645, %v1672
    %v1682 = vmul.f32 %v1646, %v1672
    %v1683 = vmul.f32 %v1647, %v1672
    %v1684 = vmul.f32 %v1648, %v1672
    %v1685 = vmul.f32 %v1649, %v1672
    %v1686 = vmul.f32 %v1650, %v1672
    %v1687 = vmul.f32 %v1651, %v1672
    %v1688 = vmul.f32 %v1652, %v1672
    %v1689 = vmul.f32 %v1653, %v1672
    %v1690 = vmul.f32 %v1654, %v1672
    %v1691 = vmul.f32 %v1655, %v1672
    %v1692 = vmul.f32 %v1656, %v1672
    %v1693 = vmul.f32 %v1657, %v1672
    %v1694 = vmul.f32 %v1658, %v1672
    %v1695 = vmul.f32 %v1659, %v1672
    %v1696 = vmul.f32 %v1660, %v1672
    %v1697 = vmul.f32 %v1661, %v1672
    %v1698 = vmul.f32 %v1662, %v1672
    %v1699 = vmul.f32 %v1663, %v1672
    %v1700 = vmul.f32 %v1664, %v1672
    %v1701 = vmul.f32 %v1665, %v1672
    %v1702 = vmul.f32 %v1666, %v1672
    %v1703 = vmul.f32 %v1667, %v1672
    %v1704 = vmul.f32 %v1668, %v1672
    %v1705 = vadd.f32 %v1605, %v1673
    %v1706 = vadd.f32 %v1606, %v1674
    %v1707 = vadd.f32 %v1607, %v1675
    %v1708 = vadd.f32 %v1608, %v1676
    %v1709 = vadd.f32 %v1609, %v1677
    %v1710 = vadd.f32 %v1610, %v1678
    %v1711 = vadd.f32 %v1611, %v1679
    %v1712 = vadd.f32 %v1612, %v1680
    %v1713 = vadd.f32 %v1613, %v1681
    %v1714 = vadd.f32 %v1614, %v1682
    %v1715 = vadd.f32 %v1615, %v1683
    %v1716 = vadd.f32 %v1616, %v1684
    %v1717 = vadd.f32 %v1617, %v1685
    %v1718 = vadd.f32 %v1618, %v1686
    %v1719 = vadd.f32 %v1619, %v1687
    %v1720 = vadd.f32 %v1620, %v1688
    %v1721 = vadd.f32 %v1621, %v1689
    %v1722 = vadd.f32 %v1622, %v1690
    %v1723 = vadd.f32 %v1623, %v1691
    %v1724 = vadd.f32 %v1624, %v1692
    %v1725 = vadd.f32 %v1625, %v1693
    %v1726 = vadd.f32 %v1626, %v1694
    %v1727 = vadd.f32 %v1627, %v1695
    %v1728 = vadd.f32 %v1628, %v1696
    %v1729 = vadd.f32 %v1629, %v1697
    %v1730 = vadd.f32 %v1630, %v1698
    %v1731 = vadd.f32 %v1631, %v1699
    %v1732 = vadd.f32 %v1632, %v1700
    %v1733 = vadd.f32 %v1633, %v1701
    %v1734 = vadd.f32 %v1634, %v1702
    %v1735 = vadd.f32 %v1635, %v1703
    %v1736 = vadd.f32 %v1636, %v1704
    %v1738 = vlaneseq
    %v1739 = vshrl.u32 %v1738, 7
    %v1740 = vsub.s32 0, %v1739
    %v1741 = vrot.slane %v758, %v1740
    %v1743 = vadd.f32 %v1705, %v1741
    %v1744 = vadd.f32 %v1706, %v1741
    %v1745 = vadd.f32 %v1707, %v1741
    %v1746 = vadd.f32 %v1708, %v1741
    %v1747 = vadd.f32 %v1709, %v1741
    %v1748 = vadd.f32 %v1710, %v1741
    %v1749 = vadd.f32 %v1711, %v1741
    %v1750 = vadd.f32 %v1712, %v1741
    %v1751 = vadd.f32 %v1713, %v1741
    %v1752 = vadd.f32 %v1714, %v1741
    %v1753 = vadd.f32 %v1715, %v1741
    %v1754 = vadd.f32 %v1716, %v1741
    %v1755 = vadd.f32 %v1717, %v1741
    %v1756 = vadd.f32 %v1718, %v1741
    %v1757 = vadd.f32 %v1719, %v1741
    %v1758 = vadd.f32 %v1720, %v1741
    %v1759 = vadd.f32 %v1721, %v1741
    %v1760 = vadd.f32 %v1722, %v1741
    %v1761 = vadd.f32 %v1723, %v1741
    %v1762 = vadd.f32 %v1724, %v1741
    %v1763 = vadd.f32 %v1725, %v1741
    %v1764 = vadd.f32 %v1726, %v1741
    %v1765 = vadd.f32 %v1727, %v1741
    %v1766 = vadd.f32 %v1728, %v1741
    %v1767 = vadd.f32 %v1729, %v1741
    %v1768 = vadd.f32 %v1730, %v1741
    %v1769 = vadd.f32 %v1731, %v1741
    %v1770 = vadd.f32 %v1732, %v1741
    %v1771 = vadd.f32 %v1733, %v1741
    %v1772 = vadd.f32 %v1734, %v1741
    %v1773 = vadd.f32 %v1735, %v1741
    %v1774 = vadd.f32 %v1736, %v1741
    %v1775 = vmax.f32 %v1743, 0.0
    %v1776 = vmax.f32 %v1744, 0.0
    %v1777 = vmax.f32 %v1745, 0.0
    %v1778 = vmax.f32 %v1746, 0.0
    %v1779 = vmax.f32 %v1747, 0.0
    %v1780 = vmax.f32 %v1748, 0.0
    %v1781 = vmax.f32 %v1749, 0.0
    %v1782 = vmax.f32 %v1750, 0.0
    %v1783 = vmax.f32 %v1751, 0.0
    %v1784 = vmax.f32 %v1752, 0.0
    %v1785 = vmax.f32 %v1753, 0.0
    %v1786 = vmax.f32 %v1754, 0.0
    %v1787 = vmax.f32 %v1755, 0.0
    %v1788 = vmax.f32 %v1756, 0.0
    %v1789 = vmax.f32 %v1757, 0.0
    %v1790 = vmax.f32 %v1758, 0.0
    %v1791 = vmax.f32 %v1759, 0.0
    %v1792 = vmax.f32 %v1760, 0.0
    %v1793 = vmax.f32 %v1761, 0.0
    %v1794 = vmax.f32 %v1762, 0.0
    %v1795 = vmax.f32 %v1763, 0.0
    %v1796 = vmax.f32 %v1764, 0.0
    %v1797 = vmax.f32 %v1765, 0.0
    %v1798 = vmax.f32 %v1766, 0.0
    %v1799 = vmax.f32 %v1767, 0.0
    %v1800 = vmax.f32 %v1768, 0.0
    %v1801 = vmax.f32 %v1769, 0.0
    %v1802 = vmax.f32 %v1770, 0.0
    %v1803 = vmax.f32 %v1771, 0.0
    %v1804 = vmax.f32 %v1772, 0.0
    %v1805 = vmax.f32 %v1773, 0.0
    %v1806 = vmax.f32 %v1774, 0.0
    %v1808 = vlaneseq
    %v1809 = vshrl.u32 %v1808, 7
    %v1810 = vsub.s32 0, %v1809
    %v1811 = vrot.slane %v760, %v1810
    %v1814 = vsel %vm761, %v1775, 0
    %v1817 = vsel %vm761, %v1776, 0
    %v1820 = vsel %vm761, %v1777, 0
    %v1823 = vsel %vm761, %v1778, 0
    %v1826 = vsel %vm761, %v1779, 0
    %v1829 = vsel %vm761, %v1780, 0
    %v1832 = vsel %vm761, %v1781, 0
    %v1835 = vsel %vm761, %v1782, 0
    %v1838 = vsel %vm761, %v1783, 0
    %v1841 = vsel %vm761, %v1784, 0
    %v1844 = vsel %vm761, %v1785, 0
    %v1847 = vsel %vm761, %v1786, 0
    %v1850 = vsel %vm761, %v1787, 0
    %v1853 = vsel %vm761, %v1788, 0
    %v1856 = vsel %vm761, %v1789, 0
    %v1859 = vsel %vm761, %v1790, 0
    %v1862 = vsel %vm761, %v1791, 0
    %v1865 = vsel %vm761, %v1792, 0
    %v1868 = vsel %vm761, %v1793, 0
    %v1871 = vsel %vm761, %v1794, 0
    %v1874 = vsel %vm761, %v1795, 0
    %v1877 = vsel %vm761, %v1796, 0
    %v1880 = vsel %vm761, %v1797, 0
    %v1883 = vsel %vm761, %v1798, 0
    %v1886 = vsel %vm761, %v1799, 0
    %v1889 = vsel %vm761, %v1800, 0
    %v1892 = vsel %vm761, %v1801, 0
    %v1895 = vsel %vm761, %v1802, 0
    %v1898 = vsel %vm761, %v1803, 0
    %v1901 = vsel %vm761, %v1804, 0
    %v1904 = vsel %vm761, %v1805, 0
    %v1907 = vsel %vm761, %v1806, 0
    %vm1909 = vcmask 1043456
    %v1911 = vsel %vm1909, %v759, 0
    %1913 = vmatprep.subr.mxu0 0.0
    %1914 = vmatpush1.msra.mxu0 %v1911
    %1915 = vmatprep.subr.mxu0 0.0
    %1916 = vmatpush1.msra.mxu0 0.0
    %1917 = vmatprep.subr.mxu0 0.0
    %1918 = vmatpush1.msra.mxu0 0.0
    %1919 = vmatprep.subr.mxu0 0.0
    %1920 = vmatpush1.msra.mxu0 0.0
    %1921 = vmatprep.subr.mxu0 0.0
    %1922 = vmatpush1.msra.mxu0 0.0
    %1923 = vmatprep.subr.mxu0 0.0
    %1924 = vmatpush1.msra.mxu0 0.0
    %1925 = vmatprep.subr.mxu0 0.0
    %1926 = vmatpush1.msra.mxu0 0.0
    %1927 = vmatprep.subr.mxu0 0.0
    %1928 = vmatpush1.msra.mxu0 0.0
    %1929 = vmatprep.subr.mxu0 0.0
    %1930 = vmatpush1.msra.mxu0 0.0
    %1931 = vmatprep.subr.mxu0 0.0
    %1932 = vmatpush1.msra.mxu0 0.0
    %1933 = vmatprep.subr.mxu0 0.0
    %1934 = vmatpush1.msra.mxu0 0.0
    %1935 = vmatprep.subr.mxu0 0.0
    %1936 = vmatpush1.msra.mxu0 0.0
    %1937 = vmatprep.subr.mxu0 0.0
    %1938 = vmatpush1.msra.mxu0 0.0
    %1939 = vmatprep.subr.mxu0 0.0
    %1940 = vmatpush1.msra.mxu0 0.0
    %1941 = vmatprep.subr.mxu0 0.0
    %1942 = vmatpush1.msra.mxu0 0.0
    %1943 = vmatprep.subr.mxu0 0.0
    %1944 = vmatpush1.msra.mxu0 0.0
    %1945 = vmatprep.subr.mxu0 0.0
    %1946 = vmatpush1.msra.mxu0 0.0
    %1947 = vmatprep.subr.mxu0 0.0
    %1948 = vmatpush1.msra.mxu0 0.0
    %1949 = vmatprep.subr.mxu0 0.0
    %1950 = vmatpush1.msra.mxu0 0.0
    %1951 = vmatprep.subr.mxu0 0.0
    %1952 = vmatpush1.msra.mxu0 0.0
    %1953 = vmatprep.subr.mxu0 0.0
    %1954 = vmatpush1.msra.mxu0 0.0
    %1955 = vmatprep.subr.mxu0 0.0
    %1956 = vmatpush1.msra.mxu0 0.0
    %1957 = vmatprep.subr.mxu0 0.0
    %1958 = vmatpush1.msra.mxu0 0.0
    %1959 = vmatprep.subr.mxu0 0.0
    %1960 = vmatpush1.msra.mxu0 0.0
    %1961 = vmatprep.subr.mxu0 0.0
    %1962 = vmatpush1.msra.mxu0 0.0
    %1963 = vmatprep.subr.mxu0 0.0
    %1964 = vmatpush1.msra.mxu0 0.0
    %1965 = vmatprep.subr.mxu0 0.0
    %1966 = vmatpush1.msra.mxu0 0.0
    %1967 = vmatprep.subr.mxu0 0.0
    %1968 = vmatpush1.msra.mxu0 0.0
    %1969 = vmatprep.subr.mxu0 0.0
    %1970 = vmatpush1.msra.mxu0 0.0
    %1971 = vmatprep.subr.mxu0 0.0
    %1972 = vmatpush1.msra.mxu0 0.0
    %1973 = vmatprep.subr.mxu0 0.0
    %1974 = vmatpush1.msra.mxu0 0.0
    %1975 = vmatprep.subr.mxu0 0.0
    %1976 = vmatpush1.msra.mxu0 0.0
    %1977 = vmatprep.mubr.f32.mxu0 0.0
    %1978 = vmatmul.mubr.f32.gmra.mrb[0].mxu0 %v1814
    %v1979 = vpop.f32.mrb[0].mxu0
    %v1980 = vadd.f32 %v1811, %v1979
    %v1981 = vpop.f32.mrb[0].mxu0
    %1982 = vmatprep.mubr.f32.mxu0 0.0
    %1983 = vmatmul.mubr.f32.gmra.mrb[0].mxu0 %v1817
    %v1984 = vpop.f32.mrb[0].mxu0
    %v1985 = vadd.f32 %v1811, %v1984
    %v1986 = vpop.f32.mrb[0].mxu0
    %1987 = vmatprep.mubr.f32.mxu0 0.0
    %1988 = vmatmul.mubr.f32.gmra.mrb[0].mxu0 %v1820
    %v1989 = vpop.f32.mrb[0].mxu0
    %v1990 = vadd.f32 %v1811, %v1989
    %v1991 = vpop.f32.mrb[0].mxu0
    %1992 = vmatprep.mubr.f32.mxu0 0.0
    %1993 = vmatmul.mubr.f32.gmra.mrb[0].mxu0 %v1823
    %v1994 = vpop.f32.mrb[0].mxu0
    %v1995 = vadd.f32 %v1811, %v1994
    %v1996 = vpop.f32.mrb[0].mxu0
    %1997 = vmatprep.mubr.f32.mxu0 0.0
    %1998 = vmatmul.mubr.f32.gmra.mrb[0].mxu0 %v1826
    %v1999 = vpop.f32.mrb[0].mxu0
    %v2000 = vadd.f32 %v1811, %v1999
    %v2001 = vpop.f32.mrb[0].mxu0
    %2002 = vmatprep.mubr.f32.mxu0 0.0
    %2003 = vmatmul.mubr.f32.gmra.mrb[0].mxu0 %v1829
    %v2004 = vpop.f32.mrb[0].mxu0
    %v2005 = vadd.f32 %v1811, %v2004
    %v2006 = vpop.f32.mrb[0].mxu0
    %2007 = vmatprep.mubr.f32.mxu0 0.0
    %2008 = vmatmul.mubr.f32.gmra.mrb[0].mxu0 %v1832
    %v2009 = vpop.f32.mrb[0].mxu0
    %v2010 = vadd.f32 %v1811, %v2009
    %v2011 = vpop.f32.mrb[0].mxu0
    %2012 = vmatprep.mubr.f32.mxu0 0.0
    %2013 = vmatmul.mubr.f32.gmra.mrb[0].mxu0 %v1835
    %v2014 = vpop.f32.mrb[0].mxu0
    %v2015 = vadd.f32 %v1811, %v2014
    %v2016 = vpop.f32.mrb[0].mxu0
    %2017 = vmatprep.mubr.f32.mxu0 0.0
    %2018 = vmatmul.mubr.f32.gmra.mrb[0].mxu0 %v1838
    %v2019 = vpop.f32.mrb[0].mxu0
    %v2020 = vadd.f32 %v1811, %v2019
    %v2021 = vpop.f32.mrb[0].mxu0
    %2022 = vmatprep.mubr.f32.mxu0 0.0
    %2023 = vmatmul.mubr.f32.gmra.mrb[0].mxu0 %v1841
    %v2024 = vpop.f32.mrb[0].mxu0
    %v2025 = vadd.f32 %v1811, %v2024
    %v2026 = vpop.f32.mrb[0].mxu0
    %2027 = vmatprep.mubr.f32.mxu0 0.0
    %2028 = vmatmul.mubr.f32.gmra.mrb[0].mxu0 %v1844
    %v2029 = vpop.f32.mrb[0].mxu0
    %v2030 = vadd.f32 %v1811, %v2029
    %v2031 = vpop.f32.mrb[0].mxu0
    %2032 = vmatprep.mubr.f32.mxu0 0.0
    %2033 = vmatmul.mubr.f32.gmra.mrb[0].mxu0 %v1847
    %v2034 = vpop.f32.mrb[0].mxu0
    %v2035 = vadd.f32 %v1811, %v2034
    %v2036 = vpop.f32.mrb[0].mxu0
    %2037 = vmatprep.mubr.f32.mxu0 0.0
    %2038 = vmatmul.mubr.f32.gmra.mrb[0].mxu0 %v1850
    %v2039 = vpop.f32.mrb[0].mxu0
    %v2040 = vadd.f32 %v1811, %v2039
    %v2041 = vpop.f32.mrb[0].mxu0
    %2042 = vmatprep.mubr.f32.mxu0 0.0
    %2043 = vmatmul.mubr.f32.gmra.mrb[0].mxu0 %v1853
    %v2044 = vpop.f32.mrb[0].mxu0
    %v2045 = vadd.f32 %v1811, %v2044
    %v2046 = vpop.f32.mrb[0].mxu0
    %2047 = vmatprep.mubr.f32.mxu0 0.0
    %2048 = vmatmul.mubr.f32.gmra.mrb[0].mxu0 %v1856
    %v2049 = vpop.f32.mrb[0].mxu0
    %v2050 = vadd.f32 %v1811, %v2049
    %v2051 = vpop.f32.mrb[0].mxu0
    %2052 = vmatprep.mubr.f32.mxu0 0.0
    %2053 = vmatmul.mubr.f32.gmra.mrb[0].mxu0 %v1859
    %v2054 = vpop.f32.mrb[0].mxu0
    %v2055 = vadd.f32 %v1811, %v2054
    %v2056 = vpop.f32.mrb[0].mxu0
    %2057 = vmatprep.mubr.f32.mxu0 0.0
    %2058 = vmatmul.mubr.f32.gmra.mrb[0].mxu0 %v1862
    %v2059 = vpop.f32.mrb[0].mxu0
    %v2060 = vadd.f32 %v1811, %v2059
    %v2061 = vpop.f32.mrb[0].mxu0
    %2062 = vmatprep.mubr.f32.mxu0 0.0
    %2063 = vmatmul.mubr.f32.gmra.mrb[0].mxu0 %v1865
    %v2064 = vpop.f32.mrb[0].mxu0
    %v2065 = vadd.f32 %v1811, %v2064
    %v2066 = vpop.f32.mrb[0].mxu0
    %2067 = vmatprep.mubr.f32.mxu0 0.0
    %2068 = vmatmul.mubr.f32.gmra.mrb[0].mxu0 %v1868
    %v2069 = vpop.f32.mrb[0].mxu0
    %v2070 = vadd.f32 %v1811, %v2069
    %v2071 = vpop.f32.mrb[0].mxu0
    %2072 = vmatprep.mubr.f32.mxu0 0.0
    %2073 = vmatmul.mubr.f32.gmra.mrb[0].mxu0 %v1871
    %v2074 = vpop.f32.mrb[0].mxu0
    %v2075 = vadd.f32 %v1811, %v2074
    %v2076 = vpop.f32.mrb[0].mxu0
    %2077 = vmatprep.mubr.f32.mxu0 0.0
    %2078 = vmatmul.mubr.f32.gmra.mrb[0].mxu0 %v1874
    %v2079 = vpop.f32.mrb[0].mxu0
    %v2080 = vadd.f32 %v1811, %v2079
    %v2081 = vpop.f32.mrb[0].mxu0
    %2082 = vmatprep.mubr.f32.mxu0 0.0
    %2083 = vmatmul.mubr.f32.gmra.mrb[0].mxu0 %v1877
    %v2084 = vpop.f32.mrb[0].mxu0
    %v2085 = vadd.f32 %v1811, %v2084
    %v2086 = vpop.f32.mrb[0].mxu0
    %2087 = vmatprep.mubr.f32.mxu0 0.0
    %2088 = vmatmul.mubr.f32.gmra.mrb[0].mxu0 %v1880
    %v2089 = vpop.f32.mrb[0].mxu0
    %v2090 = vadd.f32 %v1811, %v2089
    %v2091 = vpop.f32.mrb[0].mxu0
    %2092 = vmatprep.mubr.f32.mxu0 0.0
    %2093 = vmatmul.mubr.f32.gmra.mrb[0].mxu0 %v1883
    %v2094 = vpop.f32.mrb[0].mxu0
    %v2095 = vadd.f32 %v1811, %v2094
    %v2096 = vpop.f32.mrb[0].mxu0
    %2097 = vmatprep.mubr.f32.mxu0 0.0
    %2098 = vmatmul.mubr.f32.gmra.mrb[0].mxu0 %v1886
    %v2099 = vpop.f32.mrb[0].mxu0
    %v2100 = vadd.f32 %v1811, %v2099
    %v2101 = vpop.f32.mrb[0].mxu0
    %2102 = vmatprep.mubr.f32.mxu0 0.0
    %2103 = vmatmul.mubr.f32.gmra.mrb[0].mxu0 %v1889
    %v2104 = vpop.f32.mrb[0].mxu0
    %v2105 = vadd.f32 %v1811, %v2104
    %v2106 = vpop.f32.mrb[0].mxu0
    %2107 = vmatprep.mubr.f32.mxu0 0.0
    %2108 = vmatmul.mubr.f32.gmra.mrb[0].mxu0 %v1892
    %v2109 = vpop.f32.mrb[0].mxu0
    %v2110 = vadd.f32 %v1811, %v2109
    %v2111 = vpop.f32.mrb[0].mxu0
    %2112 = vmatprep.mubr.f32.mxu0 0.0
    %2113 = vmatmul.mubr.f32.gmra.mrb[0].mxu0 %v1895
    %v2114 = vpop.f32.mrb[0].mxu0
    %v2115 = vadd.f32 %v1811, %v2114
    %v2116 = vpop.f32.mrb[0].mxu0
    %2117 = vmatprep.mubr.f32.mxu0 0.0
    %2118 = vmatmul.mubr.f32.gmra.mrb[0].mxu0 %v1898
    %v2119 = vpop.f32.mrb[0].mxu0
    %v2120 = vadd.f32 %v1811, %v2119
    %v2121 = vpop.f32.mrb[0].mxu0
    %2122 = vmatprep.mubr.f32.mxu0 0.0
    %2123 = vmatmul.mubr.f32.gmra.mrb[0].mxu0 %v1901
    %v2124 = vpop.f32.mrb[0].mxu0
    %v2125 = vadd.f32 %v1811, %v2124
    %v2126 = vpop.f32.mrb[0].mxu0
    %2127 = vmatprep.mubr.f32.mxu0 0.0
    %2128 = vmatmul.mubr.f32.gmra.mrb[0].mxu0 %v1904
    %v2129 = vpop.f32.mrb[0].mxu0
    %v2130 = vadd.f32 %v1811, %v2129
    %v2131 = vpop.f32.mrb[0].mxu0
    %2132 = vmatprep.mubr.f32.mxu0 0.0
    %2133 = vmatmul.mubr.f32.gmra.mrb[0].mxu0 %v1907
    %v2134 = vpop.f32.mrb[0].mxu0
    %v2135 = vadd.f32 %v1811, %v2134
    %v2136 = vpop.f32.mrb[0].mxu0
    %2137 = vdwg.mxu0
    %v2138 = vadd.f32 %v1980, %v41
    %v2139 = vadd.f32 %v1985, %v42
    %v2140 = vadd.f32 %v1990, %v43
    %v2141 = vadd.f32 %v1995, %v44
    %v2142 = vadd.f32 %v2000, %v45
    %v2143 = vadd.f32 %v2005, %v46
    %v2144 = vadd.f32 %v2010, %v47
    %v2145 = vadd.f32 %v2015, %v48
    %v2146 = vadd.f32 %v2020, %v49
    %v2147 = vadd.f32 %v2025, %v50
    %v2148 = vadd.f32 %v2030, %v51
    %v2149 = vadd.f32 %v2035, %v52
    %v2150 = vadd.f32 %v2040, %v53
    %v2151 = vadd.f32 %v2045, %v54
    %v2152 = vadd.f32 %v2050, %v55
    %v2153 = vadd.f32 %v2055, %v56
    %v2154 = vadd.f32 %v2060, %v57
    %v2155 = vadd.f32 %v2065, %v58
    %v2156 = vadd.f32 %v2070, %v59
    %v2157 = vadd.f32 %v2075, %v60
    %v2158 = vadd.f32 %v2080, %v61
    %v2159 = vadd.f32 %v2085, %v62
    %v2160 = vadd.f32 %v2090, %v63
    %v2161 = vadd.f32 %v2095, %v64
    %v2162 = vadd.f32 %v2100, %v65
    %v2163 = vadd.f32 %v2105, %v66
    %v2164 = vadd.f32 %v2110, %v67
    %v2165 = vadd.f32 %v2115, %v68
    %v2166 = vadd.f32 %v2120, %v69
    %v2167 = vadd.f32 %v2125, %v70
    %v2168 = vadd.f32 %v2130, %v71
    %v2169 = vadd.f32 %v2135, %v72
    %v2170 = vmax.f32 %v2138, 0.0
    %v2171 = vmax.f32 %v2139, 0.0
    %v2172 = vmax.f32 %v2140, 0.0
    %v2173 = vmax.f32 %v2141, 0.0
    %v2174 = vmax.f32 %v2142, 0.0
    %v2175 = vmax.f32 %v2143, 0.0
    %v2176 = vmax.f32 %v2144, 0.0
    %v2177 = vmax.f32 %v2145, 0.0
    %v2178 = vmax.f32 %v2146, 0.0
    %v2179 = vmax.f32 %v2147, 0.0
    %v2180 = vmax.f32 %v2148, 0.0
    %v2181 = vmax.f32 %v2149, 0.0
    %v2182 = vmax.f32 %v2150, 0.0
    %v2183 = vmax.f32 %v2151, 0.0
    %v2184 = vmax.f32 %v2152, 0.0
    %v2185 = vmax.f32 %v2153, 0.0
    %v2186 = vmax.f32 %v2154, 0.0
    %v2187 = vmax.f32 %v2155, 0.0
    %v2188 = vmax.f32 %v2156, 0.0
    %v2189 = vmax.f32 %v2157, 0.0
    %v2190 = vmax.f32 %v2158, 0.0
    %v2191 = vmax.f32 %v2159, 0.0
    %v2192 = vmax.f32 %v2160, 0.0
    %v2193 = vmax.f32 %v2161, 0.0
    %v2194 = vmax.f32 %v2162, 0.0
    %v2195 = vmax.f32 %v2163, 0.0
    %v2196 = vmax.f32 %v2164, 0.0
    %v2197 = vmax.f32 %v2165, 0.0
    %v2198 = vmax.f32 %v2166, 0.0
    %v2199 = vmax.f32 %v2167, 0.0
    %v2200 = vmax.f32 %v2168, 0.0
    %v2201 = vmax.f32 %v2169, 0.0
    %2202 = vst.msk [vmem:[#allocation6] sm:$0xff] %vm114, %v2170
    %2203 = vst.msk [vmem:[#allocation6 + $0x8] sm:$0xff] %vm114, %v2171
    %2204 = vst.msk [vmem:[#allocation6 + $0x10] sm:$0xff] %vm114, %v2172
    %2205 = vst.msk [vmem:[#allocation6 + $0x18] sm:$0xff] %vm114, %v2173
    %2206 = vst.msk [vmem:[#allocation6 + $0x20] sm:$0xff] %vm114, %v2174
    %2207 = vst.msk [vmem:[#allocation6 + $0x28] sm:$0xff] %vm114, %v2175
    %2208 = vst.msk [vmem:[#allocation6 + $0x30] sm:$0xff] %vm114, %v2176
    %2209 = vst.msk [vmem:[#allocation6 + $0x38] sm:$0xff] %vm114, %v2177
    %2210 = vst.msk [vmem:[#allocation6 + $0x40] sm:$0xff] %vm114, %v2178
    %2211 = vst.msk [vmem:[#allocation6 + $0x48] sm:$0xff] %vm114, %v2179
    %2212 = vst.msk [vmem:[#allocation6 + $0x50] sm:$0xff] %vm114, %v2180
    %2213 = vst.msk [vmem:[#allocation6 + $0x58] sm:$0xff] %vm114, %v2181
    %2214 = vst.msk [vmem:[#allocation6 + $0x60] sm:$0xff] %vm114, %v2182
    %2215 = vst.msk [vmem:[#allocation6 + $0x68] sm:$0xff] %vm114, %v2183
    %2216 = vst.msk [vmem:[#allocation6 + $0x70] sm:$0xff] %vm114, %v2184
    %2217 = vst.msk [vmem:[#allocation6 + $0x78] sm:$0xff] %vm114, %v2185
    %2218 = vst.msk [vmem:[#allocation6 + $0x80] sm:$0xff] %vm114, %v2186
    %2219 = vst.msk [vmem:[#allocation6 + $0x88] sm:$0xff] %vm114, %v2187
    %2220 = vst.msk [vmem:[#allocation6 + $0x90] sm:$0xff] %vm114, %v2188
    %2221 = vst.msk [vmem:[#allocation6 + $0x98] sm:$0xff] %vm114, %v2189
    %2222 = vst.msk [vmem:[#allocation6 + $0xa0] sm:$0xff] %vm114, %v2190
    %2223 = vst.msk [vmem:[#allocation6 + $0xa8] sm:$0xff] %vm114, %v2191
    %2224 = vst.msk [vmem:[#allocation6 + $0xb0] sm:$0xff] %vm114, %v2192
    %2225 = vst.msk [vmem:[#allocation6 + $0xb8] sm:$0xff] %vm114, %v2193
    %2226 = vst.msk [vmem:[#allocation6 + $0xc0] sm:$0xff] %vm114, %v2194
    %2227 = vst.msk [vmem:[#allocation6 + $0xc8] sm:$0xff] %vm114, %v2195
    %2228 = vst.msk [vmem:[#allocation6 + $0xd0] sm:$0xff] %vm114, %v2196
    %2229 = vst.msk [vmem:[#allocation6 + $0xd8] sm:$0xff] %vm114, %v2197
    %2230 = vst.msk [vmem:[#allocation6 + $0xe0] sm:$0xff] %vm114, %v2198
    %2231 = vst.msk [vmem:[#allocation6 + $0xe8] sm:$0xff] %vm114, %v2199
    %2232 = vst.msk [vmem:[#allocation6 + $0xf0] sm:$0xff] %vm114, %v2200
    %2233 = vst.msk [vmem:[#allocation6 + $0xf8] sm:$0xff] %vm114, %v2201
    %2234 = vst.msk [vmem:[%s770 + $0x1] sm:$0xff] %vm761, %v724
    %2235 = vst.msk [vmem:[%s770 + $0x9] sm:$0xff] %vm761, %v725
    %2236 = vst.msk [vmem:[%s770 + $0x19] sm:$0xff] %vm761, %v726
    %2237 = vst.msk [vmem:[%s770 + $0x21] sm:$0xff] %vm761, %v727
    %2238 = vst.msk [vmem:[%s770 + $0x31] sm:$0xff] %vm761, %v728
    %2239 = vst.msk [vmem:[%s770 + $0x39] sm:$0xff] %vm761, %v729
    %2240 = vst.msk [vmem:[%s770 + $0x49] sm:$0xff] %vm761, %v730
    %2241 = vst.msk [vmem:[%s770 + $0x51] sm:$0xff] %vm761, %v731
    %2242 = vst.msk [vmem:[%s770 + $0x61] sm:$0xff] %vm761, %v732
    %2243 = vst.msk [vmem:[%s770 + $0x69] sm:$0xff] %vm761, %v733
    %2244 = vst.msk [vmem:[%s770 + $0x79] sm:$0xff] %vm761, %v734
    %2245 = vst.msk [vmem:[%s770 + $0x81] sm:$0xff] %vm761, %v735
    %2246 = vst.msk [vmem:[%s770 + $0x91] sm:$0xff] %vm761, %v736
    %2247 = vst.msk [vmem:[%s770 + $0x99] sm:$0xff] %vm761, %v737
    %2248 = vst.msk [vmem:[%s770 + $0xa9] sm:$0xff] %vm761, %v738
    %2249 = vst.msk [vmem:[%s770 + $0xb1] sm:$0xff] %vm761, %v739
    %2250 = vst.msk [vmem:[%s770 + $0xc1] sm:$0xff] %vm761, %v740
    %2251 = vst.msk [vmem:[%s770 + $0xc9] sm:$0xff] %vm761, %v741
    %2252 = vst.msk [vmem:[%s770 + $0xd9] sm:$0xff] %vm761, %v742
    %2253 = vst.msk [vmem:[%s770 + $0xe1] sm:$0xff] %vm761, %v743
    %2254 = vst.msk [vmem:[%s770 + $0xf1] sm:$0xff] %vm761, %v744
    %2255 = vst.msk [vmem:[%s770 + $0xf9] sm:$0xff] %vm761, %v745
    %2256 = vst.msk [vmem:[%s770 + $0x109] sm:$0xff] %vm761, %v746
    %2257 = vst.msk [vmem:[%s770 + $0x111] sm:$0xff] %vm761, %v747
    %2258 = vst.msk [vmem:[%s770 + $0x121] sm:$0xff] %vm761, %v748
    %2259 = vst.msk [vmem:[%s770 + $0x129] sm:$0xff] %vm761, %v749
    %2260 = vst.msk [vmem:[%s770 + $0x139] sm:$0xff] %vm761, %v750
    %2261 = vst.msk [vmem:[%s770 + $0x141] sm:$0xff] %vm761, %v751
    %2262 = vst.msk [vmem:[%s770 + $0x151] sm:$0xff] %vm761, %v752
    %2263 = vst.msk [vmem:[%s770 + $0x159] sm:$0xff] %vm761, %v753
    %2264 = vst.msk [vmem:[%s770 + $0x169] sm:$0xff] %vm761, %v754
    %2265 = vst.msk [vmem:[%s770 + $0x171] sm:$0xff] %vm761, %v755
    %v2266 = vld [vmem:[#allocation2] sm:$0xff]
    %v2267 = vld [vmem:[#allocation2 + $0x8] sm:$0xff]
    %v2268 = vld [vmem:[#allocation2 + $0x18] sm:$0xff]
    %v2269 = vld [vmem:[#allocation2 + $0x20] sm:$0xff]
    %v2270 = vld [vmem:[#allocation2 + $0x30] sm:$0xff]
    %v2271 = vld [vmem:[#allocation2 + $0x38] sm:$0xff]
    %v2272 = vld [vmem:[#allocation2 + $0x48] sm:$0xff]
    %v2273 = vld [vmem:[#allocation2 + $0x50] sm:$0xff]
    %v2274 = vld [vmem:[#allocation2 + $0x60] sm:$0xff]
    %v2275 = vld [vmem:[#allocation2 + $0x68] sm:$0xff]
    %v2276 = vld [vmem:[#allocation2 + $0x78] sm:$0xff]
    %v2277 = vld [vmem:[#allocation2 + $0x80] sm:$0xff]
    %v2278 = vld [vmem:[#allocation2 + $0x90] sm:$0xff]
    %v2279 = vld [vmem:[#allocation2 + $0x98] sm:$0xff]
    %v2280 = vld [vmem:[#allocation2 + $0xa8] sm:$0xff]
    %v2281 = vld [vmem:[#allocation2 + $0xb0] sm:$0xff]
    %v2282 = vld [vmem:[#allocation2 + $0xc0] sm:$0xff]
    %v2283 = vld [vmem:[#allocation2 + $0xc8] sm:$0xff]
    %v2284 = vld [vmem:[#allocation2 + $0xd8] sm:$0xff]
    %v2285 = vld [vmem:[#allocation2 + $0xe0] sm:$0xff]
    %v2286 = vld [vmem:[#allocation2 + $0xf0] sm:$0xff]
    %v2287 = vld [vmem:[#allocation2 + $0xf8] sm:$0xff]
    %v2288 = vld [vmem:[#allocation2 + $0x108] sm:$0xff]
    %v2289 = vld [vmem:[#allocation2 + $0x110] sm:$0xff]
    %v2290 = vld [vmem:[#allocation2 + $0x120] sm:$0xff]
    %v2291 = vld [vmem:[#allocation2 + $0x128] sm:$0xff]
    %v2292 = vld [vmem:[#allocation2 + $0x138] sm:$0xff]
    %v2293 = vld [vmem:[#allocation2 + $0x140] sm:$0xff]
    %v2294 = vld [vmem:[#allocation2 + $0x150] sm:$0xff]
    %v2295 = vld [vmem:[#allocation2 + $0x158] sm:$0xff]
    %v2296 = vld [vmem:[#allocation2 + $0x168] sm:$0xff]
    %v2297 = vld [vmem:[#allocation2 + $0x170] sm:$0xff]
    %v2298 = vmul.f32 %v2266, %v871
    %v2299 = vmul.f32 %v2267, %v871
    %v2300 = vmul.f32 %v2268, %v871
    %v2301 = vmul.f32 %v2269, %v871
    %v2302 = vmul.f32 %v2270, %v871
    %v2303 = vmul.f32 %v2271, %v871
    %v2304 = vmul.f32 %v2272, %v871
    %v2305 = vmul.f32 %v2273, %v871
    %v2306 = vmul.f32 %v2274, %v871
    %v2307 = vmul.f32 %v2275, %v871
    %v2308 = vmul.f32 %v2276, %v871
    %v2309 = vmul.f32 %v2277, %v871
    %v2310 = vmul.f32 %v2278, %v871
    %v2311 = vmul.f32 %v2279, %v871
    %v2312 = vmul.f32 %v2280, %v871
    %v2313 = vmul.f32 %v2281, %v871
    %v2314 = vmul.f32 %v2282, %v871
    %v2315 = vmul.f32 %v2283, %v871
    %v2316 = vmul.f32 %v2284, %v871
    %v2317 = vmul.f32 %v2285, %v871
    %v2318 = vmul.f32 %v2286, %v871
    %v2319 = vmul.f32 %v2287, %v871
    %v2320 = vmul.f32 %v2288, %v871
    %v2321 = vmul.f32 %v2289, %v871
    %v2322 = vmul.f32 %v2290, %v871
    %v2323 = vmul.f32 %v2291, %v871
    %v2324 = vmul.f32 %v2292, %v871
    %v2325 = vmul.f32 %v2293, %v871
    %v2326 = vmul.f32 %v2294, %v871
    %v2327 = vmul.f32 %v2295, %v871
    %v2328 = vmul.f32 %v2296, %v871
    %v2329 = vmul.f32 %v2297, %v871
    %v2330 = vadd.f32 %v2298, 0.0
    %v2331 = vadd.f32 %v2299, 0.0
    %v2332 = vadd.f32 %v2300, 0.0
    %v2333 = vadd.f32 %v2301, 0.0
    %v2334 = vadd.f32 %v2302, 0.0
    %v2335 = vadd.f32 %v2303, 0.0
    %v2336 = vadd.f32 %v2304, 0.0
    %v2337 = vadd.f32 %v2305, 0.0
    %v2338 = vadd.f32 %v2306, 0.0
    %v2339 = vadd.f32 %v2307, 0.0
    %v2340 = vadd.f32 %v2308, 0.0
    %v2341 = vadd.f32 %v2309, 0.0
    %v2342 = vadd.f32 %v2310, 0.0
    %v2343 = vadd.f32 %v2311, 0.0
    %v2344 = vadd.f32 %v2312, 0.0
    %v2345 = vadd.f32 %v2313, 0.0
    %v2346 = vadd.f32 %v2314, 0.0
    %v2347 = vadd.f32 %v2315, 0.0
    %v2348 = vadd.f32 %v2316, 0.0
    %v2349 = vadd.f32 %v2317, 0.0
    %v2350 = vadd.f32 %v2318, 0.0
    %v2351 = vadd.f32 %v2319, 0.0
    %v2352 = vadd.f32 %v2320, 0.0
    %v2353 = vadd.f32 %v2321, 0.0
    %v2354 = vadd.f32 %v2322, 0.0
    %v2355 = vadd.f32 %v2323, 0.0
    %v2356 = vadd.f32 %v2324, 0.0
    %v2357 = vadd.f32 %v2325, 0.0
    %v2358 = vadd.f32 %v2326, 0.0
    %v2359 = vadd.f32 %v2327, 0.0
    %v2360 = vadd.f32 %v2328, 0.0
    %v2361 = vadd.f32 %v2329, 0.0
    %v2362 = vld [vmem:[#allocation2 + $0x1] sm:$0xff]
    %v2363 = vld [vmem:[#allocation2 + $0x9] sm:$0xff]
    %v2364 = vld [vmem:[#allocation2 + $0x19] sm:$0xff]
    %v2365 = vld [vmem:[#allocation2 + $0x21] sm:$0xff]
    %v2366 = vld [vmem:[#allocation2 + $0x31] sm:$0xff]
    %v2367 = vld [vmem:[#allocation2 + $0x39] sm:$0xff]
    %v2368 = vld [vmem:[#allocation2 + $0x49] sm:$0xff]
    %v2369 = vld [vmem:[#allocation2 + $0x51] sm:$0xff]
    %v2370 = vld [vmem:[#allocation2 + $0x61] sm:$0xff]
    %v2371 = vld [vmem:[#allocation2 + $0x69] sm:$0xff]
    %v2372 = vld [vmem:[#allocation2 + $0x79] sm:$0xff]
    %v2373 = vld [vmem:[#allocation2 + $0x81] sm:$0xff]
    %v2374 = vld [vmem:[#allocation2 + $0x91] sm:$0xff]
    %v2375 = vld [vmem:[#allocation2 + $0x99] sm:$0xff]
    %v2376 = vld [vmem:[#allocation2 + $0xa9] sm:$0xff]
    %v2377 = vld [vmem:[#allocation2 + $0xb1] sm:$0xff]
    %v2378 = vld [vmem:[#allocation2 + $0xc1] sm:$0xff]
    %v2379 = vld [vmem:[#allocation2 + $0xc9] sm:$0xff]
    %v2380 = vld [vmem:[#allocation2 + $0xd9] sm:$0xff]
    %v2381 = vld [vmem:[#allocation2 + $0xe1] sm:$0xff]
    %v2382 = vld [vmem:[#allocation2 + $0xf1] sm:$0xff]
    %v2383 = vld [vmem:[#allocation2 + $0xf9] sm:$0xff]
    %v2384 = vld [vmem:[#allocation2 + $0x109] sm:$0xff]
    %v2385 = vld [vmem:[#allocation2 + $0x111] sm:$0xff]
    %v2386 = vld [vmem:[#allocation2 + $0x121] sm:$0xff]
    %v2387 = vld [vmem:[#allocation2 + $0x129] sm:$0xff]
    %v2388 = vld [vmem:[#allocation2 + $0x139] sm:$0xff]
    %v2389 = vld [vmem:[#allocation2 + $0x141] sm:$0xff]
    %v2390 = vld [vmem:[#allocation2 + $0x151] sm:$0xff]
    %v2391 = vld [vmem:[#allocation2 + $0x159] sm:$0xff]
    %v2392 = vld [vmem:[#allocation2 + $0x169] sm:$0xff]
    %v2393 = vld [vmem:[#allocation2 + $0x171] sm:$0xff]
    %v2394 = vmul.f32 %v2362, %v971
    %v2395 = vmul.f32 %v2363, %v971
    %v2396 = vmul.f32 %v2364, %v971
    %v2397 = vmul.f32 %v2365, %v971
    %v2398 = vmul.f32 %v2366, %v971
    %v2399 = vmul.f32 %v2367, %v971
    %v2400 = vmul.f32 %v2368, %v971
    %v2401 = vmul.f32 %v2369, %v971
    %v2402 = vmul.f32 %v2370, %v971
    %v2403 = vmul.f32 %v2371, %v971
    %v2404 = vmul.f32 %v2372, %v971
    %v2405 = vmul.f32 %v2373, %v971
    %v2406 = vmul.f32 %v2374, %v971
    %v2407 = vmul.f32 %v2375, %v971
    %v2408 = vmul.f32 %v2376, %v971
    %v2409 = vmul.f32 %v2377, %v971
    %v2410 = vmul.f32 %v2378, %v971
    %v2411 = vmul.f32 %v2379, %v971
    %v2412 = vmul.f32 %v2380, %v971
    %v2413 = vmul.f32 %v2381, %v971
    %v2414 = vmul.f32 %v2382, %v971
    %v2415 = vmul.f32 %v2383, %v971
    %v2416 = vmul.f32 %v2384, %v971
    %v2417 = vmul.f32 %v2385, %v971
    %v2418 = vmul.f32 %v2386, %v971
    %v2419 = vmul.f32 %v2387, %v971
    %v2420 = vmul.f32 %v2388, %v971
    %v2421 = vmul.f32 %v2389, %v971
    %v2422 = vmul.f32 %v2390, %v971
    %v2423 = vmul.f32 %v2391, %v971
    %v2424 = vmul.f32 %v2392, %v971
    %v2425 = vmul.f32 %v2393, %v971
    %v2426 = vadd.f32 %v2330, %v2394
    %v2427 = vadd.f32 %v2331, %v2395
    %v2428 = vadd.f32 %v2332, %v2396
    %v2429 = vadd.f32 %v2333, %v2397
    %v2430 = vadd.f32 %v2334, %v2398
    %v2431 = vadd.f32 %v2335, %v2399
    %v2432 = vadd.f32 %v2336, %v2400
    %v2433 = vadd.f32 %v2337, %v2401
    %v2434 = vadd.f32 %v2338, %v2402
    %v2435 = vadd.f32 %v2339, %v2403
    %v2436 = vadd.f32 %v2340, %v2404
    %v2437 = vadd.f32 %v2341, %v2405
    %v2438 = vadd.f32 %v2342, %v2406
    %v2439 = vadd.f32 %v2343, %v2407
    %v2440 = vadd.f32 %v2344, %v2408
    %v2441 = vadd.f32 %v2345, %v2409
    %v2442 = vadd.f32 %v2346, %v2410
    %v2443 = vadd.f32 %v2347, %v2411
    %v2444 = vadd.f32 %v2348, %v2412
    %v2445 = vadd.f32 %v2349, %v2413
    %v2446 = vadd.f32 %v2350, %v2414
    %v2447 = vadd.f32 %v2351, %v2415
    %v2448 = vadd.f32 %v2352, %v2416
    %v2449 = vadd.f32 %v2353, %v2417
    %v2450 = vadd.f32 %v2354, %v2418
    %v2451 = vadd.f32 %v2355, %v2419
    %v2452 = vadd.f32 %v2356, %v2420
    %v2453 = vadd.f32 %v2357, %v2421
    %v2454 = vadd.f32 %v2358, %v2422
    %v2455 = vadd.f32 %v2359, %v2423
    %v2456 = vadd.f32 %v2360, %v2424
    %v2457 = vadd.f32 %v2361, %v2425
    %v2458 = vld [vmem:[#allocation2 + $0x2] sm:$0xff]
    %v2459 = vld [vmem:[#allocation2 + $0xa] sm:$0xff]
    %v2460 = vld [vmem:[#allocation2 + $0x1a] sm:$0xff]
    %v2461 = vld [vmem:[#allocation2 + $0x22] sm:$0xff]
    %v2462 = vld [vmem:[#allocation2 + $0x32] sm:$0xff]
    %v2463 = vld [vmem:[#allocation2 + $0x3a] sm:$0xff]
    %v2464 = vld [vmem:[#allocation2 + $0x4a] sm:$0xff]
    %v2465 = vld [vmem:[#allocation2 + $0x52] sm:$0xff]
    %v2466 = vld [vmem:[#allocation2 + $0x62] sm:$0xff]
    %v2467 = vld [vmem:[#allocation2 + $0x6a] sm:$0xff]
    %v2468 = vld [vmem:[#allocation2 + $0x7a] sm:$0xff]
    %v2469 = vld [vmem:[#allocation2 + $0x82] sm:$0xff]
    %v2470 = vld [vmem:[#allocation2 + $0x92] sm:$0xff]
    %v2471 = vld [vmem:[#allocation2 + $0x9a] sm:$0xff]
    %v2472 = vld [vmem:[#allocation2 + $0xaa] sm:$0xff]
    %v2473 = vld [vmem:[#allocation2 + $0xb2] sm:$0xff]
    %v2474 = vld [vmem:[#allocation2 + $0xc2] sm:$0xff]
    %v2475 = vld [vmem:[#allocation2 + $0xca] sm:$0xff]
    %v2476 = vld [vmem:[#allocation2 + $0xda] sm:$0xff]
    %v2477 = vld [vmem:[#allocation2 + $0xe2] sm:$0xff]
    %v2478 = vld [vmem:[#allocation2 + $0xf2] sm:$0xff]
    %v2479 = vld [vmem:[#allocation2 + $0xfa] sm:$0xff]
    %v2480 = vld [vmem:[#allocation2 + $0x10a] sm:$0xff]
    %v2481 = vld [vmem:[#allocation2 + $0x112] sm:$0xff]
    %v2482 = vld [vmem:[#allocation2 + $0x122] sm:$0xff]
    %v2483 = vld [vmem:[#allocation2 + $0x12a] sm:$0xff]
    %v2484 = vld [vmem:[#allocation2 + $0x13a] sm:$0xff]
    %v2485 = vld [vmem:[#allocation2 + $0x142] sm:$0xff]
    %v2486 = vld [vmem:[#allocation2 + $0x152] sm:$0xff]
    %v2487 = vld [vmem:[#allocation2 + $0x15a] sm:$0xff]
    %v2488 = vld [vmem:[#allocation2 + $0x16a] sm:$0xff]
    %v2489 = vld [vmem:[#allocation2 + $0x172] sm:$0xff]
    %v2490 = vmul.f32 %v2458, %v1071
    %v2491 = vmul.f32 %v2459, %v1071
    %v2492 = vmul.f32 %v2460, %v1071
    %v2493 = vmul.f32 %v2461, %v1071
    %v2494 = vmul.f32 %v2462, %v1071
    %v2495 = vmul.f32 %v2463, %v1071
    %v2496 = vmul.f32 %v2464, %v1071
    %v2497 = vmul.f32 %v2465, %v1071
    %v2498 = vmul.f32 %v2466, %v1071
    %v2499 = vmul.f32 %v2467, %v1071
    %v2500 = vmul.f32 %v2468, %v1071
    %v2501 = vmul.f32 %v2469, %v1071
    %v2502 = vmul.f32 %v2470, %v1071
    %v2503 = vmul.f32 %v2471, %v1071
    %v2504 = vmul.f32 %v2472, %v1071
    %v2505 = vmul.f32 %v2473, %v1071
    %v2506 = vmul.f32 %v2474, %v1071
    %v2507 = vmul.f32 %v2475, %v1071
    %v2508 = vmul.f32 %v2476, %v1071
    %v2509 = vmul.f32 %v2477, %v1071
    %v2510 = vmul.f32 %v2478, %v1071
    %v2511 = vmul.f32 %v2479, %v1071
    %v2512 = vmul.f32 %v2480, %v1071
    %v2513 = vmul.f32 %v2481, %v1071
    %v2514 = vmul.f32 %v2482, %v1071
    %v2515 = vmul.f32 %v2483, %v1071
    %v2516 = vmul.f32 %v2484, %v1071
    %v2517 = vmul.f32 %v2485, %v1071
    %v2518 = vmul.f32 %v2486, %v1071
    %v2519 = vmul.f32 %v2487, %v1071
    %v2520 = vmul.f32 %v2488, %v1071
    %v2521 = vmul.f32 %v2489, %v1071
    %v2522 = vadd.f32 %v2426, %v2490
    %v2523 = vadd.f32 %v2427, %v2491
    %v2524 = vadd.f32 %v2428, %v2492
    %v2525 = vadd.f32 %v2429, %v2493
    %v2526 = vadd.f32 %v2430, %v2494
    %v2527 = vadd.f32 %v2431, %v2495
    %v2528 = vadd.f32 %v2432, %v2496
    %v2529 = vadd.f32 %v2433, %v2497
    %v2530 = vadd.f32 %v2434, %v2498
    %v2531 = vadd.f32 %v2435, %v2499
    %v2532 = vadd.f32 %v2436, %v2500
    %v2533 = vadd.f32 %v2437, %v2501
    %v2534 = vadd.f32 %v2438, %v2502
    %v2535 = vadd.f32 %v2439, %v2503
    %v2536 = vadd.f32 %v2440, %v2504
    %v2537 = vadd.f32 %v2441, %v2505
    %v2538 = vadd.f32 %v2442, %v2506
    %v2539 = vadd.f32 %v2443, %v2507
    %v2540 = vadd.f32 %v2444, %v2508
    %v2541 = vadd.f32 %v2445, %v2509
    %v2542 = vadd.f32 %v2446, %v2510
    %v2543 = vadd.f32 %v2447, %v2511
    %v2544 = vadd.f32 %v2448, %v2512
    %v2545 = vadd.f32 %v2449, %v2513
    %v2546 = vadd.f32 %v2450, %v2514
    %v2547 = vadd.f32 %v2451, %v2515
    %v2548 = vadd.f32 %v2452, %v2516
    %v2549 = vadd.f32 %v2453, %v2517
    %v2550 = vadd.f32 %v2454, %v2518
    %v2551 = vadd.f32 %v2455, %v2519
    %v2552 = vadd.f32 %v2456, %v2520
    %v2553 = vadd.f32 %v2457, %v2521
    %v2554 = vld [vmem:[%s770] sm:$0xff]
    %v2555 = vld [vmem:[%s770 + $0x8] sm:$0xff]
    %v2556 = vld [vmem:[%s770 + $0x18] sm:$0xff]
    %v2557 = vld [vmem:[%s770 + $0x20] sm:$0xff]
    %v2558 = vld [vmem:[%s770 + $0x30] sm:$0xff]
    %v2559 = vld [vmem:[%s770 + $0x38] sm:$0xff]
    %v2560 = vld [vmem:[%s770 + $0x48] sm:$0xff]
    %v2561 = vld [vmem:[%s770 + $0x50] sm:$0xff]
    %v2562 = vld [vmem:[%s770 + $0x60] sm:$0xff]
    %v2563 = vld [vmem:[%s770 + $0x68] sm:$0xff]
    %v2564 = vld [vmem:[%s770 + $0x78] sm:$0xff]
    %v2565 = vld [vmem:[%s770 + $0x80] sm:$0xff]
    %v2566 = vld [vmem:[%s770 + $0x90] sm:$0xff]
    %v2567 = vld [vmem:[%s770 + $0x98] sm:$0xff]
    %v2568 = vld [vmem:[%s770 + $0xa8] sm:$0xff]
    %v2569 = vld [vmem:[%s770 + $0xb0] sm:$0xff]
    %v2570 = vld [vmem:[%s770 + $0xc0] sm:$0xff]
    %v2571 = vld [vmem:[%s770 + $0xc8] sm:$0xff]
    %v2572 = vld [vmem:[%s770 + $0xd8] sm:$0xff]
    %v2573 = vld [vmem:[%s770 + $0xe0] sm:$0xff]
    %v2574 = vld [vmem:[%s770 + $0xf0] sm:$0xff]
    %v2575 = vld [vmem:[%s770 + $0xf8] sm:$0xff]
    %v2576 = vld [vmem:[%s770 + $0x108] sm:$0xff]
    %v2577 = vld [vmem:[%s770 + $0x110] sm:$0xff]
    %v2578 = vld [vmem:[%s770 + $0x120] sm:$0xff]
    %v2579 = vld [vmem:[%s770 + $0x128] sm:$0xff]
    %v2580 = vld [vmem:[%s770 + $0x138] sm:$0xff]
    %v2581 = vld [vmem:[%s770 + $0x140] sm:$0xff]
    %v2582 = vld [vmem:[%s770 + $0x150] sm:$0xff]
    %v2583 = vld [vmem:[%s770 + $0x158] sm:$0xff]
    %v2584 = vld [vmem:[%s770 + $0x168] sm:$0xff]
    %v2585 = vld [vmem:[%s770 + $0x170] sm:$0xff]
    %v2586 = vmul.f32 %v2554, %v1171
    %v2587 = vmul.f32 %v2555, %v1171
    %v2588 = vmul.f32 %v2556, %v1171
    %v2589 = vmul.f32 %v2557, %v1171
    %v2590 = vmul.f32 %v2558, %v1171
    %v2591 = vmul.f32 %v2559, %v1171
    %v2592 = vmul.f32 %v2560, %v1171
    %v2593 = vmul.f32 %v2561, %v1171
    %v2594 = vmul.f32 %v2562, %v1171
    %v2595 = vmul.f32 %v2563, %v1171
    %v2596 = vmul.f32 %v2564, %v1171
    %v2597 = vmul.f32 %v2565, %v1171
    %v2598 = vmul.f32 %v2566, %v1171
    %v2599 = vmul.f32 %v2567, %v1171
    %v2600 = vmul.f32 %v2568, %v1171
    %v2601 = vmul.f32 %v2569, %v1171
    %v2602 = vmul.f32 %v2570, %v1171
    %v2603 = vmul.f32 %v2571, %v1171
    %v2604 = vmul.f32 %v2572, %v1171
    %v2605 = vmul.f32 %v2573, %v1171
    %v2606 = vmul.f32 %v2574, %v1171
    %v2607 = vmul.f32 %v2575, %v1171
    %v2608 = vmul.f32 %v2576, %v1171
    %v2609 = vmul.f32 %v2577, %v1171
    %v2610 = vmul.f32 %v2578, %v1171
    %v2611 = vmul.f32 %v2579, %v1171
    %v2612 = vmul.f32 %v2580, %v1171
    %v2613 = vmul.f32 %v2581, %v1171
    %v2614 = vmul.f32 %v2582, %v1171
    %v2615 = vmul.f32 %v2583, %v1171
    %v2616 = vmul.f32 %v2584, %v1171
    %v2617 = vmul.f32 %v2585, %v1171
    %v2618 = vadd.f32 %v2522, %v2586
    %v2619 = vadd.f32 %v2523, %v2587
    %v2620 = vadd.f32 %v2524, %v2588
    %v2621 = vadd.f32 %v2525, %v2589
    %v2622 = vadd.f32 %v2526, %v2590
    %v2623 = vadd.f32 %v2527, %v2591
    %v2624 = vadd.f32 %v2528, %v2592
    %v2625 = vadd.f32 %v2529, %v2593
    %v2626 = vadd.f32 %v2530, %v2594
    %v2627 = vadd.f32 %v2531, %v2595
    %v2628 = vadd.f32 %v2532, %v2596
    %v2629 = vadd.f32 %v2533, %v2597
    %v2630 = vadd.f32 %v2534, %v2598
    %v2631 = vadd.f32 %v2535, %v2599
    %v2632 = vadd.f32 %v2536, %v2600
    %v2633 = vadd.f32 %v2537, %v2601
    %v2634 = vadd.f32 %v2538, %v2602
    %v2635 = vadd.f32 %v2539, %v2603
    %v2636 = vadd.f32 %v2540, %v2604
    %v2637 = vadd.f32 %v2541, %v2605
    %v2638 = vadd.f32 %v2542, %v2606
    %v2639 = vadd.f32 %v2543, %v2607
    %v2640 = vadd.f32 %v2544, %v2608
    %v2641 = vadd.f32 %v2545, %v2609
    %v2642 = vadd.f32 %v2546, %v2610
    %v2643 = vadd.f32 %v2547, %v2611
    %v2644 = vadd.f32 %v2548, %v2612
    %v2645 = vadd.f32 %v2549, %v2613
    %v2646 = vadd.f32 %v2550, %v2614
    %v2647 = vadd.f32 %v2551, %v2615
    %v2648 = vadd.f32 %v2552, %v2616
    %v2649 = vadd.f32 %v2553, %v2617
    %v2650 = vld [vmem:[%s770 + $0x1] sm:$0xff]
    %v2651 = vld [vmem:[%s770 + $0x9] sm:$0xff]
    %v2652 = vld [vmem:[%s770 + $0x19] sm:$0xff]
    %v2653 = vld [vmem:[%s770 + $0x21] sm:$0xff]
    %v2654 = vld [vmem:[%s770 + $0x31] sm:$0xff]
    %v2655 = vld [vmem:[%s770 + $0x39] sm:$0xff]
    %v2656 = vld [vmem:[%s770 + $0x49] sm:$0xff]
    %v2657 = vld [vmem:[%s770 + $0x51] sm:$0xff]
    %v2658 = vld [vmem:[%s770 + $0x61] sm:$0xff]
    %v2659 = vld [vmem:[%s770 + $0x69] sm:$0xff]
    %v2660 = vld [vmem:[%s770 + $0x79] sm:$0xff]
    %v2661 = vld [vmem:[%s770 + $0x81] sm:$0xff]
    %v2662 = vld [vmem:[%s770 + $0x91] sm:$0xff]
    %v2663 = vld [vmem:[%s770 + $0x99] sm:$0xff]
    %v2664 = vld [vmem:[%s770 + $0xa9] sm:$0xff]
    %v2665 = vld [vmem:[%s770 + $0xb1] sm:$0xff]
    %v2666 = vld [vmem:[%s770 + $0xc1] sm:$0xff]
    %v2667 = vld [vmem:[%s770 + $0xc9] sm:$0xff]
    %v2668 = vld [vmem:[%s770 + $0xd9] sm:$0xff]
    %v2669 = vld [vmem:[%s770 + $0xe1] sm:$0xff]
    %v2670 = vld [vmem:[%s770 + $0xf1] sm:$0xff]
    %v2671 = vld [vmem:[%s770 + $0xf9] sm:$0xff]
    %v2672 = vld [vmem:[%s770 + $0x109] sm:$0xff]
    %v2673 = vld [vmem:[%s770 + $0x111] sm:$0xff]
    %v2674 = vld [vmem:[%s770 + $0x121] sm:$0xff]
    %v2675 = vld [vmem:[%s770 + $0x129] sm:$0xff]
    %v2676 = vld [vmem:[%s770 + $0x139] sm:$0xff]
    %v2677 = vld [vmem:[%s770 + $0x141] sm:$0xff]
    %v2678 = vld [vmem:[%s770 + $0x151] sm:$0xff]
    %v2679 = vld [vmem:[%s770 + $0x159] sm:$0xff]
    %v2680 = vld [vmem:[%s770 + $0x169] sm:$0xff]
    %v2681 = vld [vmem:[%s770 + $0x171] sm:$0xff]
    %v2682 = vmul.f32 %v2650, %v1271
    %v2683 = vmul.f32 %v2651, %v1271
    %v2684 = vmul.f32 %v2652, %v1271
    %v2685 = vmul.f32 %v2653, %v1271
    %v2686 = vmul.f32 %v2654, %v1271
    %v2687 = vmul.f32 %v2655, %v1271
    %v2688 = vmul.f32 %v2656, %v1271
    %v2689 = vmul.f32 %v2657, %v1271
    %v2690 = vmul.f32 %v2658, %v1271
    %v2691 = vmul.f32 %v2659, %v1271
    %v2692 = vmul.f32 %v2660, %v1271
    %v2693 = vmul.f32 %v2661, %v1271
    %v2694 = vmul.f32 %v2662, %v1271
    %v2695 = vmul.f32 %v2663, %v1271
    %v2696 = vmul.f32 %v2664, %v1271
    %v2697 = vmul.f32 %v2665, %v1271
    %v2698 = vmul.f32 %v2666, %v1271
    %v2699 = vmul.f32 %v2667, %v1271
    %v2700 = vmul.f32 %v2668, %v1271
    %v2701 = vmul.f32 %v2669, %v1271
    %v2702 = vmul.f32 %v2670, %v1271
    %v2703 = vmul.f32 %v2671, %v1271
    %v2704 = vmul.f32 %v2672, %v1271
    %v2705 = vmul.f32 %v2673, %v1271
    %v2706 = vmul.f32 %v2674, %v1271
    %v2707 = vmul.f32 %v2675, %v1271
    %v2708 = vmul.f32 %v2676, %v1271
    %v2709 = vmul.f32 %v2677, %v1271
    %v2710 = vmul.f32 %v2678, %v1271
    %v2711 = vmul.f32 %v2679, %v1271
    %v2712 = vmul.f32 %v2680, %v1271
    %v2713 = vmul.f32 %v2681, %v1271
    %v2714 = vadd.f32 %v2618, %v2682
    %v2715 = vadd.f32 %v2619, %v2683
    %v2716 = vadd.f32 %v2620, %v2684
    %v2717 = vadd.f32 %v2621, %v2685
    %v2718 = vadd.f32 %v2622, %v2686
    %v2719 = vadd.f32 %v2623, %v2687
    %v2720 = vadd.f32 %v2624, %v2688
    %v2721 = vadd.f32 %v2625, %v2689
    %v2722 = vadd.f32 %v2626, %v2690
    %v2723 = vadd.f32 %v2627, %v2691
    %v2724 = vadd.f32 %v2628, %v2692
    %v2725 = vadd.f32 %v2629, %v2693
    %v2726 = vadd.f32 %v2630, %v2694
    %v2727 = vadd.f32 %v2631, %v2695
    %v2728 = vadd.f32 %v2632, %v2696
    %v2729 = vadd.f32 %v2633, %v2697
    %v2730 = vadd.f32 %v2634, %v2698
    %v2731 = vadd.f32 %v2635, %v2699
    %v2732 = vadd.f32 %v2636, %v2700
    %v2733 = vadd.f32 %v2637, %v2701
    %v2734 = vadd.f32 %v2638, %v2702
    %v2735 = vadd.f32 %v2639, %v2703
    %v2736 = vadd.f32 %v2640, %v2704
    %v2737 = vadd.f32 %v2641, %v2705
    %v2738 = vadd.f32 %v2642, %v2706
    %v2739 = vadd.f32 %v2643, %v2707
    %v2740 = vadd.f32 %v2644, %v2708
    %v2741 = vadd.f32 %v2645, %v2709
    %v2742 = vadd.f32 %v2646, %v2710
    %v2743 = vadd.f32 %v2647, %v2711
    %v2744 = vadd.f32 %v2648, %v2712
    %v2745 = vadd.f32 %v2649, %v2713
    %v2746 = vld [vmem:[%s770 + $0x2] sm:$0xff]
    %v2747 = vld [vmem:[%s770 + $0xa] sm:$0xff]
    %v2748 = vld [vmem:[%s770 + $0x1a] sm:$0xff]
    %v2749 = vld [vmem:[%s770 + $0x22] sm:$0xff]
    %v2750 = vld [vmem:[%s770 + $0x32] sm:$0xff]
    %v2751 = vld [vmem:[%s770 + $0x3a] sm:$0xff]
    %v2752 = vld [vmem:[%s770 + $0x4a] sm:$0xff]
    %v2753 = vld [vmem:[%s770 + $0x52] sm:$0xff]
    %v2754 = vld [vmem:[%s770 + $0x62] sm:$0xff]
    %v2755 = vld [vmem:[%s770 + $0x6a] sm:$0xff]
    %v2756 = vld [vmem:[%s770 + $0x7a] sm:$0xff]
    %v2757 = vld [vmem:[%s770 + $0x82] sm:$0xff]
    %v2758 = vld [vmem:[%s770 + $0x92] sm:$0xff]
    %v2759 = vld [vmem:[%s770 + $0x9a] sm:$0xff]
    %v2760 = vld [vmem:[%s770 + $0xaa] sm:$0xff]
    %v2761 = vld [vmem:[%s770 + $0xb2] sm:$0xff]
    %v2762 = vld [vmem:[%s770 + $0xc2] sm:$0xff]
    %v2763 = vld [vmem:[%s770 + $0xca] sm:$0xff]
    %v2764 = vld [vmem:[%s770 + $0xda] sm:$0xff]
    %v2765 = vld [vmem:[%s770 + $0xe2] sm:$0xff]
    %v2766 = vld [vmem:[%s770 + $0xf2] sm:$0xff]
    %v2767 = vld [vmem:[%s770 + $0xfa] sm:$0xff]
    %v2768 = vld [vmem:[%s770 + $0x10a] sm:$0xff]
    %v2769 = vld [vmem:[%s770 + $0x112] sm:$0xff]
    %v2770 = vld [vmem:[%s770 + $0x122] sm:$0xff]
    %v2771 = vld [vmem:[%s770 + $0x12a] sm:$0xff]
    %v2772 = vld [vmem:[%s770 + $0x13a] sm:$0xff]
    %v2773 = vld [vmem:[%s770 + $0x142] sm:$0xff]
    %v2774 = vld [vmem:[%s770 + $0x152] sm:$0xff]
    %v2775 = vld [vmem:[%s770 + $0x15a] sm:$0xff]
    %v2776 = vld [vmem:[%s770 + $0x16a] sm:$0xff]
    %v2777 = vld [vmem:[%s770 + $0x172] sm:$0xff]
    %v2778 = vmul.f32 %v2746, %v1371
    %v2779 = vmul.f32 %v2747, %v1371
    %v2780 = vmul.f32 %v2748, %v1371
    %v2781 = vmul.f32 %v2749, %v1371
    %v2782 = vmul.f32 %v2750, %v1371
    %v2783 = vmul.f32 %v2751, %v1371
    %v2784 = vmul.f32 %v2752, %v1371
    %v2785 = vmul.f32 %v2753, %v1371
    %v2786 = vmul.f32 %v2754, %v1371
    %v2787 = vmul.f32 %v2755, %v1371
    %v2788 = vmul.f32 %v2756, %v1371
    %v2789 = vmul.f32 %v2757, %v1371
    %v2790 = vmul.f32 %v2758, %v1371
    %v2791 = vmul.f32 %v2759, %v1371
    %v2792 = vmul.f32 %v2760, %v1371
    %v2793 = vmul.f32 %v2761, %v1371
    %v2794 = vmul.f32 %v2762, %v1371
    %v2795 = vmul.f32 %v2763, %v1371
    %v2796 = vmul.f32 %v2764, %v1371
    %v2797 = vmul.f32 %v2765, %v1371
    %v2798 = vmul.f32 %v2766, %v1371
    %v2799 = vmul.f32 %v2767, %v1371
    %v2800 = vmul.f32 %v2768, %v1371
    %v2801 = vmul.f32 %v2769, %v1371
    %v2802 = vmul.f32 %v2770, %v1371
    %v2803 = vmul.f32 %v2771, %v1371
    %v2804 = vmul.f32 %v2772, %v1371
    %v2805 = vmul.f32 %v2773, %v1371
    %v2806 = vmul.f32 %v2774, %v1371
    %v2807 = vmul.f32 %v2775, %v1371
    %v2808 = vmul.f32 %v2776, %v1371
    %v2809 = vmul.f32 %v2777, %v1371
    %v2810 = vadd.f32 %v2714, %v2778
    %v2811 = vadd.f32 %v2715, %v2779
    %v2812 = vadd.f32 %v2716, %v2780
    %v2813 = vadd.f32 %v2717, %v2781
    %v2814 = vadd.f32 %v2718, %v2782
    %v2815 = vadd.f32 %v2719, %v2783
    %v2816 = vadd.f32 %v2720, %v2784
    %v2817 = vadd.f32 %v2721, %v2785
    %v2818 = vadd.f32 %v2722, %v2786
    %v2819 = vadd.f32 %v2723, %v2787
    %v2820 = vadd.f32 %v2724, %v2788
    %v2821 = vadd.f32 %v2725, %v2789
    %v2822 = vadd.f32 %v2726, %v2790
    %v2823 = vadd.f32 %v2727, %v2791
    %v2824 = vadd.f32 %v2728, %v2792
    %v2825 = vadd.f32 %v2729, %v2793
    %v2826 = vadd.f32 %v2730, %v2794
    %v2827 = vadd.f32 %v2731, %v2795
    %v2828 = vadd.f32 %v2732, %v2796
    %v2829 = vadd.f32 %v2733, %v2797
    %v2830 = vadd.f32 %v2734, %v2798
    %v2831 = vadd.f32 %v2735, %v2799
    %v2832 = vadd.f32 %v2736, %v2800
    %v2833 = vadd.f32 %v2737, %v2801
    %v2834 = vadd.f32 %v2738, %v2802
    %v2835 = vadd.f32 %v2739, %v2803
    %v2836 = vadd.f32 %v2740, %v2804
    %v2837 = vadd.f32 %v2741, %v2805
    %v2838 = vadd.f32 %v2742, %v2806
    %v2839 = vadd.f32 %v2743, %v2807
    %v2840 = vadd.f32 %v2744, %v2808
    %v2841 = vadd.f32 %v2745, %v2809
    %v2842 = vld [vmem:[%s1436] sm:$0xff]
    %v2843 = vld [vmem:[%s1436 + $0x8] sm:$0xff]
    %v2844 = vld [vmem:[%s1436 + $0x18] sm:$0xff]
    %v2845 = vld [vmem:[%s1436 + $0x20] sm:$0xff]
    %v2846 = vld [vmem:[%s1436 + $0x30] sm:$0xff]
    %v2847 = vld [vmem:[%s1436 + $0x38] sm:$0xff]
    %v2848 = vld [vmem:[%s1436 + $0x48] sm:$0xff]
    %v2849 = vld [vmem:[%s1436 + $0x50] sm:$0xff]
    %v2850 = vld [vmem:[%s1436 + $0x60] sm:$0xff]
    %v2851 = vld [vmem:[%s1436 + $0x68] sm:$0xff]
    %v2852 = vld [vmem:[%s1436 + $0x78] sm:$0xff]
    %v2853 = vld [vmem:[%s1436 + $0x80] sm:$0xff]
    %v2854 = vld [vmem:[%s1436 + $0x90] sm:$0xff]
    %v2855 = vld [vmem:[%s1436 + $0x98] sm:$0xff]
    %v2856 = vld [vmem:[%s1436 + $0xa8] sm:$0xff]
    %v2857 = vld [vmem:[%s1436 + $0xb0] sm:$0xff]
    %v2858 = vld [vmem:[%s1436 + $0xc0] sm:$0xff]
    %v2859 = vld [vmem:[%s1436 + $0xc8] sm:$0xff]
    %v2860 = vld [vmem:[%s1436 + $0xd8] sm:$0xff]
    %v2861 = vld [vmem:[%s1436 + $0xe0] sm:$0xff]
    %v2862 = vld [vmem:[%s1436 + $0xf0] sm:$0xff]
    %v2863 = vld [vmem:[%s1436 + $0xf8] sm:$0xff]
    %v2864 = vld [vmem:[%s1436 + $0x108] sm:$0xff]
    %v2865 = vld [vmem:[%s1436 + $0x110] sm:$0xff]
    %v2866 = vld [vmem:[%s1436 + $0x120] sm:$0xff]
    %v2867 = vld [vmem:[%s1436 + $0x128] sm:$0xff]
    %v2868 = vld [vmem:[%s1436 + $0x138] sm:$0xff]
    %v2869 = vld [vmem:[%s1436 + $0x140] sm:$0xff]
    %v2870 = vld [vmem:[%s1436 + $0x150] sm:$0xff]
    %v2871 = vld [vmem:[%s1436 + $0x158] sm:$0xff]
    %v2872 = vld [vmem:[%s1436 + $0x168] sm:$0xff]
    %v2873 = vld [vmem:[%s1436 + $0x170] sm:$0xff]
    %v2874 = vmul.f32 %v2842, %v1472
    %v2875 = vmul.f32 %v2843, %v1472
    %v2876 = vmul.f32 %v2844, %v1472
    %v2877 = vmul.f32 %v2845, %v1472
    %v2878 = vmul.f32 %v2846, %v1472
    %v2879 = vmul.f32 %v2847, %v1472
    %v2880 = vmul.f32 %v2848, %v1472
    %v2881 = vmul.f32 %v2849, %v1472
    %v2882 = vmul.f32 %v2850, %v1472
    %v2883 = vmul.f32 %v2851, %v1472
    %v2884 = vmul.f32 %v2852, %v1472
    %v2885 = vmul.f32 %v2853, %v1472
    %v2886 = vmul.f32 %v2854, %v1472
    %v2887 = vmul.f32 %v2855, %v1472
    %v2888 = vmul.f32 %v2856, %v1472
    %v2889 = vmul.f32 %v2857, %v1472
    %v2890 = vmul.f32 %v2858, %v1472
    %v2891 = vmul.f32 %v2859, %v1472
    %v2892 = vmul.f32 %v2860, %v1472
    %v2893 = vmul.f32 %v2861, %v1472
    %v2894 = vmul.f32 %v2862, %v1472
    %v2895 = vmul.f32 %v2863, %v1472
    %v2896 = vmul.f32 %v2864, %v1472
    %v2897 = vmul.f32 %v2865, %v1472
    %v2898 = vmul.f32 %v2866, %v1472
    %v2899 = vmul.f32 %v2867, %v1472
    %v2900 = vmul.f32 %v2868, %v1472
    %v2901 = vmul.f32 %v2869, %v1472
    %v2902 = vmul.f32 %v2870, %v1472
    %v2903 = vmul.f32 %v2871, %v1472
    %v2904 = vmul.f32 %v2872, %v1472
    %v2905 = vmul.f32 %v2873, %v1472
    %v2906 = vadd.f32 %v2810, %v2874
    %v2907 = vadd.f32 %v2811, %v2875
    %v2908 = vadd.f32 %v2812, %v2876
    %v2909 = vadd.f32 %v2813, %v2877
    %v2910 = vadd.f32 %v2814, %v2878
    %v2911 = vadd.f32 %v2815, %v2879
    %v2912 = vadd.f32 %v2816, %v2880
    %v2913 = vadd.f32 %v2817, %v2881
    %v2914 = vadd.f32 %v2818, %v2882
    %v2915 = vadd.f32 %v2819, %v2883
    %v2916 = vadd.f32 %v2820, %v2884
    %v2917 = vadd.f32 %v2821, %v2885
    %v2918 = vadd.f32 %v2822, %v2886
    %v2919 = vadd.f32 %v2823, %v2887
    %v2920 = vadd.f32 %v2824, %v2888
    %v2921 = vadd.f32 %v2825, %v2889
    %v2922 = vadd.f32 %v2826, %v2890
    %v2923 = vadd.f32 %v2827, %v2891
    %v2924 = vadd.f32 %v2828, %v2892
    %v2925 = vadd.f32 %v2829, %v2893
    %v2926 = vadd.f32 %v2830, %v2894
    %v2927 = vadd.f32 %v2831, %v2895
    %v2928 = vadd.f32 %v2832, %v2896
    %v2929 = vadd.f32 %v2833, %v2897
    %v2930 = vadd.f32 %v2834, %v2898
    %v2931 = vadd.f32 %v2835, %v2899
    %v2932 = vadd.f32 %v2836, %v2900
    %v2933 = vadd.f32 %v2837, %v2901
    %v2934 = vadd.f32 %v2838, %v2902
    %v2935 = vadd.f32 %v2839, %v2903
    %v2936 = vadd.f32 %v2840, %v2904
    %v2937 = vadd.f32 %v2841, %v2905
    %v2938 = vld [vmem:[%s1436 + $0x1] sm:$0xff]
    %v2939 = vld [vmem:[%s1436 + $0x9] sm:$0xff]
    %v2940 = vld [vmem:[%s1436 + $0x19] sm:$0xff]
    %v2941 = vld [vmem:[%s1436 + $0x21] sm:$0xff]
    %v2942 = vld [vmem:[%s1436 + $0x31] sm:$0xff]
    %v2943 = vld [vmem:[%s1436 + $0x39] sm:$0xff]
    %v2944 = vld [vmem:[%s1436 + $0x49] sm:$0xff]
    %v2945 = vld [vmem:[%s1436 + $0x51] sm:$0xff]
    %v2946 = vld [vmem:[%s1436 + $0x61] sm:$0xff]
    %v2947 = vld [vmem:[%s1436 + $0x69] sm:$0xff]
    %v2948 = vld [vmem:[%s1436 + $0x79] sm:$0xff]
    %v2949 = vld [vmem:[%s1436 + $0x81] sm:$0xff]
    %v2950 = vld [vmem:[%s1436 + $0x91] sm:$0xff]
    %v2951 = vld [vmem:[%s1436 + $0x99] sm:$0xff]
    %v2952 = vld [vmem:[%s1436 + $0xa9] sm:$0xff]
    %v2953 = vld [vmem:[%s1436 + $0xb1] sm:$0xff]
    %v2954 = vld [vmem:[%s1436 + $0xc1] sm:$0xff]
    %v2955 = vld [vmem:[%s1436 + $0xc9] sm:$0xff]
    %v2956 = vld [vmem:[%s1436 + $0xd9] sm:$0xff]
    %v2957 = vld [vmem:[%s1436 + $0xe1] sm:$0xff]
    %v2958 = vld [vmem:[%s1436 + $0xf1] sm:$0xff]
    %v2959 = vld [vmem:[%s1436 + $0xf9] sm:$0xff]
    %v2960 = vld [vmem:[%s1436 + $0x109] sm:$0xff]
    %v2961 = vld [vmem:[%s1436 + $0x111] sm:$0xff]
    %v2962 = vld [vmem:[%s1436 + $0x121] sm:$0xff]
    %v2963 = vld [vmem:[%s1436 + $0x129] sm:$0xff]
    %v2964 = vld [vmem:[%s1436 + $0x139] sm:$0xff]
    %v2965 = vld [vmem:[%s1436 + $0x141] sm:$0xff]
    %v2966 = vld [vmem:[%s1436 + $0x151] sm:$0xff]
    %v2967 = vld [vmem:[%s1436 + $0x159] sm:$0xff]
    %v2968 = vld [vmem:[%s1436 + $0x169] sm:$0xff]
    %v2969 = vld [vmem:[%s1436 + $0x171] sm:$0xff]
    %v2970 = vmul.f32 %v2938, %v1572
    %v2971 = vmul.f32 %v2939, %v1572
    %v2972 = vmul.f32 %v2940, %v1572
    %v2973 = vmul.f32 %v2941, %v1572
    %v2974 = vmul.f32 %v2942, %v1572
    %v2975 = vmul.f32 %v2943, %v1572
    %v2976 = vmul.f32 %v2944, %v1572
    %v2977 = vmul.f32 %v2945, %v1572
    %v2978 = vmul.f32 %v2946, %v1572
    %v2979 = vmul.f32 %v2947, %v1572
    %v2980 = vmul.f32 %v2948, %v1572
    %v2981 = vmul.f32 %v2949, %v1572
    %v2982 = vmul.f32 %v2950, %v1572
    %v2983 = vmul.f32 %v2951, %v1572
    %v2984 = vmul.f32 %v2952, %v1572
    %v2985 = vmul.f32 %v2953, %v1572
    %v2986 = vmul.f32 %v2954, %v1572
    %v2987 = vmul.f32 %v2955, %v1572
    %v2988 = vmul.f32 %v2956, %v1572
    %v2989 = vmul.f32 %v2957, %v1572
    %v2990 = vmul.f32 %v2958, %v1572
    %v2991 = vmul.f32 %v2959, %v1572
    %v2992 = vmul.f32 %v2960, %v1572
    %v2993 = vmul.f32 %v2961, %v1572
    %v2994 = vmul.f32 %v2962, %v1572
    %v2995 = vmul.f32 %v2963, %v1572
    %v2996 = vmul.f32 %v2964, %v1572
    %v2997 = vmul.f32 %v2965, %v1572
    %v2998 = vmul.f32 %v2966, %v1572
    %v2999 = vmul.f32 %v2967, %v1572
    %v3000 = vmul.f32 %v2968, %v1572
    %v3001 = vmul.f32 %v2969, %v1572
    %v3002 = vadd.f32 %v2906, %v2970
    %v3003 = vadd.f32 %v2907, %v2971
    %v3004 = vadd.f32 %v2908, %v2972
    %v3005 = vadd.f32 %v2909, %v2973
    %v3006 = vadd.f32 %v2910, %v2974
    %v3007 = vadd.f32 %v2911, %v2975
    %v3008 = vadd.f32 %v2912, %v2976
    %v3009 = vadd.f32 %v2913, %v2977
    %v3010 = vadd.f32 %v2914, %v2978
    %v3011 = vadd.f32 %v2915, %v2979
    %v3012 = vadd.f32 %v2916, %v2980
    %v3013 = vadd.f32 %v2917, %v2981
    %v3014 = vadd.f32 %v2918, %v2982
    %v3015 = vadd.f32 %v2919, %v2983
    %v3016 = vadd.f32 %v2920, %v2984
    %v3017 = vadd.f32 %v2921, %v2985
    %v3018 = vadd.f32 %v2922, %v2986
    %v3019 = vadd.f32 %v2923, %v2987
    %v3020 = vadd.f32 %v2924, %v2988
    %v3021 = vadd.f32 %v2925, %v2989
    %v3022 = vadd.f32 %v2926, %v2990
    %v3023 = vadd.f32 %v2927, %v2991
    %v3024 = vadd.f32 %v2928, %v2992
    %v3025 = vadd.f32 %v2929, %v2993
    %v3026 = vadd.f32 %v2930, %v2994
    %v3027 = vadd.f32 %v2931, %v2995
    %v3028 = vadd.f32 %v2932, %v2996
    %v3029 = vadd.f32 %v2933, %v2997
    %v3030 = vadd.f32 %v2934, %v2998
    %v3031 = vadd.f32 %v2935, %v2999
    %v3032 = vadd.f32 %v2936, %v3000
    %v3033 = vadd.f32 %v2937, %v3001
    %v3034 = vld [vmem:[%s1436 + $0x2] sm:$0xff]
    %v3035 = vld [vmem:[%s1436 + $0xa] sm:$0xff]
    %v3036 = vld [vmem:[%s1436 + $0x1a] sm:$0xff]
    %v3037 = vld [vmem:[%s1436 + $0x22] sm:$0xff]
    %v3038 = vld [vmem:[%s1436 + $0x32] sm:$0xff]
    %v3039 = vld [vmem:[%s1436 + $0x3a] sm:$0xff]
    %v3040 = vld [vmem:[%s1436 + $0x4a] sm:$0xff]
    %v3041 = vld [vmem:[%s1436 + $0x52] sm:$0xff]
    %v3042 = vld [vmem:[%s1436 + $0x62] sm:$0xff]
    %v3043 = vld [vmem:[%s1436 + $0x6a] sm:$0xff]
    %v3044 = vld [vmem:[%s1436 + $0x7a] sm:$0xff]
    %v3045 = vld [vmem:[%s1436 + $0x82] sm:$0xff]
    %v3046 = vld [vmem:[%s1436 + $0x92] sm:$0xff]
    %v3047 = vld [vmem:[%s1436 + $0x9a] sm:$0xff]
    %v3048 = vld [vmem:[%s1436 + $0xaa] sm:$0xff]
    %v3049 = vld [vmem:[%s1436 + $0xb2] sm:$0xff]
    %v3050 = vld [vmem:[%s1436 + $0xc2] sm:$0xff]
    %v3051 = vld [vmem:[%s1436 + $0xca] sm:$0xff]
    %v3052 = vld [vmem:[%s1436 + $0xda] sm:$0xff]
    %v3053 = vld [vmem:[%s1436 + $0xe2] sm:$0xff]
    %v3054 = vld [vmem:[%s1436 + $0xf2] sm:$0xff]
    %v3055 = vld [vmem:[%s1436 + $0xfa] sm:$0xff]
    %v3056 = vld [vmem:[%s1436 + $0x10a] sm:$0xff]
    %v3057 = vld [vmem:[%s1436 + $0x112] sm:$0xff]
    %v3058 = vld [vmem:[%s1436 + $0x122] sm:$0xff]
    %v3059 = vld [vmem:[%s1436 + $0x12a] sm:$0xff]
    %v3060 = vld [vmem:[%s1436 + $0x13a] sm:$0xff]
    %v3061 = vld [vmem:[%s1436 + $0x142] sm:$0xff]
    %v3062 = vld [vmem:[%s1436 + $0x152] sm:$0xff]
    %v3063 = vld [vmem:[%s1436 + $0x15a] sm:$0xff]
    %v3064 = vld [vmem:[%s1436 + $0x16a] sm:$0xff]
    %v3065 = vld [vmem:[%s1436 + $0x172] sm:$0xff]
    %v3066 = vmul.f32 %v3034, %v1672
    %v3067 = vmul.f32 %v3035, %v1672
    %v3068 = vmul.f32 %v3036, %v1672
    %v3069 = vmul.f32 %v3037, %v1672
    %v3070 = vmul.f32 %v3038, %v1672
    %v3071 = vmul.f32 %v3039, %v1672
    %v3072 = vmul.f32 %v3040, %v1672
    %v3073 = vmul.f32 %v3041, %v1672
    %v3074 = vmul.f32 %v3042, %v1672
    %v3075 = vmul.f32 %v3043, %v1672
    %v3076 = vmul.f32 %v3044, %v1672
    %v3077 = vmul.f32 %v3045, %v1672
    %v3078 = vmul.f32 %v3046, %v1672
    %v3079 = vmul.f32 %v3047, %v1672
    %v3080 = vmul.f32 %v3048, %v1672
    %v3081 = vmul.f32 %v3049, %v1672
    %v3082 = vmul.f32 %v3050, %v1672
    %v3083 = vmul.f32 %v3051, %v1672
    %v3084 = vmul.f32 %v3052, %v1672
    %v3085 = vmul.f32 %v3053, %v1672
    %v3086 = vmul.f32 %v3054, %v1672
    %v3087 = vmul.f32 %v3055, %v1672
    %v3088 = vmul.f32 %v3056, %v1672
    %v3089 = vmul.f32 %v3057, %v1672
    %v3090 = vmul.f32 %v3058, %v1672
    %v3091 = vmul.f32 %v3059, %v1672
    %v3092 = vmul.f32 %v3060, %v1672
    %v3093 = vmul.f32 %v3061, %v1672
    %v3094 = vmul.f32 %v3062, %v1672
    %v3095 = vmul.f32 %v3063, %v1672
    %v3096 = vmul.f32 %v3064, %v1672
    %v3097 = vmul.f32 %v3065, %v1672
    %v3098 = vadd.f32 %v3002, %v3066
    %v3099 = vadd.f32 %v3003, %v3067
    %v3100 = vadd.f32 %v3004, %v3068
    %v3101 = vadd.f32 %v3005, %v3069
    %v3102 = vadd.f32 %v3006, %v3070
    %v3103 = vadd.f32 %v3007, %v3071
    %v3104 = vadd.f32 %v3008, %v3072
    %v3105 = vadd.f32 %v3009, %v3073
    %v3106 = vadd.f32 %v3010, %v3074
    %v3107 = vadd.f32 %v3011, %v3075
    %v3108 = vadd.f32 %v3012, %v3076
    %v3109 = vadd.f32 %v3013, %v3077
    %v3110 = vadd.f32 %v3014, %v3078
    %v3111 = vadd.f32 %v3015, %v3079
    %v3112 = vadd.f32 %v3016, %v3080
    %v3113 = vadd.f32 %v3017, %v3081
    %v3114 = vadd.f32 %v3018, %v3082
    %v3115 = vadd.f32 %v3019, %v3083
    %v3116 = vadd.f32 %v3020, %v3084
    %v3117 = vadd.f32 %v3021, %v3085
    %v3118 = vadd.f32 %v3022, %v3086
    %v3119 = vadd.f32 %v3023, %v3087
    %v3120 = vadd.f32 %v3024, %v3088
    %v3121 = vadd.f32 %v3025, %v3089
    %v3122 = vadd.f32 %v3026, %v3090
    %v3123 = vadd.f32 %v3027, %v3091
    %v3124 = vadd.f32 %v3028, %v3092
    %v3125 = vadd.f32 %v3029, %v3093
    %v3126 = vadd.f32 %v3030, %v3094
    %v3127 = vadd.f32 %v3031, %v3095
    %v3128 = vadd.f32 %v3032, %v3096
    %v3129 = vadd.f32 %v3033, %v3097
    %v3130 = vadd.f32 %v3098, %v1741
    %v3131 = vadd.f32 %v3099, %v1741
    %v3132 = vadd.f32 %v3100, %v1741
    %v3133 = vadd.f32 %v3101, %v1741
    %v3134 = vadd.f32 %v3102, %v1741
    %v3135 = vadd.f32 %v3103, %v1741
    %v3136 = vadd.f32 %v3104, %v1741
    %v3137 = vadd.f32 %v3105, %v1741
    %v3138 = vadd.f32 %v3106, %v1741
    %v3139 = vadd.f32 %v3107, %v1741
    %v3140 = vadd.f32 %v3108, %v1741
    %v3141 = vadd.f32 %v3109, %v1741
    %v3142 = vadd.f32 %v3110, %v1741
    %v3143 = vadd.f32 %v3111, %v1741
    %v3144 = vadd.f32 %v3112, %v1741
    %v3145 = vadd.f32 %v3113, %v1741
    %v3146 = vadd.f32 %v3114, %v1741
    %v3147 = vadd.f32 %v3115, %v1741
    %v3148 = vadd.f32 %v3116, %v1741
    %v3149 = vadd.f32 %v3117, %v1741
    %v3150 = vadd.f32 %v3118, %v1741
    %v3151 = vadd.f32 %v3119, %v1741
    %v3152 = vadd.f32 %v3120, %v1741
    %v3153 = vadd.f32 %v3121, %v1741
    %v3154 = vadd.f32 %v3122, %v1741
    %v3155 = vadd.f32 %v3123, %v1741
    %v3156 = vadd.f32 %v3124, %v1741
    %v3157 = vadd.f32 %v3125, %v1741
    %v3158 = vadd.f32 %v3126, %v1741
    %v3159 = vadd.f32 %v3127, %v1741
    %v3160 = vadd.f32 %v3128, %v1741
    %v3161 = vadd.f32 %v3129, %v1741
    %v3162 = vmax.f32 %v3130, 0.0
    %v3163 = vmax.f32 %v3131, 0.0
    %v3164 = vmax.f32 %v3132, 0.0
    %v3165 = vmax.f32 %v3133, 0.0
    %v3166 = vmax.f32 %v3134, 0.0
    %v3167 = vmax.f32 %v3135, 0.0
    %v3168 = vmax.f32 %v3136, 0.0
    %v3169 = vmax.f32 %v3137, 0.0
    %v3170 = vmax.f32 %v3138, 0.0
    %v3171 = vmax.f32 %v3139, 0.0
    %v3172 = vmax.f32 %v3140, 0.0
    %v3173 = vmax.f32 %v3141, 0.0
    %v3174 = vmax.f32 %v3142, 0.0
    %v3175 = vmax.f32 %v3143, 0.0
    %v3176 = vmax.f32 %v3144, 0.0
    %v3177 = vmax.f32 %v3145, 0.0
    %v3178 = vmax.f32 %v3146, 0.0
    %v3179 = vmax.f32 %v3147, 0.0
    %v3180 = vmax.f32 %v3148, 0.0
    %v3181 = vmax.f32 %v3149, 0.0
    %v3182 = vmax.f32 %v3150, 0.0
    %v3183 = vmax.f32 %v3151, 0.0
    %v3184 = vmax.f32 %v3152, 0.0
    %v3185 = vmax.f32 %v3153, 0.0
    %v3186 = vmax.f32 %v3154, 0.0
    %v3187 = vmax.f32 %v3155, 0.0
    %v3188 = vmax.f32 %v3156, 0.0
    %v3189 = vmax.f32 %v3157, 0.0
    %v3190 = vmax.f32 %v3158, 0.0
    %v3191 = vmax.f32 %v3159, 0.0
    %v3192 = vmax.f32 %v3160, 0.0
    %v3193 = vmax.f32 %v3161, 0.0
    %v3195 = vsel %vm761, %v3162, 0
    %v3198 = vsel %vm761, %v3163, 0
    %v3201 = vsel %vm761, %v3164, 0
    %v3204 = vsel %vm761, %v3165, 0
    %v3207 = vsel %vm761, %v3166, 0
    %v3210 = vsel %vm761, %v3167, 0
    %v3213 = vsel %vm761, %v3168, 0
    %v3216 = vsel %vm761, %v3169, 0
    %v3219 = vsel %vm761, %v3170, 0
    %v3222 = vsel %vm761, %v3171, 0
    %v3225 = vsel %vm761, %v3172, 0
    %v3228 = vsel %vm761, %v3173, 0
    %v3231 = vsel %vm761, %v3174, 0
    %v3234 = vsel %vm761, %v3175, 0
    %v3237 = vsel %vm761, %v3176, 0
    %v3240 = vsel %vm761, %v3177, 0
    %v3243 = vsel %vm761, %v3178, 0
    %v3246 = vsel %vm761, %v3179, 0
    %v3249 = vsel %vm761, %v3180, 0
    %v3252 = vsel %vm761, %v3181, 0
    %v3255 = vsel %vm761, %v3182, 0
    %v3258 = vsel %vm761, %v3183, 0
    %v3261 = vsel %vm761, %v3184, 0
    %v3264 = vsel %vm761, %v3185, 0
    %v3267 = vsel %vm761, %v3186, 0
    %v3270 = vsel %vm761, %v3187, 0
    %v3273 = vsel %vm761, %v3188, 0
    %v3276 = vsel %vm761, %v3189, 0
    %v3279 = vsel %vm761, %v3190, 0
    %v3282 = vsel %vm761, %v3191, 0
    %v3285 = vsel %vm761, %v3192, 0
    %v3288 = vsel %vm761, %v3193, 0
    %3290 = vmatprep.subr.mxu0 0.0
    %3291 = vmatpush1.msra.mxu0 %v1911
    %3292 = vmatprep.subr.mxu0 0.0
    %3293 = vmatpush1.msra.mxu0 0.0
    %3294 = vmatprep.subr.mxu0 0.0
    %3295 = vmatpush1.msra.mxu0 0.0
    %3296 = vmatprep.subr.mxu0 0.0
    %3297 = vmatpush1.msra.mxu0 0.0
    %3298 = vmatprep.subr.mxu0 0.0
    %3299 = vmatpush1.msra.mxu0 0.0
    %3300 = vmatprep.subr.mxu0 0.0
    %3301 = vmatpush1.msra.mxu0 0.0
    %3302 = vmatprep.subr.mxu0 0.0
    %3303 = vmatpush1.msra.mxu0 0.0
    %3304 = vmatprep.subr.mxu0 0.0
    %3305 = vmatpush1.msra.mxu0 0.0
    %3306 = vmatprep.subr.mxu0 0.0
    %3307 = vmatpush1.msra.mxu0 0.0
    %3308 = vmatprep.subr.mxu0 0.0
    %3309 = vmatpush1.msra.mxu0 0.0
    %3310 = vmatprep.subr.mxu0 0.0
    %3311 = vmatpush1.msra.mxu0 0.0
    %3312 = vmatprep.subr.mxu0 0.0
    %3313 = vmatpush1.msra.mxu0 0.0
    %3314 = vmatprep.subr.mxu0 0.0
    %3315 = vmatpush1.msra.mxu0 0.0
    %3316 = vmatprep.subr.mxu0 0.0
    %3317 = vmatpush1.msra.mxu0 0.0
    %3318 = vmatprep.subr.mxu0 0.0
    %3319 = vmatpush1.msra.mxu0 0.0
    %3320 = vmatprep.subr.mxu0 0.0
    %3321 = vmatpush1.msra.mxu0 0.0
    %3322 = vmatprep.subr.mxu0 0.0
    %3323 = vmatpush1.msra.mxu0 0.0
    %3324 = vmatprep.subr.mxu0 0.0
    %3325 = vmatpush1.msra.mxu0 0.0
    %3326 = vmatprep.subr.mxu0 0.0
    %3327 = vmatpush1.msra.mxu0 0.0
    %3328 = vmatprep.subr.mxu0 0.0
    %3329 = vmatpush1.msra.mxu0 0.0
    %3330 = vmatprep.subr.mxu0 0.0
    %3331 = vmatpush1.msra.mxu0 0.0
    %3332 = vmatprep.subr.mxu0 0.0
    %3333 = vmatpush1.msra.mxu0 0.0
    %3334 = vmatprep.subr.mxu0 0.0
    %3335 = vmatpush1.msra.mxu0 0.0
    %3336 = vmatprep.subr.mxu0 0.0
    %3337 = vmatpush1.msra.mxu0 0.0
    %3338 = vmatprep.subr.mxu0 0.0
    %3339 = vmatpush1.msra.mxu0 0.0
    %3340 = vmatprep.subr.mxu0 0.0
    %3341 = vmatpush1.msra.mxu0 0.0
    %3342 = vmatprep.subr.mxu0 0.0
    %3343 = vmatpush1.msra.mxu0 0.0
    %3344 = vmatprep.subr.mxu0 0.0
    %3345 = vmatpush1.msra.mxu0 0.0
    %3346 = vmatprep.subr.mxu0 0.0
    %3347 = vmatpush1.msra.mxu0 0.0
    %3348 = vmatprep.subr.mxu0 0.0
    %3349 = vmatpush1.msra.mxu0 0.0
    %3350 = vmatprep.subr.mxu0 0.0
    %3351 = vmatpush1.msra.mxu0 0.0
    %3352 = vmatprep.subr.mxu0 0.0
    %3353 = vmatpush1.msra.mxu0 0.0
    %3354 = vmatprep.mubr.f32.mxu0 0.0
    %3355 = vmatmul.mubr.f32.gmra.mrb[0].mxu0 %v3195
    %v3356 = vpop.f32.mrb[0].mxu0
    %v3357 = vadd.f32 %v1811, %v3356
    %v3358 = vpop.f32.mrb[0].mxu0
    %3359 = vmatprep.mubr.f32.mxu0 0.0
    %3360 = vmatmul.mubr.f32.gmra.mrb[0].mxu0 %v3198
    %v3361 = vpop.f32.mrb[0].mxu0
    %v3362 = vadd.f32 %v1811, %v3361
    %v3363 = vpop.f32.mrb[0].mxu0
    %3364 = vmatprep.mubr.f32.mxu0 0.0
    %3365 = vmatmul.mubr.f32.gmra.mrb[0].mxu0 %v3201
    %v3366 = vpop.f32.mrb[0].mxu0
    %v3367 = vadd.f32 %v1811, %v3366
    %v3368 = vpop.f32.mrb[0].mxu0
    %3369 = vmatprep.mubr.f32.mxu0 0.0
    %3370 = vmatmul.mubr.f32.gmra.mrb[0].mxu0 %v3204
    %v3371 = vpop.f32.mrb[0].mxu0
    %v3372 = vadd.f32 %v1811, %v3371
    %v3373 = vpop.f32.mrb[0].mxu0
    %3374 = vmatprep.mubr.f32.mxu0 0.0
    %3375 = vmatmul.mubr.f32.gmra.mrb[0].mxu0 %v3207
    %v3376 = vpop.f32.mrb[0].mxu0
    %v3377 = vadd.f32 %v1811, %v3376
    %v3378 = vpop.f32.mrb[0].mxu0
    %3379 = vmatprep.mubr.f32.mxu0 0.0
    %3380 = vmatmul.mubr.f32.gmra.mrb[0].mxu0 %v3210
    %v3381 = vpop.f32.mrb[0].mxu0
    %v3382 = vadd.f32 %v1811, %v3381
    %v3383 = vpop.f32.mrb[0].mxu0
    %3384 = vmatprep.mubr.f32.mxu0 0.0
    %3385 = vmatmul.mubr.f32.gmra.mrb[0].mxu0 %v3213
    %v3386 = vpop.f32.mrb[0].mxu0
    %v3387 = vadd.f32 %v1811, %v3386
    %v3388 = vpop.f32.mrb[0].mxu0
    %3389 = vmatprep.mubr.f32.mxu0 0.0
    %3390 = vmatmul.mubr.f32.gmra.mrb[0].mxu0 %v3216
    %v3391 = vpop.f32.mrb[0].mxu0
    %v3392 = vadd.f32 %v1811, %v3391
    %v3393 = vpop.f32.mrb[0].mxu0
    %3394 = vmatprep.mubr.f32.mxu0 0.0
    %3395 = vmatmul.mubr.f32.gmra.mrb[0].mxu0 %v3219
    %v3396 = vpop.f32.mrb[0].mxu0
    %v3397 = vadd.f32 %v1811, %v3396
    %v3398 = vpop.f32.mrb[0].mxu0
    %3399 = vmatprep.mubr.f32.mxu0 0.0
    %3400 = vmatmul.mubr.f32.gmra.mrb[0].mxu0 %v3222
    %v3401 = vpop.f32.mrb[0].mxu0
    %v3402 = vadd.f32 %v1811, %v3401
    %v3403 = vpop.f32.mrb[0].mxu0
    %3404 = vmatprep.mubr.f32.mxu0 0.0
    %3405 = vmatmul.mubr.f32.gmra.mrb[0].mxu0 %v3225
    %v3406 = vpop.f32.mrb[0].mxu0
    %v3407 = vadd.f32 %v1811, %v3406
    %v3408 = vpop.f32.mrb[0].mxu0
    %3409 = vmatprep.mubr.f32.mxu0 0.0
    %3410 = vmatmul.mubr.f32.gmra.mrb[0].mxu0 %v3228
    %v3411 = vpop.f32.mrb[0].mxu0
    %v3412 = vadd.f32 %v1811, %v3411
    %v3413 = vpop.f32.mrb[0].mxu0
    %3414 = vmatprep.mubr.f32.mxu0 0.0
    %3415 = vmatmul.mubr.f32.gmra.mrb[0].mxu0 %v3231
    %v3416 = vpop.f32.mrb[0].mxu0
    %v3417 = vadd.f32 %v1811, %v3416
    %v3418 = vpop.f32.mrb[0].mxu0
    %3419 = vmatprep.mubr.f32.mxu0 0.0
    %3420 = vmatmul.mubr.f32.gmra.mrb[0].mxu0 %v3234
    %v3421 = vpop.f32.mrb[0].mxu0
    %v3422 = vadd.f32 %v1811, %v3421
    %v3423 = vpop.f32.mrb[0].mxu0
    %3424 = vmatprep.mubr.f32.mxu0 0.0
    %3425 = vmatmul.mubr.f32.gmra.mrb[0].mxu0 %v3237
    %v3426 = vpop.f32.mrb[0].mxu0
    %v3427 = vadd.f32 %v1811, %v3426
    %v3428 = vpop.f32.mrb[0].mxu0
    %3429 = vmatprep.mubr.f32.mxu0 0.0
    %3430 = vmatmul.mubr.f32.gmra.mrb[0].mxu0 %v3240
    %v3431 = vpop.f32.mrb[0].mxu0
    %v3432 = vadd.f32 %v1811, %v3431
    %v3433 = vpop.f32.mrb[0].mxu0
    %3434 = vmatprep.mubr.f32.mxu0 0.0
    %3435 = vmatmul.mubr.f32.gmra.mrb[0].mxu0 %v3243
    %v3436 = vpop.f32.mrb[0].mxu0
    %v3437 = vadd.f32 %v1811, %v3436
    %v3438 = vpop.f32.mrb[0].mxu0
    %3439 = vmatprep.mubr.f32.mxu0 0.0
    %3440 = vmatmul.mubr.f32.gmra.mrb[0].mxu0 %v3246
    %v3441 = vpop.f32.mrb[0].mxu0
    %v3442 = vadd.f32 %v1811, %v3441
    %v3443 = vpop.f32.mrb[0].mxu0
    %3444 = vmatprep.mubr.f32.mxu0 0.0
    %3445 = vmatmul.mubr.f32.gmra.mrb[0].mxu0 %v3249
    %v3446 = vpop.f32.mrb[0].mxu0
    %v3447 = vadd.f32 %v1811, %v3446
    %v3448 = vpop.f32.mrb[0].mxu0
    %3449 = vmatprep.mubr.f32.mxu0 0.0
    %3450 = vmatmul.mubr.f32.gmra.mrb[0].mxu0 %v3252
    %v3451 = vpop.f32.mrb[0].mxu0
    %v3452 = vadd.f32 %v1811, %v3451
    %v3453 = vpop.f32.mrb[0].mxu0
    %3454 = vmatprep.mubr.f32.mxu0 0.0
    %3455 = vmatmul.mubr.f32.gmra.mrb[0].mxu0 %v3255
    %v3456 = vpop.f32.mrb[0].mxu0
    %v3457 = vadd.f32 %v1811, %v3456
    %v3458 = vpop.f32.mrb[0].mxu0
    %3459 = vmatprep.mubr.f32.mxu0 0.0
    %3460 = vmatmul.mubr.f32.gmra.mrb[0].mxu0 %v3258
    %v3461 = vpop.f32.mrb[0].mxu0
    %v3462 = vadd.f32 %v1811, %v3461
    %v3463 = vpop.f32.mrb[0].mxu0
    %3464 = vmatprep.mubr.f32.mxu0 0.0
    %3465 = vmatmul.mubr.f32.gmra.mrb[0].mxu0 %v3261
    %v3466 = vpop.f32.mrb[0].mxu0
    %v3467 = vadd.f32 %v1811, %v3466
    %v3468 = vpop.f32.mrb[0].mxu0
    %3469 = vmatprep.mubr.f32.mxu0 0.0
    %3470 = vmatmul.mubr.f32.gmra.mrb[0].mxu0 %v3264
    %v3471 = vpop.f32.mrb[0].mxu0
    %v3472 = vadd.f32 %v1811, %v3471
    %v3473 = vpop.f32.mrb[0].mxu0
    %3474 = vmatprep.mubr.f32.mxu0 0.0
    %3475 = vmatmul.mubr.f32.gmra.mrb[0].mxu0 %v3267
    %v3476 = vpop.f32.mrb[0].mxu0
    %v3477 = vadd.f32 %v1811, %v3476
    %v3478 = vpop.f32.mrb[0].mxu0
    %3479 = vmatprep.mubr.f32.mxu0 0.0
    %3480 = vmatmul.mubr.f32.gmra.mrb[0].mxu0 %v3270
    %v3481 = vpop.f32.mrb[0].mxu0
    %v3482 = vadd.f32 %v1811, %v3481
    %v3483 = vpop.f32.mrb[0].mxu0
    %3484 = vmatprep.mubr.f32.mxu0 0.0
    %3485 = vmatmul.mubr.f32.gmra.mrb[0].mxu0 %v3273
    %v3486 = vpop.f32.mrb[0].mxu0
    %v3487 = vadd.f32 %v1811, %v3486
    %v3488 = vpop.f32.mrb[0].mxu0
    %3489 = vmatprep.mubr.f32.mxu0 0.0
    %3490 = vmatmul.mubr.f32.gmra.mrb[0].mxu0 %v3276
    %v3491 = vpop.f32.mrb[0].mxu0
    %v3492 = vadd.f32 %v1811, %v3491
    %v3493 = vpop.f32.mrb[0].mxu0
    %3494 = vmatprep.mubr.f32.mxu0 0.0
    %3495 = vmatmul.mubr.f32.gmra.mrb[0].mxu0 %v3279
    %v3496 = vpop.f32.mrb[0].mxu0
    %v3497 = vadd.f32 %v1811, %v3496
    %v3498 = vpop.f32.mrb[0].mxu0
    %3499 = vmatprep.mubr.f32.mxu0 0.0
    %3500 = vmatmul.mubr.f32.gmra.mrb[0].mxu0 %v3282
    %v3501 = vpop.f32.mrb[0].mxu0
    %v3502 = vadd.f32 %v1811, %v3501
    %v3503 = vpop.f32.mrb[0].mxu0
    %3504 = vmatprep.mubr.f32.mxu0 0.0
    %3505 = vmatmul.mubr.f32.gmra.mrb[0].mxu0 %v3285
    %v3506 = vpop.f32.mrb[0].mxu0
    %v3507 = vadd.f32 %v1811, %v3506
    %v3508 = vpop.f32.mrb[0].mxu0
    %3509 = vmatprep.mubr.f32.mxu0 0.0
    %3510 = vmatmul.mubr.f32.gmra.mrb[0].mxu0 %v3288
    %v3511 = vpop.f32.mrb[0].mxu0
    %v3512 = vadd.f32 %v1811, %v3511
    %v3513 = vpop.f32.mrb[0].mxu0
    %3514 = vdwg.mxu0
    %v3515 = vadd.f32 %v3357, %v73
    %v3516 = vadd.f32 %v3362, %v74
    %v3517 = vadd.f32 %v3367, %v75
    %v3518 = vadd.f32 %v3372, %v76
    %v3519 = vadd.f32 %v3377, %v77
    %v3520 = vadd.f32 %v3382, %v78
    %v3521 = vadd.f32 %v3387, %v79
    %v3522 = vadd.f32 %v3392, %v80
    %v3523 = vadd.f32 %v3397, %v81
    %v3524 = vadd.f32 %v3402, %v82
    %v3525 = vadd.f32 %v3407, %v83
    %v3526 = vadd.f32 %v3412, %v84
    %v3527 = vadd.f32 %v3417, %v85
    %v3528 = vadd.f32 %v3422, %v86
    %v3529 = vadd.f32 %v3427, %v87
    %v3530 = vadd.f32 %v3432, %v88
    %v3531 = vadd.f32 %v3437, %v89
    %v3532 = vadd.f32 %v3442, %v90
    %v3533 = vadd.f32 %v3447, %v91
    %v3534 = vadd.f32 %v3452, %v92
    %v3535 = vadd.f32 %v3457, %v93
    %v3536 = vadd.f32 %v3462, %v94
    %v3537 = vadd.f32 %v3467, %v95
    %v3538 = vadd.f32 %v3472, %v96
    %v3539 = vadd.f32 %v3477, %v97
    %v3540 = vadd.f32 %v3482, %v98
    %v3541 = vadd.f32 %v3487, %v99
    %v3542 = vadd.f32 %v3492, %v100
    %v3543 = vadd.f32 %v3497, %v101
    %v3544 = vadd.f32 %v3502, %v102
    %v3545 = vadd.f32 %v3507, %v103
    %v3546 = vadd.f32 %v3512, %v104
    %v3547 = vmax.f32 %v3515, 0.0
    %v3548 = vmax.f32 %v3516, 0.0
    %v3549 = vmax.f32 %v3517, 0.0
    %v3550 = vmax.f32 %v3518, 0.0
    %v3551 = vmax.f32 %v3519, 0.0
    %v3552 = vmax.f32 %v3520, 0.0
    %v3553 = vmax.f32 %v3521, 0.0
    %v3554 = vmax.f32 %v3522, 0.0
    %v3555 = vmax.f32 %v3523, 0.0
    %v3556 = vmax.f32 %v3524, 0.0
    %v3557 = vmax.f32 %v3525, 0.0
    %v3558 = vmax.f32 %v3526, 0.0
    %v3559 = vmax.f32 %v3527, 0.0
    %v3560 = vmax.f32 %v3528, 0.0
    %v3561 = vmax.f32 %v3529, 0.0
    %v3562 = vmax.f32 %v3530, 0.0
    %v3563 = vmax.f32 %v3531, 0.0
    %v3564 = vmax.f32 %v3532, 0.0
    %v3565 = vmax.f32 %v3533, 0.0
    %v3566 = vmax.f32 %v3534, 0.0
    %v3567 = vmax.f32 %v3535, 0.0
    %v3568 = vmax.f32 %v3536, 0.0
    %v3569 = vmax.f32 %v3537, 0.0
    %v3570 = vmax.f32 %v3538, 0.0
    %v3571 = vmax.f32 %v3539, 0.0
    %v3572 = vmax.f32 %v3540, 0.0
    %v3573 = vmax.f32 %v3541, 0.0
    %v3574 = vmax.f32 %v3542, 0.0
    %v3575 = vmax.f32 %v3543, 0.0
    %v3576 = vmax.f32 %v3544, 0.0
    %v3577 = vmax.f32 %v3545, 0.0
    %v3578 = vmax.f32 %v3546, 0.0
    %s3579 = scalar_lea.vmem [#allocation6], 256
    %3580 = vst.msk [vmem:[%s3579] sm:$0xff] %vm114, %v3547
    %3581 = vst.msk [vmem:[%s3579 + $0x8] sm:$0xff] %vm114, %v3548
    %3582 = vst.msk [vmem:[%s3579 + $0x10] sm:$0xff] %vm114, %v3549
    %3583 = vst.msk [vmem:[%s3579 + $0x18] sm:$0xff] %vm114, %v3550
    %3584 = vst.msk [vmem:[%s3579 + $0x20] sm:$0xff] %vm114, %v3551
    %3585 = vst.msk [vmem:[%s3579 + $0x28] sm:$0xff] %vm114, %v3552
    %3586 = vst.msk [vmem:[%s3579 + $0x30] sm:$0xff] %vm114, %v3553
    %3587 = vst.msk [vmem:[%s3579 + $0x38] sm:$0xff] %vm114, %v3554
    %3588 = vst.msk [vmem:[%s3579 + $0x40] sm:$0xff] %vm114, %v3555
    %3589 = vst.msk [vmem:[%s3579 + $0x48] sm:$0xff] %vm114, %v3556
    %3590 = vst.msk [vmem:[%s3579 + $0x50] sm:$0xff] %vm114, %v3557
    %3591 = vst.msk [vmem:[%s3579 + $0x58] sm:$0xff] %vm114, %v3558
    %3592 = vst.msk [vmem:[%s3579 + $0x60] sm:$0xff] %vm114, %v3559
    %3593 = vst.msk [vmem:[%s3579 + $0x68] sm:$0xff] %vm114, %v3560
    %3594 = vst.msk [vmem:[%s3579 + $0x70] sm:$0xff] %vm114, %v3561
    %3595 = vst.msk [vmem:[%s3579 + $0x78] sm:$0xff] %vm114, %v3562
    %3596 = vst.msk [vmem:[%s3579 + $0x80] sm:$0xff] %vm114, %v3563
    %3597 = vst.msk [vmem:[%s3579 + $0x88] sm:$0xff] %vm114, %v3564
    %3598 = vst.msk [vmem:[%s3579 + $0x90] sm:$0xff] %vm114, %v3565
    %3599 = vst.msk [vmem:[%s3579 + $0x98] sm:$0xff] %vm114, %v3566
    %3600 = vst.msk [vmem:[%s3579 + $0xa0] sm:$0xff] %vm114, %v3567
    %3601 = vst.msk [vmem:[%s3579 + $0xa8] sm:$0xff] %vm114, %v3568
    %3602 = vst.msk [vmem:[%s3579 + $0xb0] sm:$0xff] %vm114, %v3569
    %3603 = vst.msk [vmem:[%s3579 + $0xb8] sm:$0xff] %vm114, %v3570
    %3604 = vst.msk [vmem:[%s3579 + $0xc0] sm:$0xff] %vm114, %v3571
    %3605 = vst.msk [vmem:[%s3579 + $0xc8] sm:$0xff] %vm114, %v3572
    %3606 = vst.msk [vmem:[%s3579 + $0xd0] sm:$0xff] %vm114, %v3573
    %3607 = vst.msk [vmem:[%s3579 + $0xd8] sm:$0xff] %vm114, %v3574
    %3608 = vst.msk [vmem:[%s3579 + $0xe0] sm:$0xff] %vm114, %v3575
    %3609 = vst.msk [vmem:[%s3579 + $0xe8] sm:$0xff] %vm114, %v3576
    %3610 = vst.msk [vmem:[%s3579 + $0xf0] sm:$0xff] %vm114, %v3577
    %3611 = vst.msk [vmem:[%s3579 + $0xf8] sm:$0xff] %vm114, %v3578
    // Predicated region
    $region34: #{tpu_custom_call.1} parent=1 // pred_check
      _
    $region35: #{tpu_custom_call.1} parent=1 // pred_check_branch
      %3613 = sbr.rel (0) target = $region37
    $region36: #{tpu_custom_call.1} parent=1 // pred_region
      %s3615 = ssub.s32 8192, 8192
      %3616 = vsyncadd [#allocation5], %s3615
      %s3617 = sshll.u32 [#allocation6], 4
      %s3618 = int_to_ptr.vmem [resolvable:$true] %s3617
      %3623 = dma.vmem_to_hbm [thread:$0]  %s3618, 8192, %s7, [#allocation5], 128, 128, 8
    $region37: #{tpu_custom_call.1} parent=1 // pred_fallthru
      _
    // Predicated region
    $region38: #{tpu_custom_call.1} parent=1 // pred_check
      _
    $region39: #{tpu_custom_call.1} parent=1 // pred_check_branch
      %3625 = sbr.rel (0) target = $region41
    $region40: #{tpu_custom_call.1} parent=1 // pred_region
      %3626 = dma.done [#allocation5], 8192
    $region41: #{tpu_custom_call.1} parent=1 // pred_fallthru
      _
    %3627 = vsyncpa [#allocation4], 1
    %3628 = vsyncpa [#allocation5], 1

</llo_original>
